<compile_context>
chip_gen: v6e
topology: v6e:2x2x1
jax: 0.10.0
libtpu: 0.0.40
codegen_flags: <defaults>
</compile_context>

<pallas_src>
import jax
import jax.numpy as jnp
from jax.experimental import pallas as pl
from jax.experimental.pallas import tpu as pltpu


def _round_up(x, m):
    return (x + m - 1) // m * m


def _vmem_budget_bytes():
    """Usable VMEM budget (bytes) for this kernel, derived from the device."""
    cap = None
    try:
        if jax.default_backend() == "tpu":
            cap = int(getattr(pltpu.get_tpu_info(), "vmem_capacity_bytes", 0)) or None
    except Exception:
        cap = None
    if cap is None:
        cap = 64 * 1024 * 1024      # conservative: smallest per-core VMEM (v7x)
    return int(cap * 0.8)


def _estimate_vmem(tq, LP, HP):
    """Rough per-step VMEM footprint for tile size tq (bytes)."""
    bf16, f32, i8 = 2, 4, 1
    est = 0
    est += 2 * 2 * tq * HP * bf16 * 2        # Q / qsum tiles, double-buffered
    est += 2 * 2 * LP * HP * bf16 * 2        # X / ksum, double-buffered
    est += 2 * tq * LP * i8                  # attention-mask tile
    est += 2 * LP * i8                       # key-padding mask
    est += 2 * tq * LP * bf16                # logistic-noise tile
    est += 2 * tq * LP * i8                  # int8 output tile
    est += 2 * 4 * HP * 2 * HP * bf16        # fused weights (double-buffered)
    est += 2 * 4 * 2 * HP * f32              # fused biases
    est += 2 * LP * 2 * HP * bf16            # projected-key VMEM scratch
    est += 10 * tq * LP * f32                # live (TQ, LP) f32 temporaries
    return est


def _pick_tq(LP, HP, budget):
    for tq in (512, 256, 128):
        if tq <= LP and LP % tq == 0 and _estimate_vmem(tq, LP, HP) <= 0.7 * budget:
            return tq
    return min(LP, 128)


def _disentangle_kernel(q_ref, qsum_ref, x_ref, ksum_ref,
                        amask_ref, kpm_ref, noise_ref,
                        w_ref, b_ref,
                        cmask_ref,
                        qck_ref, mk_ref):
    """One (batch, query-tile) grid step.

    q_ref, qsum_ref : (1, TQ, HP)   bf16  query-side activations
    x_ref, ksum_ref : (1, LP, HP)   bf16  key-side activations (all keys)
    amask_ref       : (1, TQ, LP)   int8  attention mask (1 = masked)
    kpm_ref         : (1, 1,  LP)   int8  key-padding mask (1 = masked)
    noise_ref       : (1, TQ, LP)   bf16  Logistic(0,1) noise
    w_ref           : (4, HP, 2HP)  bf16  fused weights [qsum, ksum, Q, X],
                                          each half = [causal | trivial],
                                          1/sqrt(H) folded into q-side rows
    b_ref           : (4, 2HP)      f32   fused biases (same packing)
    cmask_ref       : (1, TQ, LP)   int8  hard causal mask output
    qck_ref, mk_ref : (LP, 2HP)     bf16  VMEM scratch: cached key projections
    """
    HP = q_ref.shape[-1]
    q_idx = pl.program_id(1)

    # Key-side projections are independent of the query tile: compute them once
    # per batch (q_idx == 0) and cache in VMEM scratch.  The query axis is
    # declared "arbitrary" (sequential), so the cache stays valid for q_idx > 0.
    @pl.when(q_idx == 0)
    def _():
        qck = jnp.dot(ksum_ref[0], w_ref[1],
                      preferred_element_type=jnp.float32) + b_ref[1:2, :]
        mk = jnp.dot(x_ref[0], w_ref[3],
                     preferred_element_type=jnp.float32) + b_ref[3:4, :]
        qck_ref[...] = qck.astype(jnp.bfloat16)
        mk_ref[...] = mk.astype(jnp.bfloat16)

    def proj_pair(x, i):
        # Fused pair of H->H linears: one (HP, 2HP) matmul; halves = [causal|trivial].
        y = jnp.dot(x, w_ref[i], preferred_element_type=jnp.float32)
        y = (y + b_ref[i:i + 1, :]).astype(jnp.bfloat16)
        return y[:, :HP], y[:, HP:]

    def qkT(a, c):
        # a @ c.T — NT matmul, contraction on the lane dim of both operands.
        return jax.lax.dot_general(a, c, (((1,), (1,)), ((), ())),
                                   preferred_element_type=jnp.float32)

    def softmax(x):
        m = jnp.max(x, axis=-1, keepdims=True)
        e = jnp.exp(x - m)
        return e / jnp.sum(e, axis=-1, keepdims=True)

    qc_q_c, qc_q_t = proj_pair(qsum_ref[0], 0)       # (TQ, HP) each
    mq_c, mq_t = proj_pair(q_ref[0], 2)              # (TQ, HP) each
    qck = qck_ref[...]
    mk = mk_ref[...]
    qc_k_c, qc_k_t = qck[:, :HP], qck[:, HP:]        # (LP, HP) each
    mk_c, mk_t = mk[:, :HP], mk[:, HP:]

    # One 1/sqrt(H) factor is folded into the q-side weights of each product,
    # so these equal (attn * scaling) * (qc_score * scaling) of the reference.
    att_c = qkT(mq_c, mk_c) * qkT(qc_q_c, qc_k_c)
    att_t = qkT(mq_t, mk_t) * qkT(qc_q_t, qc_k_t)
    att_t = jax.nn.sigmoid(-att_t)                   # == 1 - sigmoid(att_t)

    amask = amask_ref[0] != 0                        # (TQ, LP) bool
    full_mask = jnp.logical_or(amask, kpm_ref[0] != 0)
    neg_inf = jnp.float32(-jnp.inf)
    causal_score = softmax(jnp.where(full_mask, neg_inf, att_c))
    trivial_score = softmax(jnp.where(full_mask, neg_inf, att_t))

    # Hard gumbel-softmax over {causal, trivial}: argmax(logits + Gumbel) is
    # equivalent to (logit_c - logit_t >= Logistic(0,1)); tau > 0 never changes
    # the hard argmax.  Fully-masked rows give NaN scores; NaN >= z is False,
    # so those rows deterministically land on 0 (cropped / zero-filled anyway).
    z = noise_ref[0].astype(jnp.float32)
    hard_causal = (causal_score - trivial_score) >= z

    # final masked_fill(att_mask, 0.0); trivial mask reconstructed outside.
    cmask_ref[0] = jnp.where(amask, jnp.int8(0), hard_causal.astype(jnp.int8))


def disentangle_causal(Q_state, X_state, att_mask, key_padding_mask,
                       ques_state, conc_state, weights, biases,
                       seed=0, tau=1.0):
    """Pallas wrapper.

    Q_state, X_state: (B, L, H) f32; ques_state, conc_state: (B, L+1, H) f32
    att_mask: bool (L, L), (1, L, L) or (B, L, L) (True = masked)
    key_padding_mask: bool (B, L) (True = masked)
    weights: (8, H, H) pre-transposed (in, out) in order
             [qc_causal.q1, qc_causal.k1, qc_trivial.q1, qc_trivial.k1,
              causal.q, causal.k, trivial.q, trivial.k]
    biases: (8, H)
    tau: unused for the value — the hard forward of gumbel_softmax is
         tau-invariant (argmax of logits + noise).
    """
    B, L, H = Q_state.shape
    assert ques_state.shape[1] == L + 1 and conc_state.shape[1] == L + 1

    HP = _round_up(H, 128)
    LP = _round_up(L, 128)
    budget = _vmem_budget_bytes()
    TQ = _pick_tq(LP, HP, budget)
    n_q = LP // TQ
    scaling = float(H) ** (-0.5)

    w = jnp.asarray(weights, jnp.float32)
    bia = jnp.asarray(biases, jnp.float32)

    def pad_w(m):
        return jnp.pad(m, ((0, HP - H), (0, HP - H)))

    def pad_b(v):
        return jnp.pad(v, (0, HP - H))

    def pack_pair(i_causal, i_trivial, scale):
        wp = jnp.concatenate([pad_w(w[i_causal]) * scale,
                              pad_w(w[i_trivial]) * scale], axis=-1)
        bp = jnp.concatenate([pad_b(bia[i_causal]) * scale,
                              pad_b(bia[i_trivial]) * scale], axis=-1)
        return wp, bp

    w_qsum, b_qsum = pack_pair(0, 2, scaling)   # applied to qsum (q-side, scaled)
    w_ksum, b_ksum = pack_pair(1, 3, 1.0)       # applied to ksum
    w_q, b_q = pack_pair(4, 6, scaling)         # applied to Q (q-side, scaled)
    w_x, b_x = pack_pair(5, 7, 1.0)             # applied to X
    w_pack = jnp.stack([w_qsum, w_ksum, w_q, w_x]).astype(jnp.bfloat16)
    b_pack = jnp.stack([b_qsum, b_ksum, b_q, b_x])          # f32 (4, 2HP)

    # q1+q2 / k1+k2 sums done once in the wrapper.
    qsum = ques_state[:, 1:, :] + conc_state[:, 1:, :]
    ksum = ques_state[:, :-1, :] + conc_state[:, :-1, :]

    def pad_seq(x):
        return jnp.pad(x, ((0, 0), (0, LP - L), (0, HP - H))).astype(jnp.bfloat16)

    Qp, Xp = pad_seq(Q_state), pad_seq(X_state)
    qsum_p, ksum_p = pad_seq(qsum), pad_seq(ksum)

    # Attention mask: keep a single copy in HBM when it is batch-invariant.
    amask = jnp.asarray(att_mask).astype(bool)
    if amask.ndim == 2:
        amask = amask[None]
    batch_invariant = amask.shape[0] == 1
    amask_p = jnp.pad(amask.astype(jnp.int8),
                      ((0, 0), (0, LP - L), (0, LP - L)), constant_values=1)
    amask_idx = ((lambda b, q: (0, q, 0)) if batch_invariant
                 else (lambda b, q: (b, q, 0)))

    kpm_p = jnp.pad(jnp.asarray(key_padding_mask).astype(jnp.int8)[:, None, :],
                    ((0, 0), (0, 0), (0, LP - L)), constant_values=1)

    # Logistic(0,1) noise for the hard gumbel draw (Bernoulli reformulation).
    # TODO(synk): on TPU-only deployments generate this in-kernel with
    # pltpu.prng_* to remove this HBM stream; the portable host-side path keeps
    # the kernel runnable under the CPU / interpret checker.
    u = jax.random.uniform(jax.random.PRNGKey(seed), (B, LP, LP), jnp.float32,
                           minval=1e-6, maxval=1.0 - 1e-6)
    noise = (jnp.log(u) - jnp.log1p(-u)).astype(jnp.bfloat16)

    qtile_spec = pl.BlockSpec((1, TQ, HP), lambda b, q: (b, q, 0))
    ktile_spec = pl.BlockSpec((1, LP, HP), lambda b, q: (b, 0, 0))
    amask_spec = pl.BlockSpec((1, TQ, LP), amask_idx)
    kpm_spec = pl.BlockSpec((1, 1, LP), lambda b, q: (b, 0, 0))
    noise_spec = pl.BlockSpec((1, TQ, LP), lambda b, q: (b, q, 0))
    # Constant index maps -> weights/biases are only DMA'd once.
    # TODO(synk): single-buffer them via pipeline_mode=pl.Buffered(1) once
    # buffer_count=1 is supported on all deployed jax versions.
    w_spec = pl.BlockSpec((4, HP, 2 * HP), lambda b, q: (0, 0, 0))
    b_spec = pl.BlockSpec((4, 2 * HP), lambda b, q: (0, 0))
    out_spec = pl.BlockSpec((1, TQ, LP), lambda b, q: (b, q, 0))

    cmask_pad = pl.pallas_call(
        _disentangle_kernel,
        out_shape=jax.ShapeDtypeStruct((B, LP, LP), jnp.int8),
        grid_spec=pltpu.PrefetchScalarGridSpec(
            num_scalar_prefetch=0,
            grid=(B, n_q),
            in_specs=[qtile_spec, qtile_spec, ktile_spec, ktile_spec,
                      amask_spec, kpm_spec, noise_spec, w_spec, b_spec],
            out_specs=out_spec,
            scratch_shapes=[pltpu.VMEM((LP, 2 * HP), jnp.bfloat16),
                            pltpu.VMEM((LP, 2 * HP), jnp.bfloat16)]),
        compiler_params=pltpu.CompilerParams(
            # q axis must be sequential ("arbitrary") so the key-projection
            # cache written at q_idx == 0 is valid for q_idx > 0.
            dimension_semantics=("parallel", "arbitrary"),
            vmem_limit_bytes=budget),
    )(Qp, qsum_p, Xp, ksum_p, amask_p, kpm_p, noise, w_pack, b_pack)

    causal_mask = cmask_pad[:, :L, :L].astype(jnp.float32)
    amask_b = jnp.broadcast_to(amask, (B, L, L))
    # hard selection is one-hot, so trivial = 1 - causal (then att_mask fill).
    trivial_mask = jnp.where(amask_b, 0.0, 1.0 - causal_mask)
    return causal_mask, trivial_mask


if __name__ == "__main__":
    key = jax.random.PRNGKey(0)
    B, S, H = 2, 9, 32          # ques/conc states have S positions
    L = S - 1                   # Q/X/attention length (module slices 1:/:-1)

    ks = jax.random.split(key, 6)
    Q_state = jax.random.normal(ks[0], (B, L, H), jnp.float32)
    X_state = jax.random.normal(ks[1], (B, L, H), jnp.float32)
    ques_state = jax.random.normal(ks[2], (B, S, H), jnp.float32)
    conc_state = jax.random.normal(ks[3], (B, S, H), jnp.float32)

    # attention mask: mask future positions (True = masked); shared by all
    # batches, so the wrapper streams a single (1, LP, LP) copy.
    att_mask = jnp.triu(jnp.ones((L, L), dtype=bool), k=1)
    # key padding mask: pad out the last key position of batch element 1
    key_padding_mask = jnp.zeros((B, L), dtype=bool).at[1, L - 1].set(True)

    # deterministic synthetic parameters (8 linear layers used by the forward)
    scale = 1.0 / (H ** 0.5)
    weights = jax.random.normal(ks[4], (8, H, H), jnp.float32) * scale
    biases = jax.random.normal(ks[5], (8, H), jnp.float32) * 0.01

    causal_mask, trivial_mask = disentangle_causal(
        Q_state, X_state, att_mask, key_padding_mask,
        ques_state, conc_state, weights, biases, seed=0, tau=1.0)
    jax.block_until_ready((causal_mask, trivial_mask))

    att_mask_b = jnp.broadcast_to(att_mask, (B, L, L))
    assert causal_mask.shape == (B, L, L)
    assert trivial_mask.shape == (B, L, L)
    assert bool(jnp.all(jnp.isfinite(causal_mask)))
    assert bool(jnp.all(jnp.isfinite(trivial_mask)))
    # hard gumbel selection is exactly {0, 1}
    assert bool(jnp.all((causal_mask == 0.0) | (causal_mask == 1.0)))
    total = causal_mask + trivial_mask
    unmasked = ~att_mask_b
    # on unmasked positions the hard selection is one-hot over the pair
    assert bool(jnp.all(jnp.where(unmasked, total, 1.0) == 1.0))
    # masked positions are zeroed in both outputs
    assert bool(jnp.all(jnp.where(att_mask_b, total, 0.0) == 0.0))

    print("KERNEL_OK")
</pallas_src>

<mosaic_0001>
module attributes {stable_mosaic.version = 11 : i64} {
  func.func @_disentangle_kernel(%arg0: i32, %arg1: i32, %arg2: memref<1x128x128xbf16, #tpu.memory_space<vmem>>, %arg3: memref<1x128x128xbf16, #tpu.memory_space<vmem>>, %arg4: memref<1x128x128xbf16, #tpu.memory_space<vmem>>, %arg5: memref<1x128x128xbf16, #tpu.memory_space<vmem>>, %arg6: memref<1x128x128xi8, #tpu.memory_space<vmem>>, %arg7: memref<1x1x128xi8, #tpu.memory_space<vmem>>, %arg8: memref<1x128x128xbf16, #tpu.memory_space<vmem>>, %arg9: memref<4x128x256xbf16, #tpu.memory_space<vmem>>, %arg10: memref<4x256xf32, #tpu.memory_space<vmem>>, %arg11: memref<1x128x128xi8, #tpu.memory_space<vmem>>, %arg12: memref<128x256xbf16, #tpu.memory_space<vmem>>, %arg13: memref<128x256xbf16, #tpu.memory_space<vmem>>) attributes {dimension_semantics = [#tpu.dimension_semantics<parallel>, #tpu.dimension_semantics<arbitrary>], iteration_bounds = array<i64: 2, 1>, scalar_prefetch = 0 : i64, scratch_operands = 2 : i64, tpu.core_type = #tpu.core_type<tc>, window_params = [{transform_indices = @transform_0, window_bounds = array<i64: 1, 128, 128>}, {transform_indices = @transform_1, window_bounds = array<i64: 1, 128, 128>}, {transform_indices = @transform_2, window_bounds = array<i64: 1, 128, 128>}, {transform_indices = @transform_3, window_bounds = array<i64: 1, 128, 128>}, {transform_indices = @transform_4, window_bounds = array<i64: 1, 128, 128>}, {transform_indices = @transform_5, window_bounds = array<i64: 1, 1, 128>}, {transform_indices = @transform_6, window_bounds = array<i64: 1, 128, 128>}, {pipeline_mode = #tpu.pipeline_mode<synchronous>, transform_indices = @transform_7, window_bounds = array<i64: 4, 128, 256>}, {pipeline_mode = #tpu.pipeline_mode<synchronous>, transform_indices = @transform_8, window_bounds = array<i64: 4, 256>}, {transform_indices = @transform_9, window_bounds = array<i64: 1, 128, 128>}]} {
    %c0_i32 = arith.constant 0 : i32
    %0 = arith.cmpi eq, %arg1, %c0_i32 : i32
    %1 = arith.extui %0 : i1 to i32
    %c0_i32_0 = arith.constant 0 : i32
    %2 = arith.cmpi ne, %1, %c0_i32_0 : i32
    scf.if %2 {
      %c0_46 = arith.constant 0 : index
      %c0_47 = arith.constant 0 : index
      %c0_48 = arith.constant 0 : index
      %87 = vector.load %arg5[%c0_46, %c0_47, %c0_48] : memref<1x128x128xbf16, #tpu.memory_space<vmem>>, vector<1x128x128xbf16>
      %88 = vector.shape_cast %87 : vector<1x128x128xbf16> to vector<128x128xbf16>
      %c1 = arith.constant 1 : index
      %c0_49 = arith.constant 0 : index
      %c0_50 = arith.constant 0 : index
      %89 = vector.load %arg9[%c1, %c0_49, %c0_50] : memref<4x128x256xbf16, #tpu.memory_space<vmem>>, vector<1x128x256xbf16>
      %90 = vector.shape_cast %89 : vector<1x128x256xbf16> to vector<128x256xbf16>
      %cst_51 = arith.constant dense<0.000000e+00> : vector<128x256xf32>
      %91 = tpu.matmul %88, %90, %cst_51 {dimension_numbers = #tpu.dot_dimension_numbers<[1], [0], [0], [1], [0, 0, 1, 1], [], []>} : vector<128x128xbf16>, vector<128x256xbf16>, vector<128x256xf32> -> vector<128x256xf32>
      %c1_52 = arith.constant 1 : index
      %c0_53 = arith.constant 0 : index
      %92 = vector.load %arg10[%c1_52, %c0_53] : memref<4x256xf32, #tpu.memory_space<vmem>>, vector<1x256xf32>
      %93 = vector.broadcast %92 : vector<1x256xf32> to vector<128x256xf32>
      %94 = arith.addf %91, %93 : vector<128x256xf32>
      %c0_54 = arith.constant 0 : index
      %c0_55 = arith.constant 0 : index
      %c0_56 = arith.constant 0 : index
      %95 = vector.load %arg4[%c0_54, %c0_55, %c0_56] : memref<1x128x128xbf16, #tpu.memory_space<vmem>>, vector<1x128x128xbf16>
      %96 = vector.shape_cast %95 : vector<1x128x128xbf16> to vector<128x128xbf16>
      %c3 = arith.constant 3 : index
      %c0_57 = arith.constant 0 : index
      %c0_58 = arith.constant 0 : index
      %97 = vector.load %arg9[%c3, %c0_57, %c0_58] : memref<4x128x256xbf16, #tpu.memory_space<vmem>>, vector<1x128x256xbf16>
      %98 = vector.shape_cast %97 : vector<1x128x256xbf16> to vector<128x256xbf16>
      %cst_59 = arith.constant dense<0.000000e+00> : vector<128x256xf32>
      %99 = tpu.matmul %96, %98, %cst_59 {dimension_numbers = #tpu.dot_dimension_numbers<[1], [0], [0], [1], [0, 0, 1, 1], [], []>} : vector<128x128xbf16>, vector<128x256xbf16>, vector<128x256xf32> -> vector<128x256xf32>
      %c3_60 = arith.constant 3 : index
      %c0_61 = arith.constant 0 : index
      %100 = vector.load %arg10[%c3_60, %c0_61] : memref<4x256xf32, #tpu.memory_space<vmem>>, vector<1x256xf32>
      %101 = vector.broadcast %100 : vector<1x256xf32> to vector<128x256xf32>
      %102 = arith.addf %99, %101 : vector<128x256xf32>
      %103 = arith.truncf %94 : vector<128x256xf32> to vector<128x256xbf16>
      %c0_62 = arith.constant 0 : index
      %c0_63 = arith.constant 0 : index
      %104 = vector.load %arg12[%c0_62, %c0_63] : memref<128x256xbf16, #tpu.memory_space<vmem>>, vector<128x256xbf16>
      tpu.vector_store %arg12[%c0_62, %c0_63], %103 {strides = array<i32>} : memref<128x256xbf16, #tpu.memory_space<vmem>>, vector<128x256xbf16>,
      %105 = arith.truncf %102 : vector<128x256xf32> to vector<128x256xbf16>
      %c0_64 = arith.constant 0 : index
      %c0_65 = arith.constant 0 : index
      %106 = vector.load %arg13[%c0_64, %c0_65] : memref<128x256xbf16, #tpu.memory_space<vmem>>, vector<128x256xbf16>
      tpu.vector_store %arg13[%c0_64, %c0_65], %105 {strides = array<i32>} : memref<128x256xbf16, #tpu.memory_space<vmem>>, vector<128x256xbf16>,
    } else {
    }
    %c0 = arith.constant 0 : index
    %c0_1 = arith.constant 0 : index
    %c0_2 = arith.constant 0 : index
    %3 = vector.load %arg3[%c0, %c0_1, %c0_2] : memref<1x128x128xbf16, #tpu.memory_space<vmem>>, vector<1x128x128xbf16>
    %4 = vector.shape_cast %3 : vector<1x128x128xbf16> to vector<128x128xbf16>
    %c0_3 = arith.constant 0 : index
    %c0_4 = arith.constant 0 : index
    %c0_5 = arith.constant 0 : index
    %5 = vector.load %arg9[%c0_3, %c0_4, %c0_5] : memref<4x128x256xbf16, #tpu.memory_space<vmem>>, vector<1x128x256xbf16>
    %6 = vector.shape_cast %5 : vector<1x128x256xbf16> to vector<128x256xbf16>
    %cst = arith.constant dense<0.000000e+00> : vector<128x256xf32>
    %7 = tpu.matmul %4, %6, %cst {dimension_numbers = #tpu.dot_dimension_numbers<[1], [0], [0], [1], [0, 0, 1, 1], [], []>} : vector<128x128xbf16>, vector<128x256xbf16>, vector<128x256xf32> -> vector<128x256xf32>
    %c0_6 = arith.constant 0 : index
    %c0_7 = arith.constant 0 : index
    %8 = vector.load %arg10[%c0_6, %c0_7] : memref<4x256xf32, #tpu.memory_space<vmem>>, vector<1x256xf32>
    %9 = vector.broadcast %8 : vector<1x256xf32> to vector<128x256xf32>
    %10 = arith.addf %7, %9 : vector<128x256xf32>
    %11 = arith.truncf %10 : vector<128x256xf32> to vector<128x256xbf16>
    %12 = vector.extract_strided_slice %11 {offsets = [0, 0], sizes = [128, 128], strides = [1, 1]} : vector<128x256xbf16> to vector<128x128xbf16>
    %13 = vector.extract_strided_slice %11 {offsets = [0, 128], sizes = [128, 128], strides = [1, 1]} : vector<128x256xbf16> to vector<128x128xbf16>
    %c0_8 = arith.constant 0 : index
    %c0_9 = arith.constant 0 : index
    %c0_10 = arith.constant 0 : index
    %14 = vector.load %arg2[%c0_8, %c0_9, %c0_10] : memref<1x128x128xbf16, #tpu.memory_space<vmem>>, vector<1x128x128xbf16>
    %15 = vector.shape_cast %14 : vector<1x128x128xbf16> to vector<128x128xbf16>
    %c2 = arith.constant 2 : index
    %c0_11 = arith.constant 0 : index
    %c0_12 = arith.constant 0 : index
    %16 = vector.load %arg9[%c2, %c0_11, %c0_12] : memref<4x128x256xbf16, #tpu.memory_space<vmem>>, vector<1x128x256xbf16>
    %17 = vector.shape_cast %16 : vector<1x128x256xbf16> to vector<128x256xbf16>
    %cst_13 = arith.constant dense<0.000000e+00> : vector<128x256xf32>
    %18 = tpu.matmul %15, %17, %cst_13 {dimension_numbers = #tpu.dot_dimension_numbers<[1], [0], [0], [1], [0, 0, 1, 1], [], []>} : vector<128x128xbf16>, vector<128x256xbf16>, vector<128x256xf32> -> vector<128x256xf32>
    %c2_14 = arith.constant 2 : index
    %c0_15 = arith.constant 0 : index
    %19 = vector.load %arg10[%c2_14, %c0_15] : memref<4x256xf32, #tpu.memory_space<vmem>>, vector<1x256xf32>
    %20 = vector.broadcast %19 : vector<1x256xf32> to vector<128x256xf32>
    %21 = arith.addf %18, %20 : vector<128x256xf32>
    %22 = arith.truncf %21 : vector<128x256xf32> to vector<128x256xbf16>
    %23 = vector.extract_strided_slice %22 {offsets = [0, 0], sizes = [128, 128], strides = [1, 1]} : vector<128x256xbf16> to vector<128x128xbf16>
    %24 = vector.extract_strided_slice %22 {offsets = [0, 128], sizes = [128, 128], strides = [1, 1]} : vector<128x256xbf16> to vector<128x128xbf16>
    %c0_16 = arith.constant 0 : index
    %c0_17 = arith.constant 0 : index
    %25 = vector.load %arg12[%c0_16, %c0_17] : memref<128x256xbf16, #tpu.memory_space<vmem>>, vector<128x256xbf16>
    %c0_18 = arith.constant 0 : index
    %c0_19 = arith.constant 0 : index
    %26 = vector.load %arg13[%c0_18, %c0_19] : memref<128x256xbf16, #tpu.memory_space<vmem>>, vector<128x256xbf16>
    %27 = vector.extract_strided_slice %25 {offsets = [0, 0], sizes = [128, 128], strides = [1, 1]} : vector<128x256xbf16> to vector<128x128xbf16>
    %28 = vector.extract_strided_slice %25 {offsets = [0, 128], sizes = [128, 128], strides = [1, 1]} : vector<128x256xbf16> to vector<128x128xbf16>
    %29 = vector.extract_strided_slice %26 {offsets = [0, 0], sizes = [128, 128], strides = [1, 1]} : vector<128x256xbf16> to vector<128x128xbf16>
    %30 = vector.extract_strided_slice %26 {offsets = [0, 128], sizes = [128, 128], strides = [1, 1]} : vector<128x256xbf16> to vector<128x128xbf16>
    %cst_20 = arith.constant dense<0.000000e+00> : vector<128x128xf32>
    %31 = tpu.matmul %23, %29, %cst_20 {dimension_numbers = #tpu.dot_dimension_numbers<[1], [1], [0], [0], [0, 0, 1, 0], [], []>} : vector<128x128xbf16>, vector<128x128xbf16>, vector<128x128xf32> -> vector<128x128xf32>
    %cst_21 = arith.constant dense<0.000000e+00> : vector<128x128xf32>
    %32 = tpu.matmul %12, %27, %cst_21 {dimension_numbers = #tpu.dot_dimension_numbers<[1], [1], [0], [0], [0, 0, 1, 0], [], []>} : vector<128x128xbf16>, vector<128x128xbf16>, vector<128x128xf32> -> vector<128x128xf32>
    %33 = arith.mulf %31, %32 : vector<128x128xf32>
    %cst_22 = arith.constant dense<0.000000e+00> : vector<128x128xf32>
    %34 = tpu.matmul %24, %30, %cst_22 {dimension_numbers = #tpu.dot_dimension_numbers<[1], [1], [0], [0], [0, 0, 1, 0], [], []>} : vector<128x128xbf16>, vector<128x128xbf16>, vector<128x128xf32> -> vector<128x128xf32>
    %cst_23 = arith.constant dense<0.000000e+00> : vector<128x128xf32>
    %35 = tpu.matmul %13, %28, %cst_23 {dimension_numbers = #tpu.dot_dimension_numbers<[1], [1], [0], [0], [0, 0, 1, 0], [], []>} : vector<128x128xbf16>, vector<128x128xbf16>, vector<128x128xf32> -> vector<128x128xf32>
    %36 = arith.mulf %34, %35 : vector<128x128xf32>
    %cst_24 = arith.constant 0.000000e+00 : f32
    %37 = vector.broadcast %cst_24 : f32 to vector<128x128xf32>
    %38 = arith.subf %37, %36 : vector<128x128xf32>
    %39 = arith.negf %38 : vector<128x128xf32>
    %40 = math.exp %39 : vector<128x128xf32>
    %cst_25 = arith.constant 1.000000e+00 : f32
    %41 = vector.broadcast %cst_25 : f32 to vector<128x128xf32>
    %42 = arith.addf %41, %40 : vector<128x128xf32>
    %43 = arith.divf %41, %42 : vector<128x128xf32>
    %c0_26 = arith.constant 0 : index
    %c0_27 = arith.constant 0 : index
    %c0_28 = arith.constant 0 : index
    %44 = vector.load %arg6[%c0_26, %c0_27, %c0_28] : memref<1x128x128xi8, #tpu.memory_space<vmem>>, vector<1x128x128xi8>
    %45 = vector.shape_cast %44 : vector<1x128x128xi8> to vector<128x128xi8>
    %c0_i8 = arith.constant 0 : i8
    %46 = vector.broadcast %c0_i8 : i8 to vector<128x128xi8>
    %47 = arith.cmpi ne, %45, %46 : vector<128x128xi8>
    %c0_29 = arith.constant 0 : index
    %c0_30 = arith.constant 0 : index
    %c0_31 = arith.constant 0 : index
    %48 = vector.load %arg7[%c0_29, %c0_30, %c0_31] : memref<1x1x128xi8, #tpu.memory_space<vmem>>, vector<1x1x128xi8>
    %49 = vector.shape_cast %48 : vector<1x1x128xi8> to vector<1x128xi8>
    %c0_i8_32 = arith.constant 0 : i8
    %50 = vector.broadcast %c0_i8_32 : i8 to vector<1x128xi8>
    %51 = arith.cmpi ne, %49, %50 : vector<1x128xi8>
    %52 = vector.broadcast %51 : vector<1x128xi1> to vector<128x128xi1>
    %53 = arith.ori %47, %52 : vector<128x128xi1>
    %cst_33 = arith.constant 0xFF800000 : f32
    %54 = vector.broadcast %cst_33 : f32 to vector<128x128xf32>
    %55 = arith.select %53, %54, %33 : vector<128x128xi1>, vector<128x128xf32>
    %cst_34 = arith.constant dense<0xFF800000> : vector<128xf32>
    %56 = vector.multi_reduction <maximumf>, %55, %cst_34 [1] : vector<128x128xf32> to vector<128xf32>
    %57 = vector.shape_cast %56 : vector<128xf32> to vector<128x1xf32>
    %58 = vector.broadcast %57 : vector<128x1xf32> to vector<128x128xf32>
    %59 = arith.subf %55, %58 : vector<128x128xf32>
    %60 = math.exp %59 : vector<128x128xf32>
    %cst_35 = arith.constant dense<0.000000e+00> : vector<128xf32>
    %61 = vector.multi_reduction <add>, %60, %cst_35 [1] : vector<128x128xf32> to vector<128xf32>
    %62 = vector.shape_cast %61 : vector<128xf32> to vector<128x1xf32>
    %63 = vector.broadcast %62 : vector<128x1xf32> to vector<128x128xf32>
    %64 = arith.divf %60, %63 : vector<128x128xf32>
    %cst_36 = arith.constant 0xFF800000 : f32
    %65 = vector.broadcast %cst_36 : f32 to vector<128x128xf32>
    %66 = arith.select %53, %65, %43 : vector<128x128xi1>, vector<128x128xf32>
    %cst_37 = arith.constant dense<0xFF800000> : vector<128xf32>
    %67 = vector.multi_reduction <maximumf>, %66, %cst_37 [1] : vector<128x128xf32> to vector<128xf32>
    %68 = vector.shape_cast %67 : vector<128xf32> to vector<128x1xf32>
    %69 = vector.broadcast %68 : vector<128x1xf32> to vector<128x128xf32>
    %70 = arith.subf %66, %69 : vector<128x128xf32>
    %71 = math.exp %70 : vector<128x128xf32>
    %cst_38 = arith.constant dense<0.000000e+00> : vector<128xf32>
    %72 = vector.multi_reduction <add>, %71, %cst_38 [1] : vector<128x128xf32> to vector<128xf32>
    %73 = vector.shape_cast %72 : vector<128xf32> to vector<128x1xf32>
    %74 = vector.broadcast %73 : vector<128x1xf32> to vector<128x128xf32>
    %75 = arith.divf %71, %74 : vector<128x128xf32>
    %c0_39 = arith.constant 0 : index
    %c0_40 = arith.constant 0 : index
    %c0_41 = arith.constant 0 : index
    %76 = vector.load %arg8[%c0_39, %c0_40, %c0_41] : memref<1x128x128xbf16, #tpu.memory_space<vmem>>, vector<1x128x128xbf16>
    %77 = vector.shape_cast %76 : vector<1x128x128xbf16> to vector<128x128xbf16>
    %78 = arith.extf %77 : vector<128x128xbf16> to vector<128x128xf32>
    %79 = arith.subf %64, %75 : vector<128x128xf32>
    %80 = arith.cmpf oge, %79, %78 : vector<128x128xf32>
    %81 = arith.extui %80 : vector<128x128xi1> to vector<128x128xi8>
    %c0_i8_42 = arith.constant 0 : i8
    %82 = vector.broadcast %c0_i8_42 : i8 to vector<128x128xi8>
    %83 = arith.select %47, %82, %81 : vector<128x128xi1>, vector<128x128xi8>
    %c0_43 = arith.constant 0 : index
    %c0_44 = arith.constant 0 : index
    %c0_45 = arith.constant 0 : index
    %84 = vector.load %arg11[%c0_43, %c0_44, %c0_45] : memref<1x128x128xi8, #tpu.memory_space<vmem>>, vector<1x128x128xi8>
    %85 = vector.shape_cast %84 : vector<1x128x128xi8> to vector<128x128xi8>
    %86 = vector.shape_cast %83 : vector<128x128xi8> to vector<1x128x128xi8>
    tpu.vector_store %arg11[%c0_43, %c0_44, %c0_45], %86 {strides = array<i32>} : memref<1x128x128xi8, #tpu.memory_space<vmem>>, vector<1x128x128xi8>,
    return
  }
  func.func @transform_0(%arg0: i32, %arg1: i32) -> (i32, i32, i32) {
    %c0_i32 = arith.constant 0 : i32
    %c0_i32_0 = arith.constant 0 : i32
    return %arg0, %arg1, %c0_i32 : i32, i32, i32
  }
  func.func @transform_1(%arg0: i32, %arg1: i32) -> (i32, i32, i32) {
    %c0_i32 = arith.constant 0 : i32
    %c0_i32_0 = arith.constant 0 : i32
    return %arg0, %arg1, %c0_i32 : i32, i32, i32
  }
  func.func @transform_2(%arg0: i32, %arg1: i32) -> (i32, i32, i32) {
    %c0_i32 = arith.constant 0 : i32
    %c0_i32_0 = arith.constant 0 : i32
    %c0_i32_1 = arith.constant 0 : i32
    return %arg0, %c0_i32, %c0_i32_0 : i32, i32, i32
  }
  func.func @transform_3(%arg0: i32, %arg1: i32) -> (i32, i32, i32) {
    %c0_i32 = arith.constant 0 : i32
    %c0_i32_0 = arith.constant 0 : i32
    %c0_i32_1 = arith.constant 0 : i32
    return %arg0, %c0_i32, %c0_i32_0 : i32, i32, i32
  }
  func.func @transform_4(%arg0: i32, %arg1: i32) -> (i32, i32, i32) {
    %c0_i32 = arith.constant 0 : i32
    %c0_i32_0 = arith.constant 0 : i32
    %c0_i32_1 = arith.constant 0 : i32
    return %c0_i32, %arg1, %c0_i32_0 : i32, i32, i32
  }
  func.func @transform_5(%arg0: i32, %arg1: i32) -> (i32, i32, i32) {
    %c0_i32 = arith.constant 0 : i32
    %c0_i32_0 = arith.constant 0 : i32
    %c0_i32_1 = arith.constant 0 : i32
    return %arg0, %c0_i32, %c0_i32_0 : i32, i32, i32
  }
  func.func @transform_6(%arg0: i32, %arg1: i32) -> (i32, i32, i32) {
    %c0_i32 = arith.constant 0 : i32
    %c0_i32_0 = arith.constant 0 : i32
    return %arg0, %arg1, %c0_i32 : i32, i32, i32
  }
  func.func @transform_7(%arg0: i32, %arg1: i32) -> (i32, i32, i32) {
    %c0_i32 = arith.constant 0 : i32
    %c0_i32_0 = arith.constant 0 : i32
    %c0_i32_1 = arith.constant 0 : i32
    %c0_i32_2 = arith.constant 0 : i32
    return %c0_i32, %c0_i32_0, %c0_i32_1 : i32, i32, i32
  }
  func.func @transform_8(%arg0: i32, %arg1: i32) -> (i32, i32) {
    %c0_i32 = arith.constant 0 : i32
    %c0_i32_0 = arith.constant 0 : i32
    %c0_i32_1 = arith.constant 0 : i32
    return %c0_i32, %c0_i32_0 : i32, i32
  }
  func.func @transform_9(%arg0: i32, %arg1: i32) -> (i32, i32, i32) {
    %c0_i32 = arith.constant 0 : i32
    %c0_i32_0 = arith.constant 0 : i32
    return %arg0, %arg1, %c0_i32 : i32, i32, i32
  }
}

</mosaic_0001>

<llo_original>
// kernel: tpu_custom_call.1
$region0: #{tpu_custom_call.1}
  #allocation0 [shape = 'u32[]', space=smem, size = 0x4, offset = 0x4, fixed_abs, tag = 'smem constant byte address 0x4 - core index']
  #allocation1 [shape = 'u32[144,128]{1,0:T(1,128)}', space=vmem, size = 0x12000, scoped, tag = 'internal scratch']
  #allocation2 [shape = 'bf16[128,256]{1,0:T(8,128)(2,1)}', space=vmem, size = 0x10000, scoped, tag = 'scratch operand']
  #allocation3 [shape = 'bf16[128,256]{1,0:T(8,128)(2,1)}', space=vmem, size = 0x10000, scoped, tag = 'scratch operand']
  %s0 = inlined_call_operand.hbm [shape: bf16[2,128,128], index: 0, kind: input, shape index: {}]
  %s1 = inlined_call_operand.hbm [shape: bf16[2,128,128], index: 1, kind: input, shape index: {}]
  %s2 = inlined_call_operand.hbm [shape: bf16[2,128,128], index: 2, kind: input, shape index: {}]
  %s3 = inlined_call_operand.hbm [shape: bf16[2,128,128], index: 3, kind: input, shape index: {}]
  %s4 = inlined_call_operand.hbm [shape: s8[1,128,128], index: 4, kind: input, shape index: {}]
  %s5 = inlined_call_operand.vmem [shape: s8[2,1,128], index: 5, kind: input, shape index: {}]
  %s6 = inlined_call_operand.hbm [shape: bf16[2,128,128], index: 6, kind: input, shape index: {}]
  %s7 = inlined_call_operand.hbm [shape: bf16[4,128,256], index: 7, kind: input, shape index: {}]
  %s8 = inlined_call_operand.vmem [shape: f32[4,256], index: 8, kind: input, shape index: {}]
  %s9 = inlined_call_operand.hbm [shape: s8[2,128,128], index: 9, kind: output, shape index: {}]
  %s10 = sld [smem:[#allocation0]]
  $region101: #{tpu_custom_call.1} parent=0
    _
  %s12 = ssub.s32 1, %s10
  %s13 = scalar_select 0, %s12, %s10
  $region1: #{tpu_custom_call.1} parent=0
    #allocation4 [shape = 'u8[65536]{0}', space=vmem, size = 0x10000, scoped, tag = 'input window, operand 0']
    #allocation5 [shape = 's32[2]{0}', space=sflag, size = 0x8, scoped, tag = 'scoped memory for tpu_custom_call.1']
    #allocation6 [shape = 's32[2]{0}', space=sflag, size = 0x8, scoped, tag = 'scoped memory for tpu_custom_call.1']
    #allocation7 [shape = 'u8[65536]{0}', space=vmem, size = 0x10000, scoped, tag = 'input window, operand 1']
    #allocation8 [shape = 's32[2]{0}', space=sflag, size = 0x8, scoped, tag = 'scoped memory for tpu_custom_call.1']
    #allocation9 [shape = 'u8[65536]{0}', space=vmem, size = 0x10000, scoped, tag = 'input window, operand 2']
    #allocation10 [shape = 'u8[65536]{0}', space=vmem, size = 0x10000, scoped, tag = 'input window, operand 3']
    #allocation11 [shape = 's32[2]{0}', space=sflag, size = 0x8, scoped, tag = 'scoped memory for tpu_custom_call.1']
    #allocation12 [shape = 'u8[16384]{0}', space=vmem, size = 0x4000, scoped, tag = 'input window, operand 4, single buffered']
    #allocation13 [shape = 'u8[65536]{0}', space=vmem, size = 0x10000, scoped, tag = 'input window, operand 6']
    #allocation14 [shape = 's32[2]{0}', space=sflag, size = 0x8, scoped, tag = 'scoped memory for tpu_custom_call.1']
    #allocation15 [shape = 'u8[262144]{0}', space=vmem, size = 0x40000, scoped, tag = 'input window, operand 7, single buffered']
    #allocation16 [shape = 'u8[32768]{0}', space=vmem, size = 0x8000, scoped, tag = 'output window, operand 0']
    %14 = vsyncpa [#allocation5], 0
    %s15 = scalar_lea.sflag [#allocation5], 1
    %16 = vsyncpa %s15, 0
    %17 = vsyncpa [#allocation8], 0
    %s18 = scalar_lea.sflag [#allocation8], 1
    %19 = vsyncpa %s18, 0
    %20 = vsyncpa [#allocation11], 0
    %s21 = scalar_lea.sflag [#allocation11], 1
    %22 = vsyncpa %s21, 0
    %23 = vsyncpa [#allocation14], 0
    %s24 = scalar_lea.sflag [#allocation14], 1
    %25 = vsyncpa %s24, 0
    %26 = vsyncpa [#allocation6], 0
    %s27 = scalar_lea.sflag [#allocation6], 1
    %28 = vsyncpa %s27, 0
    loop: start=0, step=1, limit=4
    $region2: #{tpu_custom_call.1} parent=1 // loop_pre_header
      _
    $region3: #{tpu_custom_call.1} parent=1 // loop_header
      %s30 = sphi 0, %s34
      %p31 = scmp.ge.s32.totalorder %s30, 4
      %s37 = sphi 0, %s49
      %s38 = sphi 0, %s45
      %s39 = sphi 0, %s37
      %s40 = sphi 0, %s38
      %s41 = sphi 0, %s39
      %s42 = sphi 0, %s40
      %s54 = sphi 0, %s56
      %s57 = sphi 0, %s54
      %s58 = sphi 0, %s57
      %s74 = sphi 0, %s58
      %s82 = sphi 0, %s84
      %s85 = sphi 0, %s82
      %s86 = sphi 0, %s85
      %s102 = sphi 0, %s86
      %s108 = sphi 0, %s110
      %s111 = sphi 0, %s108
      %s112 = sphi 0, %s111
      %s128 = sphi 0, %s112
      %s134 = sphi 0, %s136
      %s137 = sphi 0, %s134
      %s138 = sphi 0, %s137
      %s154 = sphi 0, %s138
      %s160 = sphi 0, %s162
      %s163 = sphi 0, %s160
      %s164 = sphi 0, %s163
      %s180 = sphi 0, %s164
      %s186 = sphi 0, %s188
      %s189 = sphi 0, %s186
      %s190 = sphi 0, %s189
      %s206 = sphi 0, %s190
      %s214 = sphi 0, %s216
      %s217 = sphi 0, %s214
      %s218 = sphi 0, %s217
      %s234 = sphi 0, %s218
      %s238 = sphi 0, %s238
      %s240 = sphi 0, %s238
      %s241 = sphi 0, %s240
      %s255 = sphi 0, %s241
      %s259 = sphi 0, %s259
      %s261 = sphi 0, %s259
      %s262 = sphi 0, %s261
      %s276 = sphi 0, %s262
      %s284 = sphi 0, %s286
      %s287 = sphi 0, %s284
      %s288 = sphi 0, %s287
      %s304 = sphi 0, %s288
    $region4: #{tpu_custom_call.1} parent=1 // loop_header_branch
      %33 = sbr.rel (%p31) target = $region8
    $region5: #{tpu_custom_call.1} parent=1 // loop_body
      %s35 = ssub.s32 %s30, 1
      %s36 = ssub.s32 %s30, 2
      %s43 = sadd.s32 1, %s38
      %p44 = scmp.ge.s32.totalorder %s43, 1
      %s45 = scalar_select %p44, 0, %s43
      %s46 = sadd.s32 1, %s37
      %s47 = scalar_select %p44, %s46, %s37
      %p48 = scmp.ge.s32.totalorder %s47, 2
      %s49 = scalar_select %p48, 0, %s47
      %s50 = ssub.s32 %s37, %s49
      %s51 = ssub.s32 %s38, %s45
      %s52 = sor.u32 %s50, %s51
      %p53 = scmp.eq.s32.totalorder %s52, 0
      %s55 = sadd.s32 %s54, 1
      %s56 = scalar_select %p53, %s54, %s55
      %p59 = pneg %p53
      %p60 = scmp.eq.s32.totalorder %s30, 1
      %p61 = por %p59, %p60
      %p62 = scmp.ne.s32.totalorder %s54, %s57
      %p63 = scmp.eq.s32.totalorder %s30, 0
      %p64 = por %p62, %p63
      %p65 = scmp.ne.s32.totalorder %s54, %s57
      %p66 = scmp.eq.s32.totalorder %s35, 1
      %p67 = por %p65, %p66
      %p68 = scmp.ne.s32.totalorder %s57, %s58
      %p69 = scmp.eq.s32.totalorder %s35, 0
      %p70 = por %p68, %p69
      %p71 = scmp.ne.s32.totalorder %s57, %s58
      %p72 = scmp.eq.s32.totalorder %s36, 1
      %p73 = por %p71, %p72
      %p75 = scmp.ne.s32.totalorder %s58, %s74
      %p76 = scmp.eq.s32.totalorder %s36, 0
      %p77 = por %p75, %p76
      %s78 = ssub.s32 %s37, %s49
      %s79 = ssub.s32 %s38, %s45
      %s80 = sor.u32 %s78, %s79
      %p81 = scmp.eq.s32.totalorder %s80, 0
      %s83 = sadd.s32 %s82, 1
      %s84 = scalar_select %p81, %s82, %s83
      %p87 = pneg %p81
      %p88 = scmp.eq.s32.totalorder %s30, 1
      %p89 = por %p87, %p88
      %p90 = scmp.ne.s32.totalorder %s82, %s85
      %p91 = scmp.eq.s32.totalorder %s30, 0
      %p92 = por %p90, %p91
      %p93 = scmp.ne.s32.totalorder %s82, %s85
      %p94 = scmp.eq.s32.totalorder %s35, 1
      %p95 = por %p93, %p94
      %p96 = scmp.ne.s32.totalorder %s85, %s86
      %p97 = scmp.eq.s32.totalorder %s35, 0
      %p98 = por %p96, %p97
      %p99 = scmp.ne.s32.totalorder %s85, %s86
      %p100 = scmp.eq.s32.totalorder %s36, 1
      %p101 = por %p99, %p100
      %p103 = scmp.ne.s32.totalorder %s86, %s102
      %p104 = scmp.eq.s32.totalorder %s36, 0
      %p105 = por %p103, %p104
      %s106 = ssub.s32 %s37, %s49
      %p107 = scmp.eq.s32.totalorder %s106, 0
      %s109 = sadd.s32 %s108, 1
      %s110 = scalar_select %p107, %s108, %s109
      %p113 = pneg %p107
      %p114 = scmp.eq.s32.totalorder %s30, 1
      %p115 = por %p113, %p114
      %p116 = scmp.ne.s32.totalorder %s108, %s111
      %p117 = scmp.eq.s32.totalorder %s30, 0
      %p118 = por %p116, %p117
      %p119 = scmp.ne.s32.totalorder %s108, %s111
      %p120 = scmp.eq.s32.totalorder %s35, 1
      %p121 = por %p119, %p120
      %p122 = scmp.ne.s32.totalorder %s111, %s112
      %p123 = scmp.eq.s32.totalorder %s35, 0
      %p124 = por %p122, %p123
      %p125 = scmp.ne.s32.totalorder %s111, %s112
      %p126 = scmp.eq.s32.totalorder %s36, 1
      %p127 = por %p125, %p126
      %p129 = scmp.ne.s32.totalorder %s112, %s128
      %p130 = scmp.eq.s32.totalorder %s36, 0
      %p131 = por %p129, %p130
      %s132 = ssub.s32 %s37, %s49
      %p133 = scmp.eq.s32.totalorder %s132, 0
      %s135 = sadd.s32 %s134, 1
      %s136 = scalar_select %p133, %s134, %s135
      %p139 = pneg %p133
      %p140 = scmp.eq.s32.totalorder %s30, 1
      %p141 = por %p139, %p140
      %p142 = scmp.ne.s32.totalorder %s134, %s137
      %p143 = scmp.eq.s32.totalorder %s30, 0
      %p144 = por %p142, %p143
      %p145 = scmp.ne.s32.totalorder %s134, %s137
      %p146 = scmp.eq.s32.totalorder %s35, 1
      %p147 = por %p145, %p146
      %p148 = scmp.ne.s32.totalorder %s137, %s138
      %p149 = scmp.eq.s32.totalorder %s35, 0
      %p150 = por %p148, %p149
      %p151 = scmp.ne.s32.totalorder %s137, %s138
      %p152 = scmp.eq.s32.totalorder %s36, 1
      %p153 = por %p151, %p152
      %p155 = scmp.ne.s32.totalorder %s138, %s154
      %p156 = scmp.eq.s32.totalorder %s36, 0
      %p157 = por %p155, %p156
      %s158 = ssub.s32 %s38, %s45
      %p159 = scmp.eq.s32.totalorder %s158, 0
      %s161 = sadd.s32 %s160, 1
      %s162 = scalar_select %p159, %s160, %s161
      %p165 = pneg %p159
      %p166 = scmp.eq.s32.totalorder %s30, 1
      %p167 = por %p165, %p166
      %p168 = scmp.ne.s32.totalorder %s160, %s163
      %p169 = scmp.eq.s32.totalorder %s30, 0
      %p170 = por %p168, %p169
      %p171 = scmp.ne.s32.totalorder %s160, %s163
      %p172 = scmp.eq.s32.totalorder %s35, 1
      %p173 = por %p171, %p172
      %p174 = scmp.ne.s32.totalorder %s163, %s164
      %p175 = scmp.eq.s32.totalorder %s35, 0
      %p176 = por %p174, %p175
      %p177 = scmp.ne.s32.totalorder %s163, %s164
      %p178 = scmp.eq.s32.totalorder %s36, 1
      %p179 = por %p177, %p178
      %p181 = scmp.ne.s32.totalorder %s164, %s180
      %p182 = scmp.eq.s32.totalorder %s36, 0
      %p183 = por %p181, %p182
      %s184 = ssub.s32 %s37, %s49
      %p185 = scmp.eq.s32.totalorder %s184, 0
      %s187 = sadd.s32 %s186, 1
      %s188 = scalar_select %p185, %s186, %s187
      %p191 = pneg %p185
      %p192 = scmp.eq.s32.totalorder %s30, 1
      %p193 = por %p191, %p192
      %p194 = scmp.ne.s32.totalorder %s186, %s189
      %p195 = scmp.eq.s32.totalorder %s30, 0
      %p196 = por %p194, %p195
      %p197 = scmp.ne.s32.totalorder %s186, %s189
      %p198 = scmp.eq.s32.totalorder %s35, 1
      %p199 = por %p197, %p198
      %p200 = scmp.ne.s32.totalorder %s189, %s190
      %p201 = scmp.eq.s32.totalorder %s35, 0
      %p202 = por %p200, %p201
      %p203 = scmp.ne.s32.totalorder %s189, %s190
      %p204 = scmp.eq.s32.totalorder %s36, 1
      %p205 = por %p203, %p204
      %p207 = scmp.ne.s32.totalorder %s190, %s206
      %p208 = scmp.eq.s32.totalorder %s36, 0
      %p209 = por %p207, %p208
      %s210 = ssub.s32 %s37, %s49
      %s211 = ssub.s32 %s38, %s45
      %s212 = sor.u32 %s210, %s211
      %p213 = scmp.eq.s32.totalorder %s212, 0
      %s215 = sadd.s32 %s214, 1
      %s216 = scalar_select %p213, %s214, %s215
      %p219 = pneg %p213
      %p220 = scmp.eq.s32.totalorder %s30, 1
      %p221 = por %p219, %p220
      %p222 = scmp.ne.s32.totalorder %s214, %s217
      %p223 = scmp.eq.s32.totalorder %s30, 0
      %p224 = por %p222, %p223
      %p225 = scmp.ne.s32.totalorder %s214, %s217
      %p226 = scmp.eq.s32.totalorder %s35, 1
      %p227 = por %p225, %p226
      %p228 = scmp.ne.s32.totalorder %s217, %s218
      %p229 = scmp.eq.s32.totalorder %s35, 0
      %p230 = por %p228, %p229
      %p231 = scmp.ne.s32.totalorder %s217, %s218
      %p232 = scmp.eq.s32.totalorder %s36, 1
      %p233 = por %p231, %p232
      %p235 = scmp.ne.s32.totalorder %s218, %s234
      %p236 = scmp.eq.s32.totalorder %s36, 0
      %p237 = por %p235, %p236
      %s239 = sadd.s32 %s238, 1
      %p242 = scmp.eq.s32.totalorder %s30, 1
      %p243 = scmp.ne.s32.totalorder %s238, %s240
      %p244 = scmp.eq.s32.totalorder %s30, 0
      %p245 = por %p243, %p244
      %p246 = scmp.ne.s32.totalorder %s238, %s240
      %p247 = scmp.eq.s32.totalorder %s35, 1
      %p248 = por %p246, %p247
      %p249 = scmp.ne.s32.totalorder %s240, %s241
      %p250 = scmp.eq.s32.totalorder %s35, 0
      %p251 = por %p249, %p250
      %p252 = scmp.ne.s32.totalorder %s240, %s241
      %p253 = scmp.eq.s32.totalorder %s36, 1
      %p254 = por %p252, %p253
      %p256 = scmp.ne.s32.totalorder %s241, %s255
      %p257 = scmp.eq.s32.totalorder %s36, 0
      %p258 = por %p256, %p257
      %s260 = sadd.s32 %s259, 1
      %p263 = scmp.eq.s32.totalorder %s30, 1
      %p264 = scmp.ne.s32.totalorder %s259, %s261
      %p265 = scmp.eq.s32.totalorder %s30, 0
      %p266 = por %p264, %p265
      %p267 = scmp.ne.s32.totalorder %s259, %s261
      %p268 = scmp.eq.s32.totalorder %s35, 1
      %p269 = por %p267, %p268
      %p270 = scmp.ne.s32.totalorder %s261, %s262
      %p271 = scmp.eq.s32.totalorder %s35, 0
      %p272 = por %p270, %p271
      %p273 = scmp.ne.s32.totalorder %s261, %s262
      %p274 = scmp.eq.s32.totalorder %s36, 1
      %p275 = por %p273, %p274
      %p277 = scmp.ne.s32.totalorder %s262, %s276
      %p278 = scmp.eq.s32.totalorder %s36, 0
      %p279 = por %p277, %p278
      %s280 = ssub.s32 %s37, %s49
      %s281 = ssub.s32 %s38, %s45
      %s282 = sor.u32 %s280, %s281
      %p283 = scmp.eq.s32.totalorder %s282, 0
      %s285 = sadd.s32 %s284, 1
      %s286 = scalar_select %p283, %s284, %s285
      %p289 = pneg %p283
      %p290 = scmp.eq.s32.totalorder %s30, 1
      %p291 = por %p289, %p290
      %p292 = scmp.ne.s32.totalorder %s284, %s287
      %p293 = scmp.eq.s32.totalorder %s30, 0
      %p294 = por %p292, %p293
      %p295 = scmp.ne.s32.totalorder %s284, %s287
      %p296 = scmp.eq.s32.totalorder %s35, 1
      %p297 = por %p295, %p296
      %p298 = scmp.ne.s32.totalorder %s287, %s288
      %p299 = scmp.eq.s32.totalorder %s35, 0
      %p300 = por %p298, %p299
      %p301 = scmp.ne.s32.totalorder %s287, %s288
      %p302 = scmp.eq.s32.totalorder %s36, 1
      %p303 = por %p301, %p302
      %p305 = scmp.ne.s32.totalorder %s288, %s304
      %p306 = scmp.eq.s32.totalorder %s36, 0
      %p307 = por %p305, %p306
      %p308 = scmp.le.s32.totalorder 1, %s30
      %p309 = scmp.lt.s32.totalorder %s30, 3
      %p310 = pnand %p308, %p309
      %p311 = pneg %p310
      // Predicated region
      $region9: #{tpu_custom_call.1} parent=5 // pred_check
        _
      $region10: #{tpu_custom_call.1} parent=5 // pred_check_branch
        %313 = sbr.rel (%p310) target = $region12
      $region11: #{tpu_custom_call.1} parent=5 // pred_region
        %s314 = ssub.s32 %s30, 1
        // Predicated region
        $region13: #{tpu_custom_call.1} parent=11 // pred_check
          %p315 = pneg %p176
        $region14: #{tpu_custom_call.1} parent=11 // pred_check_branch
          %317 = sbr.rel (%p315) target = $region16
        $region15: #{tpu_custom_call.1} parent=11 // pred_region
          %s318 = smul.u32 4, %s40
          %s320 = ssub.s32 512, 512
          %321 = vsyncadd [#allocation11], %s320
          %s322 = smul.addr %s318, 128
          %s323 = scalar_lea.hbm %s4, %s322
          %s324 = sshll.u32 [#allocation12], 4
          %s325 = int_to_ptr.vmem [resolvable:$true] %s324
          %330 = dma.hbm_to_vmem [thread:$0]  %s323, 512, %s325, [#allocation11], 128, 128, 8
        $region16: #{tpu_custom_call.1} parent=11 // pred_fallthru
          _
        // Predicated region
        $region17: #{tpu_custom_call.1} parent=11 // pred_check
          %p331 = pneg %p251
        $region18: #{tpu_custom_call.1} parent=11 // pred_check_branch
          %333 = sbr.rel (%p331) target = $region20
        $region19: #{tpu_custom_call.1} parent=11 // pred_region
          %s335 = ssub.s32 8192, 8192
          %336 = vsyncadd [#allocation14], %s335
          %s337 = sshll.u32 [#allocation15], 4
          %s338 = int_to_ptr.vmem [resolvable:$true] %s337
          %343 = dma.hbm_to_vmem [thread:$0]  %s7, 8192, %s338, [#allocation14], 128, 128, 8
        $region20: #{tpu_custom_call.1} parent=11 // pred_fallthru
          _
        // Predicated region
        $region21: #{tpu_custom_call.1} parent=11 // pred_check
          %p344 = pneg %p272
        $region22: #{tpu_custom_call.1} parent=11 // pred_check_branch
          %346 = sbr.rel (%p344) target = $region24
        $region23: #{tpu_custom_call.1} parent=11 // pred_region
          _
        $region24: #{tpu_custom_call.1} parent=11 // pred_fallthru
          _
      $region12: #{tpu_custom_call.1} parent=5 // pred_fallthru
        _
      %p347 = scmp.lt.s32.totalorder %s30, 2
      // Predicated region
      $region25: #{tpu_custom_call.1} parent=5 // pred_check
        %p348 = pneg %p347
      $region26: #{tpu_custom_call.1} parent=5 // pred_check_branch
        %350 = sbr.rel (%p348) target = $region28
      $region27: #{tpu_custom_call.1} parent=5 // pred_region
        // Predicated region
        $region29: #{tpu_custom_call.1} parent=27 // pred_check
          %p351 = pneg %p64
        $region30: #{tpu_custom_call.1} parent=27 // pred_check_branch
          %353 = sbr.rel (%p351) target = $region32
        $region31: #{tpu_custom_call.1} parent=27 // pred_region
          %s354 = sand.u32 %s54, 1
          %s355 = scalar_lea.sflag [#allocation5], %s354
          %s356 = sand.u32 %s54, 1
          %s357 = smul.addr %s356, 64
          %s358 = scalar_lea.vmem [#allocation4], %s357
          %s359 = smul.u32 16, %s38
          %s361 = ssub.s32 1024, 1024
          %362 = vsyncadd %s355, %s361
          %s363 = smul.addr %s37, 16
          %s364 = sadd.s32 %s359, %s363
          %s365 = smul.addr %s364, 64
          %s366 = scalar_lea.hbm %s0, %s365
          %s367 = sshll.u32 %s358, 4
          %s368 = int_to_ptr.vmem [resolvable:$true] %s367
          %373 = dma.hbm_to_vmem [thread:$0]  %s366, 1024, %s368, %s355, 64, 64, 4
        $region32: #{tpu_custom_call.1} parent=27 // pred_fallthru
          _
        // Predicated region
        $region33: #{tpu_custom_call.1} parent=27 // pred_check
          %p374 = pneg %p92
        $region34: #{tpu_custom_call.1} parent=27 // pred_check_branch
          %376 = sbr.rel (%p374) target = $region36
        $region35: #{tpu_custom_call.1} parent=27 // pred_region
          %s377 = sand.u32 %s30, 1
          %s378 = scalar_lea.sflag [#allocation8], %s377
          %s379 = sand.u32 %s82, 1
          %s380 = smul.addr %s379, 64
          %s381 = scalar_lea.vmem [#allocation7], %s380
          %s382 = smul.u32 16, %s38
          %s384 = ssub.s32 1024, 1024
          %385 = vsyncadd %s378, %s384
          %s386 = smul.addr %s37, 16
          %s387 = sadd.s32 %s382, %s386
          %s388 = smul.addr %s387, 64
          %s389 = scalar_lea.hbm %s1, %s388
          %s390 = sshll.u32 %s381, 4
          %s391 = int_to_ptr.vmem [resolvable:$true] %s390
          %396 = dma.hbm_to_vmem [thread:$0]  %s389, 1024, %s391, %s378, 64, 64, 4
        $region36: #{tpu_custom_call.1} parent=27 // pred_fallthru
          _
        // Predicated region
        $region37: #{tpu_custom_call.1} parent=27 // pred_check
          %p397 = pneg %p118
        $region38: #{tpu_custom_call.1} parent=27 // pred_check_branch
          %399 = sbr.rel (%p397) target = $region40
        $region39: #{tpu_custom_call.1} parent=27 // pred_region
          %s400 = sand.u32 %s30, 1
          %s401 = scalar_lea.sflag [#allocation8], %s400
          %s402 = sand.u32 %s108, 1
          %s403 = smul.addr %s402, 64
          %s404 = scalar_lea.vmem [#allocation9], %s403
          %s406 = ssub.s32 1024, 1024
          %407 = vsyncadd %s401, %s406
          %s408 = smul.addr %s37, 16
          %s409 = smul.addr %s408, 64
          %s410 = scalar_lea.hbm %s2, %s409
          %s411 = sshll.u32 %s404, 4
          %s412 = int_to_ptr.vmem [resolvable:$true] %s411
          %417 = dma.hbm_to_vmem [thread:$0]  %s410, 1024, %s412, %s401, 64, 64, 4
        $region40: #{tpu_custom_call.1} parent=27 // pred_fallthru
          _
        // Predicated region
        $region41: #{tpu_custom_call.1} parent=27 // pred_check
          %p418 = pneg %p144
        $region42: #{tpu_custom_call.1} parent=27 // pred_check_branch
          %420 = sbr.rel (%p418) target = $region44
        $region43: #{tpu_custom_call.1} parent=27 // pred_region
          %s421 = sand.u32 %s30, 1
          %s422 = scalar_lea.sflag [#allocation11], %s421
          %s423 = sand.u32 %s134, 1
          %s424 = smul.addr %s423, 64
          %s425 = scalar_lea.vmem [#allocation10], %s424
          %s427 = ssub.s32 1024, 1024
          %428 = vsyncadd %s422, %s427
          %s429 = smul.addr %s37, 16
          %s430 = smul.addr %s429, 64
          %s431 = scalar_lea.hbm %s3, %s430
          %s432 = sshll.u32 %s425, 4
          %s433 = int_to_ptr.vmem [resolvable:$true] %s432
          %438 = dma.hbm_to_vmem [thread:$0]  %s431, 1024, %s433, %s422, 64, 64, 4
        $region44: #{tpu_custom_call.1} parent=27 // pred_fallthru
          _
        // Predicated region
        $region45: #{tpu_custom_call.1} parent=27 // pred_check
          %p439 = pneg %p196
        $region46: #{tpu_custom_call.1} parent=27 // pred_check_branch
          %441 = sbr.rel (%p439) target = $region48
        $region47: #{tpu_custom_call.1} parent=27 // pred_region
          %p442 = scmp.lt.s32.totalorder %s37, 1
          %s443 = scalar_select %p442, %s37, 1
          %s444 = scalar_lea.vmem %s5, %s443
        $region48: #{tpu_custom_call.1} parent=27 // pred_fallthru
          _
        // Predicated region
        $region49: #{tpu_custom_call.1} parent=27 // pred_check
          %p445 = pneg %p224
        $region50: #{tpu_custom_call.1} parent=27 // pred_check_branch
          %447 = sbr.rel (%p445) target = $region52
        $region51: #{tpu_custom_call.1} parent=27 // pred_region
          %s448 = sand.u32 %s30, 1
          %s449 = scalar_lea.sflag [#allocation14], %s448
          %s450 = sand.u32 %s214, 1
          %s451 = smul.addr %s450, 64
          %s452 = scalar_lea.vmem [#allocation13], %s451
          %s453 = smul.u32 16, %s38
          %s455 = ssub.s32 1024, 1024
          %456 = vsyncadd %s449, %s455
          %s457 = smul.addr %s37, 16
          %s458 = sadd.s32 %s453, %s457
          %s459 = smul.addr %s458, 64
          %s460 = scalar_lea.hbm %s6, %s459
          %s461 = sshll.u32 %s452, 4
          %s462 = int_to_ptr.vmem [resolvable:$true] %s461
          %467 = dma.hbm_to_vmem [thread:$0]  %s460, 1024, %s462, %s449, 64, 64, 4
        $region52: #{tpu_custom_call.1} parent=27 // pred_fallthru
          _
      $region28: #{tpu_custom_call.1} parent=5 // pred_fallthru
        _
      %p468 = scmp.le.s32.totalorder 1, %s30
      %p469 = scmp.lt.s32.totalorder %s30, 3
      %p470 = pnand %p468, %p469
      %p471 = pneg %p470
      // Predicated region
      $region53: #{tpu_custom_call.1} parent=5 // pred_check
        _
      $region54: #{tpu_custom_call.1} parent=5 // pred_check_branch
        %473 = sbr.rel (%p470) target = $region56
      $region55: #{tpu_custom_call.1} parent=5 // pred_region
        %s474 = ssub.s32 %s30, 1
        %s475 = sand.u32 %s57, 1
        %s476 = scalar_lea.sflag [#allocation5], %s475
        %s477 = sand.u32 %s57, 1
        %s478 = smul.addr %s477, 64
        %s479 = scalar_lea.vmem [#allocation4], %s478
        // Predicated region
        $region57: #{tpu_custom_call.1} parent=55 // pred_check
          %p480 = pneg %p70
        $region58: #{tpu_custom_call.1} parent=55 // pred_check_branch
          %482 = sbr.rel (%p480) target = $region60
        $region59: #{tpu_custom_call.1} parent=55 // pred_region
          %483 = dma.done %s476, 1024
        $region60: #{tpu_custom_call.1} parent=55 // pred_fallthru
          _
        %s484 = sand.u32 %s35, 1
        %s485 = scalar_lea.sflag [#allocation8], %s484
        %s486 = sand.u32 %s85, 1
        %s487 = smul.addr %s486, 64
        %s488 = scalar_lea.vmem [#allocation7], %s487
        // Predicated region
        $region61: #{tpu_custom_call.1} parent=55 // pred_check
          %p489 = pneg %p98
        $region62: #{tpu_custom_call.1} parent=55 // pred_check_branch
          %491 = sbr.rel (%p489) target = $region64
        $region63: #{tpu_custom_call.1} parent=55 // pred_region
          %492 = dma.done %s485, 1024
        $region64: #{tpu_custom_call.1} parent=55 // pred_fallthru
          _
        %s493 = sand.u32 %s35, 1
        %s494 = scalar_lea.sflag [#allocation8], %s493
        %s495 = sand.u32 %s111, 1
        %s496 = smul.addr %s495, 64
        %s497 = scalar_lea.vmem [#allocation9], %s496
        // Predicated region
        $region65: #{tpu_custom_call.1} parent=55 // pred_check
          %p498 = pneg %p124
        $region66: #{tpu_custom_call.1} parent=55 // pred_check_branch
          %500 = sbr.rel (%p498) target = $region68
        $region67: #{tpu_custom_call.1} parent=55 // pred_region
          %501 = dma.done %s494, 1024
        $region68: #{tpu_custom_call.1} parent=55 // pred_fallthru
          _
        %s502 = sand.u32 %s35, 1
        %s503 = scalar_lea.sflag [#allocation11], %s502
        %s504 = sand.u32 %s137, 1
        %s505 = smul.addr %s504, 64
        %s506 = scalar_lea.vmem [#allocation10], %s505
        // Predicated region
        $region69: #{tpu_custom_call.1} parent=55 // pred_check
          %p507 = pneg %p150
        $region70: #{tpu_custom_call.1} parent=55 // pred_check_branch
          %509 = sbr.rel (%p507) target = $region72
        $region71: #{tpu_custom_call.1} parent=55 // pred_region
          %510 = dma.done %s503, 1024
        $region72: #{tpu_custom_call.1} parent=55 // pred_fallthru
          _
        // Predicated region
        $region73: #{tpu_custom_call.1} parent=55 // pred_check
          %p511 = pneg %p176
        $region74: #{tpu_custom_call.1} parent=55 // pred_check_branch
          %513 = sbr.rel (%p511) target = $region76
        $region75: #{tpu_custom_call.1} parent=55 // pred_region
          %514 = dma.done [#allocation11], 512
        $region76: #{tpu_custom_call.1} parent=55 // pred_fallthru
          _
        %s515 = sand.u32 %s35, 1
        %s516 = scalar_lea.sflag [#allocation14], %s515
        %s517 = sand.u32 %s217, 1
        %s518 = smul.addr %s517, 64
        %s519 = scalar_lea.vmem [#allocation13], %s518
        // Predicated region
        $region77: #{tpu_custom_call.1} parent=55 // pred_check
          %p520 = pneg %p230
        $region78: #{tpu_custom_call.1} parent=55 // pred_check_branch
          %522 = sbr.rel (%p520) target = $region80
        $region79: #{tpu_custom_call.1} parent=55 // pred_region
          %523 = dma.done %s516, 1024
        $region80: #{tpu_custom_call.1} parent=55 // pred_fallthru
          _
        // Predicated region
        $region81: #{tpu_custom_call.1} parent=55 // pred_check
          %p524 = pneg %p251
        $region82: #{tpu_custom_call.1} parent=55 // pred_check_branch
          %526 = sbr.rel (%p524) target = $region84
        $region83: #{tpu_custom_call.1} parent=55 // pred_region
          %527 = dma.done [#allocation14], 8192
        $region84: #{tpu_custom_call.1} parent=55 // pred_fallthru
          _
        %s528 = sand.u32 %s57, 1
        %s529 = scalar_lea.sflag [#allocation5], %s528
        %s530 = sand.u32 %s57, 1
        %s531 = smul.addr %s530, 64
        %s532 = scalar_lea.vmem [#allocation4], %s531
        %p533 = pneg %p70
        %p534 = pneg %p67
        %s535 = sand.u32 %s35, 1
        %s536 = scalar_lea.sflag [#allocation8], %s535
        %s537 = sand.u32 %s85, 1
        %s538 = smul.addr %s537, 64
        %s539 = scalar_lea.vmem [#allocation7], %s538
        %p540 = pneg %p98
        %p541 = pneg %p95
        %s542 = sand.u32 %s35, 1
        %s543 = scalar_lea.sflag [#allocation8], %s542
        %s544 = sand.u32 %s111, 1
        %s545 = smul.addr %s544, 64
        %s546 = scalar_lea.vmem [#allocation9], %s545
        %p547 = pneg %p124
        %p548 = pneg %p121
        %s549 = sand.u32 %s35, 1
        %s550 = scalar_lea.sflag [#allocation11], %s549
        %s551 = sand.u32 %s137, 1
        %s552 = smul.addr %s551, 64
        %s553 = scalar_lea.vmem [#allocation10], %s552
        %p554 = pneg %p150
        %p555 = pneg %p147
        %p556 = pneg %p176
        %p557 = pneg %p173
        %p558 = scmp.lt.s32.totalorder %s39, 1
        %s559 = scalar_select %p558, %s39, 1
        %s560 = scalar_lea.vmem %s5, %s559
        %p561 = pneg %p202
        %p562 = pneg %p199
        %s563 = sand.u32 %s35, 1
        %s564 = scalar_lea.sflag [#allocation14], %s563
        %s565 = sand.u32 %s217, 1
        %s566 = smul.addr %s565, 64
        %s567 = scalar_lea.vmem [#allocation13], %s566
        %p568 = pneg %p230
        %p569 = pneg %p227
        %p570 = pneg %p251
        %p571 = pneg %p248
        %p572 = pneg %p272
        %p573 = pneg %p269
        %p574 = pneg %p300
        %p575 = pneg %p297
        %s576 = sand.u32 %s287, 1
        %s577 = scalar_lea.sflag [#allocation6], %s576
        %s578 = sand.u32 %s287, 1
        %s579 = smul.addr %s578, 32
        %s580 = scalar_lea.vmem [#allocation16], %s579
        %s581 = smul.u32 16, %s40
        %s582 = smul.u32 16, %s40
        %s583 = smul.u32 4, %s40
        %p584 = scmp.lt.s32.totalorder %s39, 1
        %s585 = scalar_select %p584, %s39, 1
        %s586 = scalar_lea.vmem %s5, %s585
        %s587 = smul.u32 16, %s40
        %s588 = smul.u32 4, %s40
        %p592 = scmp.eq.s32.totalorder %s40, 0
        // Predicated region
        $region85: #{tpu_custom_call.1} parent=55 // pred_check
          %p593 = pneg %p592
        $region86: #{tpu_custom_call.1} parent=55 // pred_check_branch
          %595 = sbr.rel (%p593) target = $region88
        $region87: #{tpu_custom_call.1} parent=55 // pred_region
          %v596 = vld [vmem:[%s506] sm:$0xf]
          %v597 = vld [vmem:[%s506 + $0x4] sm:$0xf]
          %v598 = vld [vmem:[%s506 + $0x8] sm:$0xf]
          %v599 = vld [vmem:[%s506 + $0xc] sm:$0xf]
          %v600 = vld [vmem:[%s506 + $0x10] sm:$0xf]
          %v601 = vld [vmem:[%s506 + $0x14] sm:$0xf]
          %v602 = vld [vmem:[%s506 + $0x18] sm:$0xf]
          %v603 = vld [vmem:[%s506 + $0x1c] sm:$0xf]
          %v604 = vld [vmem:[%s506 + $0x20] sm:$0xf]
          %v605 = vld [vmem:[%s506 + $0x24] sm:$0xf]
          %v606 = vld [vmem:[%s506 + $0x28] sm:$0xf]
          %v607 = vld [vmem:[%s506 + $0x2c] sm:$0xf]
          %v608 = vld [vmem:[%s506 + $0x30] sm:$0xf]
          %v609 = vld [vmem:[%s506 + $0x34] sm:$0xf]
          %v610 = vld [vmem:[%s506 + $0x38] sm:$0xf]
          %v611 = vld [vmem:[%s506 + $0x3c] sm:$0xf]
          %s612 = scalar_lea.vmem [#allocation15], 128
          %v613 = vld [vmem:[%s612] sm:$0xff]
          %v614 = vld [vmem:[%s612 + $0x8] sm:$0xff]
          %v615 = vld [vmem:[%s612 + $0x10] sm:$0xff]
          %v616 = vld [vmem:[%s612 + $0x18] sm:$0xff]
          %v617 = vld [vmem:[%s612 + $0x20] sm:$0xff]
          %v618 = vld [vmem:[%s612 + $0x28] sm:$0xff]
          %v619 = vld [vmem:[%s612 + $0x30] sm:$0xff]
          %v620 = vld [vmem:[%s612 + $0x38] sm:$0xff]
          %v621 = vld [vmem:[%s612 + $0x40] sm:$0xff]
          %v622 = vld [vmem:[%s612 + $0x48] sm:$0xff]
          %v623 = vld [vmem:[%s612 + $0x50] sm:$0xff]
          %v624 = vld [vmem:[%s612 + $0x58] sm:$0xff]
          %v625 = vld [vmem:[%s612 + $0x60] sm:$0xff]
          %v626 = vld [vmem:[%s612 + $0x68] sm:$0xff]
          %v627 = vld [vmem:[%s612 + $0x70] sm:$0xff]
          %v628 = vld [vmem:[%s612 + $0x78] sm:$0xff]
          %s629 = scalar_lea.vmem %s8, 1
          %v630 = vld [vmem:[%s629] ss:$4 sm:$0x3]
          %v632 = vlaneseq
          %v633 = vshrl.u32 %v632, 7
          %v634 = vsub.s32 0, %v633
          %v635 = vrot.slane %v630, %v634
          %v636 = vlaneseq
          %v637 = vshrl.u32 %v636, 7
          %v638 = vsub.s32 1, %v637
          %v639 = vrot.slane %v630, %v638
          %v658 = vunpack.c.l.b16 %v596
          %v659 = vunpack.c.l.b16 %v597
          %v660 = vunpack.c.l.b16 %v598
          %v661 = vunpack.c.l.b16 %v599
          %v662 = vunpack.c.l.b16 %v600
          %v663 = vunpack.c.l.b16 %v601
          %v664 = vunpack.c.l.b16 %v602
          %v665 = vunpack.c.l.b16 %v603
          %v666 = vunpack.c.l.b16 %v604
          %v667 = vunpack.c.l.b16 %v605
          %v668 = vunpack.c.l.b16 %v606
          %v669 = vunpack.c.l.b16 %v607
          %v670 = vunpack.c.l.b16 %v608
          %v671 = vunpack.c.l.b16 %v609
          %v672 = vunpack.c.l.b16 %v610
          %v673 = vunpack.c.l.b16 %v611
          %v674 = vpack.c.b16 %v659, %v658
          %v675 = vpack.c.b16 %v661, %v660
          %v676 = vpack.c.b16 %v663, %v662
          %v677 = vpack.c.b16 %v665, %v664
          %v678 = vpack.c.b16 %v667, %v666
          %v679 = vpack.c.b16 %v669, %v668
          %v680 = vpack.c.b16 %v671, %v670
          %v681 = vpack.c.b16 %v673, %v672
          %v706 = vunpack.c.l.b16 %v613
          %v707 = vunpack.c.h.b16 %v613
          %v708 = vunpack.c.l.b16 %v614
          %v709 = vunpack.c.h.b16 %v614
          %v710 = vunpack.c.l.b16 %v615
          %v711 = vunpack.c.h.b16 %v615
          %v712 = vunpack.c.l.b16 %v616
          %v713 = vunpack.c.h.b16 %v616
          %v714 = vunpack.c.l.b16 %v617
          %v715 = vunpack.c.h.b16 %v617
          %v716 = vunpack.c.l.b16 %v618
          %v717 = vunpack.c.h.b16 %v618
          %v718 = vunpack.c.l.b16 %v619
          %v719 = vunpack.c.h.b16 %v619
          %v720 = vunpack.c.l.b16 %v620
          %v721 = vunpack.c.h.b16 %v620
          %v722 = vunpack.c.l.b16 %v621
          %v723 = vunpack.c.h.b16 %v621
          %v724 = vunpack.c.l.b16 %v622
          %v725 = vunpack.c.h.b16 %v622
          %v726 = vunpack.c.l.b16 %v623
          %v727 = vunpack.c.h.b16 %v623
          %v728 = vunpack.c.l.b16 %v624
          %v729 = vunpack.c.h.b16 %v624
          %v730 = vunpack.c.l.b16 %v625
          %v731 = vunpack.c.h.b16 %v625
          %v732 = vunpack.c.l.b16 %v626
          %v733 = vunpack.c.h.b16 %v626
          %v734 = vunpack.c.l.b16 %v627
          %v735 = vunpack.c.h.b16 %v627
          %v736 = vunpack.c.l.b16 %v628
          %v737 = vunpack.c.h.b16 %v628
          %v738 = vpack.c.b16 %v708, %v706
          %v739 = vpack.c.b16 %v709, %v707
          %v740 = vpack.c.b16 %v712, %v710
          %v741 = vpack.c.b16 %v713, %v711
          %v742 = vpack.c.b16 %v716, %v714
          %v743 = vpack.c.b16 %v717, %v715
          %v744 = vpack.c.b16 %v720, %v718
          %v745 = vpack.c.b16 %v721, %v719
          %v746 = vpack.c.b16 %v724, %v722
          %v747 = vpack.c.b16 %v725, %v723
          %v748 = vpack.c.b16 %v728, %v726
          %v749 = vpack.c.b16 %v729, %v727
          %v750 = vpack.c.b16 %v732, %v730
          %v751 = vpack.c.b16 %v733, %v731
          %v752 = vpack.c.b16 %v736, %v734
          %v753 = vpack.c.b16 %v737, %v735
          %770 = vmatprep.subr.bf16.mxu0 %v753
          %771 = vmatpush1.bf16.msra.mxu0 %v752
          %772 = vmatprep.subr.bf16.mxu0 %v751
          %773 = vmatpush1.bf16.msra.mxu0 %v750
          %774 = vmatprep.subr.bf16.mxu0 %v749
          %775 = vmatpush1.bf16.msra.mxu0 %v748
          %776 = vmatprep.subr.bf16.mxu0 %v747
          %777 = vmatpush1.bf16.msra.mxu0 %v746
          %778 = vmatprep.subr.bf16.mxu0 %v745
          %779 = vmatpush1.bf16.msra.mxu0 %v744
          %780 = vmatprep.subr.bf16.mxu0 %v743
          %781 = vmatpush1.bf16.msra.mxu0 %v742
          %782 = vmatprep.subr.bf16.mxu0 %v741
          %783 = vmatpush1.bf16.msra.mxu0 %v740
          %784 = vmatprep.subr.bf16.mxu0 %v739
          %785 = vmatpush1.bf16.msra.mxu0 %v738
          %786 = vmatprep.subr.bf16.mxu0 0
          %787 = vmatpush2.bf16.msra.mxu0 0
          %788 = vmatprep.subr.bf16.mxu0 0
          %789 = vmatpush2.bf16.msra.mxu0 0
          %790 = vmatprep.subr.bf16.mxu0 0
          %791 = vmatpush2.bf16.msra.mxu0 0
          %792 = vmatprep.subr.bf16.mxu0 0
          %793 = vmatpush2.bf16.msra.mxu0 0
          %794 = vmatprep.subr.bf16.mxu0 0
          %795 = vmatpush2.bf16.msra.mxu0 0
          %796 = vmatprep.subr.bf16.mxu0 0
          %797 = vmatpush2.bf16.msra.mxu0 0
          %798 = vmatprep.subr.bf16.mxu0 0
          %799 = vmatpush2.bf16.msra.mxu0 0
          %800 = vmatprep.subr.bf16.mxu0 0
          %801 = vmatpush2.bf16.msra.mxu0 0
          %802 = vmatprep.mubr.bf16.mxu0 0
          %803 = vmatmul.mubr.bf16.gmra.mxu0 %v674
          %v804 = vpop.f32.mrf.mxu0
          %v805 = vadd.f32 %v635, %v804
          %v806 = vpop.f32.mrf.mxu0
          %v807 = vadd.f32 %v639, %v806
          %v808 = vpop.f32.mrf.mxu0
          %v809 = vadd.f32 %v635, %v808
          %v810 = vpop.f32.mrf.mxu0
          %v811 = vadd.f32 %v639, %v810
          %812 = vmatprep.mubr.bf16.mxu0 0
          %813 = vmatmul.mubr.bf16.gmra.mxu0 %v675
          %v814 = vpop.f32.mrf.mxu0
          %v815 = vadd.f32 %v635, %v814
          %v816 = vpop.f32.mrf.mxu0
          %v817 = vadd.f32 %v639, %v816
          %v818 = vpop.f32.mrf.mxu0
          %v819 = vadd.f32 %v635, %v818
          %v820 = vpop.f32.mrf.mxu0
          %v821 = vadd.f32 %v639, %v820
          %822 = vmatprep.mubr.bf16.mxu0 0
          %823 = vmatmul.mubr.bf16.gmra.mxu0 %v676
          %v824 = vpop.f32.mrf.mxu0
          %v825 = vadd.f32 %v635, %v824
          %v826 = vpop.f32.mrf.mxu0
          %v827 = vadd.f32 %v639, %v826
          %v828 = vpop.f32.mrf.mxu0
          %v829 = vadd.f32 %v635, %v828
          %v830 = vpop.f32.mrf.mxu0
          %v831 = vadd.f32 %v639, %v830
          %832 = vmatprep.mubr.bf16.mxu0 0
          %833 = vmatmul.mubr.bf16.gmra.mxu0 %v677
          %v834 = vpop.f32.mrf.mxu0
          %v835 = vadd.f32 %v635, %v834
          %v836 = vpop.f32.mrf.mxu0
          %v837 = vadd.f32 %v639, %v836
          %v838 = vpop.f32.mrf.mxu0
          %v839 = vadd.f32 %v635, %v838
          %v840 = vpop.f32.mrf.mxu0
          %v841 = vadd.f32 %v639, %v840
          %842 = vmatprep.mubr.bf16.mxu0 0
          %843 = vmatmul.mubr.bf16.gmra.mxu0 %v678
          %v844 = vpop.f32.mrf.mxu0
          %v845 = vadd.f32 %v635, %v844
          %v846 = vpop.f32.mrf.mxu0
          %v847 = vadd.f32 %v639, %v846
          %v848 = vpop.f32.mrf.mxu0
          %v849 = vadd.f32 %v635, %v848
          %v850 = vpop.f32.mrf.mxu0
          %v851 = vadd.f32 %v639, %v850
          %852 = vmatprep.mubr.bf16.mxu0 0
          %853 = vmatmul.mubr.bf16.gmra.mxu0 %v679
          %v854 = vpop.f32.mrf.mxu0
          %v855 = vadd.f32 %v635, %v854
          %v856 = vpop.f32.mrf.mxu0
          %v857 = vadd.f32 %v639, %v856
          %v858 = vpop.f32.mrf.mxu0
          %v859 = vadd.f32 %v635, %v858
          %v860 = vpop.f32.mrf.mxu0
          %v861 = vadd.f32 %v639, %v860
          %862 = vmatprep.mubr.bf16.mxu0 0
          %863 = vmatmul.mubr.bf16.gmra.mxu0 %v680
          %v864 = vpop.f32.mrf.mxu0
          %v865 = vadd.f32 %v635, %v864
          %v866 = vpop.f32.mrf.mxu0
          %v867 = vadd.f32 %v639, %v866
          %v868 = vpop.f32.mrf.mxu0
          %v869 = vadd.f32 %v635, %v868
          %v870 = vpop.f32.mrf.mxu0
          %v871 = vadd.f32 %v639, %v870
          %872 = vmatprep.mubr.bf16.mxu0 0
          %873 = vmatmul.mubr.bf16.gmra.mxu0 %v681
          %v874 = vpop.f32.mrf.mxu0
          %v875 = vadd.f32 %v635, %v874
          %v876 = vpop.f32.mrf.mxu0
          %v877 = vadd.f32 %v639, %v876
          %v878 = vpop.f32.mrf.mxu0
          %v879 = vadd.f32 %v635, %v878
          %v880 = vpop.f32.mrf.mxu0
          %v881 = vadd.f32 %v639, %v880
          %882 = vdwg.mxu0
          %v883 = vld [vmem:[%s497] sm:$0xf]
          %v884 = vld [vmem:[%s497 + $0x4] sm:$0xf]
          %v885 = vld [vmem:[%s497 + $0x8] sm:$0xf]
          %v886 = vld [vmem:[%s497 + $0xc] sm:$0xf]
          %v887 = vld [vmem:[%s497 + $0x10] sm:$0xf]
          %v888 = vld [vmem:[%s497 + $0x14] sm:$0xf]
          %v889 = vld [vmem:[%s497 + $0x18] sm:$0xf]
          %v890 = vld [vmem:[%s497 + $0x1c] sm:$0xf]
          %v891 = vld [vmem:[%s497 + $0x20] sm:$0xf]
          %v892 = vld [vmem:[%s497 + $0x24] sm:$0xf]
          %v893 = vld [vmem:[%s497 + $0x28] sm:$0xf]
          %v894 = vld [vmem:[%s497 + $0x2c] sm:$0xf]
          %v895 = vld [vmem:[%s497 + $0x30] sm:$0xf]
          %v896 = vld [vmem:[%s497 + $0x34] sm:$0xf]
          %v897 = vld [vmem:[%s497 + $0x38] sm:$0xf]
          %v898 = vld [vmem:[%s497 + $0x3c] sm:$0xf]
          %s899 = scalar_lea.vmem [#allocation15], 384
          %v900 = vld [vmem:[%s899] sm:$0xff]
          %v901 = vld [vmem:[%s899 + $0x8] sm:$0xff]
          %v902 = vld [vmem:[%s899 + $0x10] sm:$0xff]
          %v903 = vld [vmem:[%s899 + $0x18] sm:$0xff]
          %v904 = vld [vmem:[%s899 + $0x20] sm:$0xff]
          %v905 = vld [vmem:[%s899 + $0x28] sm:$0xff]
          %v906 = vld [vmem:[%s899 + $0x30] sm:$0xff]
          %v907 = vld [vmem:[%s899 + $0x38] sm:$0xff]
          %v908 = vld [vmem:[%s899 + $0x40] sm:$0xff]
          %v909 = vld [vmem:[%s899 + $0x48] sm:$0xff]
          %v910 = vld [vmem:[%s899 + $0x50] sm:$0xff]
          %v911 = vld [vmem:[%s899 + $0x58] sm:$0xff]
          %v912 = vld [vmem:[%s899 + $0x60] sm:$0xff]
          %v913 = vld [vmem:[%s899 + $0x68] sm:$0xff]
          %v914 = vld [vmem:[%s899 + $0x70] sm:$0xff]
          %v915 = vld [vmem:[%s899 + $0x78] sm:$0xff]
          %s916 = scalar_lea.vmem %s8, 3
          %v917 = vld [vmem:[%s916] ss:$4 sm:$0x3]
          %v919 = vlaneseq
          %v920 = vshrl.u32 %v919, 7
          %v921 = vsub.s32 0, %v920
          %v922 = vrot.slane %v917, %v921
          %v923 = vlaneseq
          %v924 = vshrl.u32 %v923, 7
          %v925 = vsub.s32 1, %v924
          %v926 = vrot.slane %v917, %v925
          %v945 = vunpack.c.l.b16 %v883
          %v946 = vunpack.c.l.b16 %v884
          %v947 = vunpack.c.l.b16 %v885
          %v948 = vunpack.c.l.b16 %v886
          %v949 = vunpack.c.l.b16 %v887
          %v950 = vunpack.c.l.b16 %v888
          %v951 = vunpack.c.l.b16 %v889
          %v952 = vunpack.c.l.b16 %v890
          %v953 = vunpack.c.l.b16 %v891
          %v954 = vunpack.c.l.b16 %v892
          %v955 = vunpack.c.l.b16 %v893
          %v956 = vunpack.c.l.b16 %v894
          %v957 = vunpack.c.l.b16 %v895
          %v958 = vunpack.c.l.b16 %v896
          %v959 = vunpack.c.l.b16 %v897
          %v960 = vunpack.c.l.b16 %v898
          %v961 = vpack.c.b16 %v946, %v945
          %v962 = vpack.c.b16 %v948, %v947
          %v963 = vpack.c.b16 %v950, %v949
          %v964 = vpack.c.b16 %v952, %v951
          %v965 = vpack.c.b16 %v954, %v953
          %v966 = vpack.c.b16 %v956, %v955
          %v967 = vpack.c.b16 %v958, %v957
          %v968 = vpack.c.b16 %v960, %v959
          %v993 = vunpack.c.l.b16 %v900
          %v994 = vunpack.c.h.b16 %v900
          %v995 = vunpack.c.l.b16 %v901
          %v996 = vunpack.c.h.b16 %v901
          %v997 = vunpack.c.l.b16 %v902
          %v998 = vunpack.c.h.b16 %v902
          %v999 = vunpack.c.l.b16 %v903
          %v1000 = vunpack.c.h.b16 %v903
          %v1001 = vunpack.c.l.b16 %v904
          %v1002 = vunpack.c.h.b16 %v904
          %v1003 = vunpack.c.l.b16 %v905
          %v1004 = vunpack.c.h.b16 %v905
          %v1005 = vunpack.c.l.b16 %v906
          %v1006 = vunpack.c.h.b16 %v906
          %v1007 = vunpack.c.l.b16 %v907
          %v1008 = vunpack.c.h.b16 %v907
          %v1009 = vunpack.c.l.b16 %v908
          %v1010 = vunpack.c.h.b16 %v908
          %v1011 = vunpack.c.l.b16 %v909
          %v1012 = vunpack.c.h.b16 %v909
          %v1013 = vunpack.c.l.b16 %v910
          %v1014 = vunpack.c.h.b16 %v910
          %v1015 = vunpack.c.l.b16 %v911
          %v1016 = vunpack.c.h.b16 %v911
          %v1017 = vunpack.c.l.b16 %v912
          %v1018 = vunpack.c.h.b16 %v912
          %v1019 = vunpack.c.l.b16 %v913
          %v1020 = vunpack.c.h.b16 %v913
          %v1021 = vunpack.c.l.b16 %v914
          %v1022 = vunpack.c.h.b16 %v914
          %v1023 = vunpack.c.l.b16 %v915
          %v1024 = vunpack.c.h.b16 %v915
          %v1025 = vpack.c.b16 %v995, %v993
          %v1026 = vpack.c.b16 %v996, %v994
          %v1027 = vpack.c.b16 %v999, %v997
          %v1028 = vpack.c.b16 %v1000, %v998
          %v1029 = vpack.c.b16 %v1003, %v1001
          %v1030 = vpack.c.b16 %v1004, %v1002
          %v1031 = vpack.c.b16 %v1007, %v1005
          %v1032 = vpack.c.b16 %v1008, %v1006
          %v1033 = vpack.c.b16 %v1011, %v1009
          %v1034 = vpack.c.b16 %v1012, %v1010
          %v1035 = vpack.c.b16 %v1015, %v1013
          %v1036 = vpack.c.b16 %v1016, %v1014
          %v1037 = vpack.c.b16 %v1019, %v1017
          %v1038 = vpack.c.b16 %v1020, %v1018
          %v1039 = vpack.c.b16 %v1023, %v1021
          %v1040 = vpack.c.b16 %v1024, %v1022
          %1057 = vmatprep.subr.bf16.mxu0 %v1040
          %1058 = vmatpush1.bf16.msra.mxu0 %v1039
          %1059 = vmatprep.subr.bf16.mxu0 %v1038
          %1060 = vmatpush1.bf16.msra.mxu0 %v1037
          %1061 = vmatprep.subr.bf16.mxu0 %v1036
          %1062 = vmatpush1.bf16.msra.mxu0 %v1035
          %1063 = vmatprep.subr.bf16.mxu0 %v1034
          %1064 = vmatpush1.bf16.msra.mxu0 %v1033
          %1065 = vmatprep.subr.bf16.mxu0 %v1032
          %1066 = vmatpush1.bf16.msra.mxu0 %v1031
          %1067 = vmatprep.subr.bf16.mxu0 %v1030
          %1068 = vmatpush1.bf16.msra.mxu0 %v1029
          %1069 = vmatprep.subr.bf16.mxu0 %v1028
          %1070 = vmatpush1.bf16.msra.mxu0 %v1027
          %1071 = vmatprep.subr.bf16.mxu0 %v1026
          %1072 = vmatpush1.bf16.msra.mxu0 %v1025
          %1073 = vmatprep.subr.bf16.mxu0 0
          %1074 = vmatpush2.bf16.msra.mxu0 0
          %1075 = vmatprep.subr.bf16.mxu0 0
          %1076 = vmatpush2.bf16.msra.mxu0 0
          %1077 = vmatprep.subr.bf16.mxu0 0
          %1078 = vmatpush2.bf16.msra.mxu0 0
          %1079 = vmatprep.subr.bf16.mxu0 0
          %1080 = vmatpush2.bf16.msra.mxu0 0
          %1081 = vmatprep.subr.bf16.mxu0 0
          %1082 = vmatpush2.bf16.msra.mxu0 0
          %1083 = vmatprep.subr.bf16.mxu0 0
          %1084 = vmatpush2.bf16.msra.mxu0 0
          %1085 = vmatprep.subr.bf16.mxu0 0
          %1086 = vmatpush2.bf16.msra.mxu0 0
          %1087 = vmatprep.subr.bf16.mxu0 0
          %1088 = vmatpush2.bf16.msra.mxu0 0
          %1089 = vmatprep.mubr.bf16.mxu0 0
          %1090 = vmatmul.mubr.bf16.gmra.mxu0 %v961
          %v1091 = vpop.f32.mrf.mxu0
          %v1092 = vadd.f32 %v922, %v1091
          %v1093 = vpop.f32.mrf.mxu0
          %v1094 = vadd.f32 %v926, %v1093
          %v1095 = vpop.f32.mrf.mxu0
          %v1096 = vadd.f32 %v922, %v1095
          %v1097 = vpop.f32.mrf.mxu0
          %v1098 = vadd.f32 %v926, %v1097
          %1099 = vmatprep.mubr.bf16.mxu0 0
          %1100 = vmatmul.mubr.bf16.gmra.mxu0 %v962
          %v1101 = vpop.f32.mrf.mxu0
          %v1102 = vadd.f32 %v922, %v1101
          %v1103 = vpop.f32.mrf.mxu0
          %v1104 = vadd.f32 %v926, %v1103
          %v1105 = vpop.f32.mrf.mxu0
          %v1106 = vadd.f32 %v922, %v1105
          %v1107 = vpop.f32.mrf.mxu0
          %v1108 = vadd.f32 %v926, %v1107
          %1109 = vmatprep.mubr.bf16.mxu0 0
          %1110 = vmatmul.mubr.bf16.gmra.mxu0 %v963
          %v1111 = vpop.f32.mrf.mxu0
          %v1112 = vadd.f32 %v922, %v1111
          %v1113 = vpop.f32.mrf.mxu0
          %v1114 = vadd.f32 %v926, %v1113
          %v1115 = vpop.f32.mrf.mxu0
          %v1116 = vadd.f32 %v922, %v1115
          %v1117 = vpop.f32.mrf.mxu0
          %v1118 = vadd.f32 %v926, %v1117
          %1119 = vmatprep.mubr.bf16.mxu0 0
          %1120 = vmatmul.mubr.bf16.gmra.mxu0 %v964
          %v1121 = vpop.f32.mrf.mxu0
          %v1122 = vadd.f32 %v922, %v1121
          %v1123 = vpop.f32.mrf.mxu0
          %v1124 = vadd.f32 %v926, %v1123
          %v1125 = vpop.f32.mrf.mxu0
          %v1126 = vadd.f32 %v922, %v1125
          %v1127 = vpop.f32.mrf.mxu0
          %v1128 = vadd.f32 %v926, %v1127
          %1129 = vmatprep.mubr.bf16.mxu0 0
          %1130 = vmatmul.mubr.bf16.gmra.mxu0 %v965
          %v1131 = vpop.f32.mrf.mxu0
          %v1132 = vadd.f32 %v922, %v1131
          %v1133 = vpop.f32.mrf.mxu0
          %v1134 = vadd.f32 %v926, %v1133
          %v1135 = vpop.f32.mrf.mxu0
          %v1136 = vadd.f32 %v922, %v1135
          %v1137 = vpop.f32.mrf.mxu0
          %v1138 = vadd.f32 %v926, %v1137
          %1139 = vmatprep.mubr.bf16.mxu0 0
          %1140 = vmatmul.mubr.bf16.gmra.mxu0 %v966
          %v1141 = vpop.f32.mrf.mxu0
          %v1142 = vadd.f32 %v922, %v1141
          %v1143 = vpop.f32.mrf.mxu0
          %v1144 = vadd.f32 %v926, %v1143
          %v1145 = vpop.f32.mrf.mxu0
          %v1146 = vadd.f32 %v922, %v1145
          %v1147 = vpop.f32.mrf.mxu0
          %v1148 = vadd.f32 %v926, %v1147
          %1149 = vmatprep.mubr.bf16.mxu0 0
          %1150 = vmatmul.mubr.bf16.gmra.mxu0 %v967
          %v1151 = vpop.f32.mrf.mxu0
          %v1152 = vadd.f32 %v922, %v1151
          %v1153 = vpop.f32.mrf.mxu0
          %v1154 = vadd.f32 %v926, %v1153
          %v1155 = vpop.f32.mrf.mxu0
          %v1156 = vadd.f32 %v922, %v1155
          %v1157 = vpop.f32.mrf.mxu0
          %v1158 = vadd.f32 %v926, %v1157
          %1159 = vmatprep.mubr.bf16.mxu0 0
          %1160 = vmatmul.mubr.bf16.gmra.mxu0 %v968
          %v1161 = vpop.f32.mrf.mxu0
          %v1162 = vadd.f32 %v922, %v1161
          %v1163 = vpop.f32.mrf.mxu0
          %v1164 = vadd.f32 %v926, %v1163
          %v1165 = vpop.f32.mrf.mxu0
          %v1166 = vadd.f32 %v922, %v1165
          %v1167 = vpop.f32.mrf.mxu0
          %v1168 = vadd.f32 %v926, %v1167
          %1169 = vdwg.mxu0
          %v1170 = vpack.c.bf16 %v809, %v805
          %v1171 = vpack.c.bf16 %v811, %v807
          %v1172 = vpack.c.bf16 %v819, %v815
          %v1173 = vpack.c.bf16 %v821, %v817
          %v1174 = vpack.c.bf16 %v829, %v825
          %v1175 = vpack.c.bf16 %v831, %v827
          %v1176 = vpack.c.bf16 %v839, %v835
          %v1177 = vpack.c.bf16 %v841, %v837
          %v1178 = vpack.c.bf16 %v849, %v845
          %v1179 = vpack.c.bf16 %v851, %v847
          %v1180 = vpack.c.bf16 %v859, %v855
          %v1181 = vpack.c.bf16 %v861, %v857
          %v1182 = vpack.c.bf16 %v869, %v865
          %v1183 = vpack.c.bf16 %v871, %v867
          %v1184 = vpack.c.bf16 %v879, %v875
          %v1185 = vpack.c.bf16 %v881, %v877
          %v1202 = vunpack.c.l.b16 %v1170
          %v1203 = vunpack.c.l.b16 %v1171
          %v1204 = vunpack.c.h.b16 %v1170
          %v1205 = vunpack.c.h.b16 %v1171
          %v1206 = vunpack.c.l.b16 %v1172
          %v1207 = vunpack.c.l.b16 %v1173
          %v1208 = vunpack.c.h.b16 %v1172
          %v1209 = vunpack.c.h.b16 %v1173
          %v1210 = vunpack.c.l.b16 %v1174
          %v1211 = vunpack.c.l.b16 %v1175
          %v1212 = vunpack.c.h.b16 %v1174
          %v1213 = vunpack.c.h.b16 %v1175
          %v1214 = vunpack.c.l.b16 %v1176
          %v1215 = vunpack.c.l.b16 %v1177
          %v1216 = vunpack.c.h.b16 %v1176
          %v1217 = vunpack.c.h.b16 %v1177
          %v1218 = vunpack.c.l.b16 %v1178
          %v1219 = vunpack.c.l.b16 %v1179
          %v1220 = vunpack.c.h.b16 %v1178
          %v1221 = vunpack.c.h.b16 %v1179
          %v1222 = vunpack.c.l.b16 %v1180
          %v1223 = vunpack.c.l.b16 %v1181
          %v1224 = vunpack.c.h.b16 %v1180
          %v1225 = vunpack.c.h.b16 %v1181
          %v1226 = vunpack.c.l.b16 %v1182
          %v1227 = vunpack.c.l.b16 %v1183
          %v1228 = vunpack.c.h.b16 %v1182
          %v1229 = vunpack.c.h.b16 %v1183
          %v1230 = vunpack.c.l.b16 %v1184
          %v1231 = vunpack.c.l.b16 %v1185
          %v1232 = vunpack.c.h.b16 %v1184
          %v1233 = vunpack.c.h.b16 %v1185
          %v1234 = vpack.c.b16 %v1203, %v1202
          %v1235 = vpack.c.b16 %v1205, %v1204
          %v1236 = vpack.c.b16 %v1207, %v1206
          %v1237 = vpack.c.b16 %v1209, %v1208
          %v1238 = vpack.c.b16 %v1211, %v1210
          %v1239 = vpack.c.b16 %v1213, %v1212
          %v1240 = vpack.c.b16 %v1215, %v1214
          %v1241 = vpack.c.b16 %v1217, %v1216
          %v1242 = vpack.c.b16 %v1219, %v1218
          %v1243 = vpack.c.b16 %v1221, %v1220
          %v1244 = vpack.c.b16 %v1223, %v1222
          %v1245 = vpack.c.b16 %v1225, %v1224
          %v1246 = vpack.c.b16 %v1227, %v1226
          %v1247 = vpack.c.b16 %v1229, %v1228
          %v1248 = vpack.c.b16 %v1231, %v1230
          %v1249 = vpack.c.b16 %v1233, %v1232
          %1266 = vst [vmem:[#allocation2] sm:$0xff] %v1234
          %1267 = vst [vmem:[#allocation2 + $0x8] sm:$0xff] %v1235
          %1268 = vst [vmem:[#allocation2 + $0x10] sm:$0xff] %v1236
          %1269 = vst [vmem:[#allocation2 + $0x18] sm:$0xff] %v1237
          %1270 = vst [vmem:[#allocation2 + $0x20] sm:$0xff] %v1238
          %1271 = vst [vmem:[#allocation2 + $0x28] sm:$0xff] %v1239
          %1272 = vst [vmem:[#allocation2 + $0x30] sm:$0xff] %v1240
          %1273 = vst [vmem:[#allocation2 + $0x38] sm:$0xff] %v1241
          %1274 = vst [vmem:[#allocation2 + $0x40] sm:$0xff] %v1242
          %1275 = vst [vmem:[#allocation2 + $0x48] sm:$0xff] %v1243
          %1276 = vst [vmem:[#allocation2 + $0x50] sm:$0xff] %v1244
          %1277 = vst [vmem:[#allocation2 + $0x58] sm:$0xff] %v1245
          %1278 = vst [vmem:[#allocation2 + $0x60] sm:$0xff] %v1246
          %1279 = vst [vmem:[#allocation2 + $0x68] sm:$0xff] %v1247
          %1280 = vst [vmem:[#allocation2 + $0x70] sm:$0xff] %v1248
          %1281 = vst [vmem:[#allocation2 + $0x78] sm:$0xff] %v1249
          %v1282 = vpack.c.bf16 %v1096, %v1092
          %v1283 = vpack.c.bf16 %v1098, %v1094
          %v1284 = vpack.c.bf16 %v1106, %v1102
          %v1285 = vpack.c.bf16 %v1108, %v1104
          %v1286 = vpack.c.bf16 %v1116, %v1112
          %v1287 = vpack.c.bf16 %v1118, %v1114
          %v1288 = vpack.c.bf16 %v1126, %v1122
          %v1289 = vpack.c.bf16 %v1128, %v1124
          %v1290 = vpack.c.bf16 %v1136, %v1132
          %v1291 = vpack.c.bf16 %v1138, %v1134
          %v1292 = vpack.c.bf16 %v1146, %v1142
          %v1293 = vpack.c.bf16 %v1148, %v1144
          %v1294 = vpack.c.bf16 %v1156, %v1152
          %v1295 = vpack.c.bf16 %v1158, %v1154
          %v1296 = vpack.c.bf16 %v1166, %v1162
          %v1297 = vpack.c.bf16 %v1168, %v1164
          %v1314 = vunpack.c.l.b16 %v1282
          %v1315 = vunpack.c.l.b16 %v1283
          %v1316 = vunpack.c.h.b16 %v1282
          %v1317 = vunpack.c.h.b16 %v1283
          %v1318 = vunpack.c.l.b16 %v1284
          %v1319 = vunpack.c.l.b16 %v1285
          %v1320 = vunpack.c.h.b16 %v1284
          %v1321 = vunpack.c.h.b16 %v1285
          %v1322 = vunpack.c.l.b16 %v1286
          %v1323 = vunpack.c.l.b16 %v1287
          %v1324 = vunpack.c.h.b16 %v1286
          %v1325 = vunpack.c.h.b16 %v1287
          %v1326 = vunpack.c.l.b16 %v1288
          %v1327 = vunpack.c.l.b16 %v1289
          %v1328 = vunpack.c.h.b16 %v1288
          %v1329 = vunpack.c.h.b16 %v1289
          %v1330 = vunpack.c.l.b16 %v1290
          %v1331 = vunpack.c.l.b16 %v1291
          %v1332 = vunpack.c.h.b16 %v1290
          %v1333 = vunpack.c.h.b16 %v1291
          %v1334 = vunpack.c.l.b16 %v1292
          %v1335 = vunpack.c.l.b16 %v1293
          %v1336 = vunpack.c.h.b16 %v1292
          %v1337 = vunpack.c.h.b16 %v1293
          %v1338 = vunpack.c.l.b16 %v1294
          %v1339 = vunpack.c.l.b16 %v1295
          %v1340 = vunpack.c.h.b16 %v1294
          %v1341 = vunpack.c.h.b16 %v1295
          %v1342 = vunpack.c.l.b16 %v1296
          %v1343 = vunpack.c.l.b16 %v1297
          %v1344 = vunpack.c.h.b16 %v1296
          %v1345 = vunpack.c.h.b16 %v1297
          %v1346 = vpack.c.b16 %v1315, %v1314
          %v1347 = vpack.c.b16 %v1317, %v1316
          %v1348 = vpack.c.b16 %v1319, %v1318
          %v1349 = vpack.c.b16 %v1321, %v1320
          %v1350 = vpack.c.b16 %v1323, %v1322
          %v1351 = vpack.c.b16 %v1325, %v1324
          %v1352 = vpack.c.b16 %v1327, %v1326
          %v1353 = vpack.c.b16 %v1329, %v1328
          %v1354 = vpack.c.b16 %v1331, %v1330
          %v1355 = vpack.c.b16 %v1333, %v1332
          %v1356 = vpack.c.b16 %v1335, %v1334
          %v1357 = vpack.c.b16 %v1337, %v1336
          %v1358 = vpack.c.b16 %v1339, %v1338
          %v1359 = vpack.c.b16 %v1341, %v1340
          %v1360 = vpack.c.b16 %v1343, %v1342
          %v1361 = vpack.c.b16 %v1345, %v1344
          %1378 = vst [vmem:[#allocation3] sm:$0xff] %v1346
          %1379 = vst [vmem:[#allocation3 + $0x8] sm:$0xff] %v1347
          %1380 = vst [vmem:[#allocation3 + $0x10] sm:$0xff] %v1348
          %1381 = vst [vmem:[#allocation3 + $0x18] sm:$0xff] %v1349
          %1382 = vst [vmem:[#allocation3 + $0x20] sm:$0xff] %v1350
          %1383 = vst [vmem:[#allocation3 + $0x28] sm:$0xff] %v1351
          %1384 = vst [vmem:[#allocation3 + $0x30] sm:$0xff] %v1352
          %1385 = vst [vmem:[#allocation3 + $0x38] sm:$0xff] %v1353
          %1386 = vst [vmem:[#allocation3 + $0x40] sm:$0xff] %v1354
          %1387 = vst [vmem:[#allocation3 + $0x48] sm:$0xff] %v1355
          %1388 = vst [vmem:[#allocation3 + $0x50] sm:$0xff] %v1356
          %1389 = vst [vmem:[#allocation3 + $0x58] sm:$0xff] %v1357
          %1390 = vst [vmem:[#allocation3 + $0x60] sm:$0xff] %v1358
          %1391 = vst [vmem:[#allocation3 + $0x68] sm:$0xff] %v1359
          %1392 = vst [vmem:[#allocation3 + $0x70] sm:$0xff] %v1360
          %1393 = vst [vmem:[#allocation3 + $0x78] sm:$0xff] %v1361
        $region88: #{tpu_custom_call.1} parent=55 // pred_fallthru
          _
        %v1394 = vld [vmem:[%s488] sm:$0xf]
        %v1395 = vld [vmem:[%s488 + $0x4] sm:$0xf]
        %v1396 = vld [vmem:[%s488 + $0x8] sm:$0xf]
        %v1397 = vld [vmem:[%s488 + $0xc] sm:$0xf]
        %v1398 = vld [vmem:[%s488 + $0x10] sm:$0xf]
        %v1399 = vld [vmem:[%s488 + $0x14] sm:$0xf]
        %v1400 = vld [vmem:[%s488 + $0x18] sm:$0xf]
        %v1401 = vld [vmem:[%s488 + $0x1c] sm:$0xf]
        %v1402 = vld [vmem:[%s488 + $0x20] sm:$0xf]
        %v1403 = vld [vmem:[%s488 + $0x24] sm:$0xf]
        %v1404 = vld [vmem:[%s488 + $0x28] sm:$0xf]
        %v1405 = vld [vmem:[%s488 + $0x2c] sm:$0xf]
        %v1406 = vld [vmem:[%s488 + $0x30] sm:$0xf]
        %v1407 = vld [vmem:[%s488 + $0x34] sm:$0xf]
        %v1408 = vld [vmem:[%s488 + $0x38] sm:$0xf]
        %v1409 = vld [vmem:[%s488 + $0x3c] sm:$0xf]
        %v1410 = vld [vmem:[#allocation15] sm:$0xff]
        %v1411 = vld [vmem:[#allocation15 + $0x8] sm:$0xff]
        %v1412 = vld [vmem:[#allocation15 + $0x10] sm:$0xff]
        %v1413 = vld [vmem:[#allocation15 + $0x18] sm:$0xff]
        %v1414 = vld [vmem:[#allocation15 + $0x20] sm:$0xff]
        %v1415 = vld [vmem:[#allocation15 + $0x28] sm:$0xff]
        %v1416 = vld [vmem:[#allocation15 + $0x30] sm:$0xff]
        %v1417 = vld [vmem:[#allocation15 + $0x38] sm:$0xff]
        %v1418 = vld [vmem:[#allocation15 + $0x40] sm:$0xff]
        %v1419 = vld [vmem:[#allocation15 + $0x48] sm:$0xff]
        %v1420 = vld [vmem:[#allocation15 + $0x50] sm:$0xff]
        %v1421 = vld [vmem:[#allocation15 + $0x58] sm:$0xff]
        %v1422 = vld [vmem:[#allocation15 + $0x60] sm:$0xff]
        %v1423 = vld [vmem:[#allocation15 + $0x68] sm:$0xff]
        %v1424 = vld [vmem:[#allocation15 + $0x70] sm:$0xff]
        %v1425 = vld [vmem:[#allocation15 + $0x78] sm:$0xff]
        %v1426 = vld [vmem:[%s8] ss:$4 sm:$0x3]
        %v1428 = vlaneseq
        %v1429 = vshrl.u32 %v1428, 7
        %v1430 = vsub.s32 0, %v1429
        %v1431 = vrot.slane %v1426, %v1430
        %v1432 = vlaneseq
        %v1433 = vshrl.u32 %v1432, 7
        %v1434 = vsub.s32 1, %v1433
        %v1435 = vrot.slane %v1426, %v1434
        %v1454 = vunpack.c.l.b16 %v1394
        %v1455 = vunpack.c.l.b16 %v1395
        %v1456 = vunpack.c.l.b16 %v1396
        %v1457 = vunpack.c.l.b16 %v1397
        %v1458 = vunpack.c.l.b16 %v1398
        %v1459 = vunpack.c.l.b16 %v1399
        %v1460 = vunpack.c.l.b16 %v1400
        %v1461 = vunpack.c.l.b16 %v1401
        %v1462 = vunpack.c.l.b16 %v1402
        %v1463 = vunpack.c.l.b16 %v1403
        %v1464 = vunpack.c.l.b16 %v1404
        %v1465 = vunpack.c.l.b16 %v1405
        %v1466 = vunpack.c.l.b16 %v1406
        %v1467 = vunpack.c.l.b16 %v1407
        %v1468 = vunpack.c.l.b16 %v1408
        %v1469 = vunpack.c.l.b16 %v1409
        %v1470 = vpack.c.b16 %v1455, %v1454
        %v1471 = vpack.c.b16 %v1457, %v1456
        %v1472 = vpack.c.b16 %v1459, %v1458
        %v1473 = vpack.c.b16 %v1461, %v1460
        %v1474 = vpack.c.b16 %v1463, %v1462
        %v1475 = vpack.c.b16 %v1465, %v1464
        %v1476 = vpack.c.b16 %v1467, %v1466
        %v1477 = vpack.c.b16 %v1469, %v1468
        %v1502 = vunpack.c.l.b16 %v1410
        %v1503 = vunpack.c.h.b16 %v1410
        %v1504 = vunpack.c.l.b16 %v1411
        %v1505 = vunpack.c.h.b16 %v1411
        %v1506 = vunpack.c.l.b16 %v1412
        %v1507 = vunpack.c.h.b16 %v1412
        %v1508 = vunpack.c.l.b16 %v1413
        %v1509 = vunpack.c.h.b16 %v1413
        %v1510 = vunpack.c.l.b16 %v1414
        %v1511 = vunpack.c.h.b16 %v1414
        %v1512 = vunpack.c.l.b16 %v1415
        %v1513 = vunpack.c.h.b16 %v1415
        %v1514 = vunpack.c.l.b16 %v1416
        %v1515 = vunpack.c.h.b16 %v1416
        %v1516 = vunpack.c.l.b16 %v1417
        %v1517 = vunpack.c.h.b16 %v1417
        %v1518 = vunpack.c.l.b16 %v1418
        %v1519 = vunpack.c.h.b16 %v1418
        %v1520 = vunpack.c.l.b16 %v1419
        %v1521 = vunpack.c.h.b16 %v1419
        %v1522 = vunpack.c.l.b16 %v1420
        %v1523 = vunpack.c.h.b16 %v1420
        %v1524 = vunpack.c.l.b16 %v1421
        %v1525 = vunpack.c.h.b16 %v1421
        %v1526 = vunpack.c.l.b16 %v1422
        %v1527 = vunpack.c.h.b16 %v1422
        %v1528 = vunpack.c.l.b16 %v1423
        %v1529 = vunpack.c.h.b16 %v1423
        %v1530 = vunpack.c.l.b16 %v1424
        %v1531 = vunpack.c.h.b16 %v1424
        %v1532 = vunpack.c.l.b16 %v1425
        %v1533 = vunpack.c.h.b16 %v1425
        %v1534 = vpack.c.b16 %v1504, %v1502
        %v1535 = vpack.c.b16 %v1505, %v1503
        %v1536 = vpack.c.b16 %v1508, %v1506
        %v1537 = vpack.c.b16 %v1509, %v1507
        %v1538 = vpack.c.b16 %v1512, %v1510
        %v1539 = vpack.c.b16 %v1513, %v1511
        %v1540 = vpack.c.b16 %v1516, %v1514
        %v1541 = vpack.c.b16 %v1517, %v1515
        %v1542 = vpack.c.b16 %v1520, %v1518
        %v1543 = vpack.c.b16 %v1521, %v1519
        %v1544 = vpack.c.b16 %v1524, %v1522
        %v1545 = vpack.c.b16 %v1525, %v1523
        %v1546 = vpack.c.b16 %v1528, %v1526
        %v1547 = vpack.c.b16 %v1529, %v1527
        %v1548 = vpack.c.b16 %v1532, %v1530
        %v1549 = vpack.c.b16 %v1533, %v1531
        %1566 = vmatprep.subr.bf16.mxu0 %v1549
        %1567 = vmatpush1.bf16.msra.mxu0 %v1548
        %1568 = vmatprep.subr.bf16.mxu0 %v1547
        %1569 = vmatpush1.bf16.msra.mxu0 %v1546
        %1570 = vmatprep.subr.bf16.mxu0 %v1545
        %1571 = vmatpush1.bf16.msra.mxu0 %v1544
        %1572 = vmatprep.subr.bf16.mxu0 %v1543
        %1573 = vmatpush1.bf16.msra.mxu0 %v1542
        %1574 = vmatprep.subr.bf16.mxu0 %v1541
        %1575 = vmatpush1.bf16.msra.mxu0 %v1540
        %1576 = vmatprep.subr.bf16.mxu0 %v1539
        %1577 = vmatpush1.bf16.msra.mxu0 %v1538
        %1578 = vmatprep.subr.bf16.mxu0 %v1537
        %1579 = vmatpush1.bf16.msra.mxu0 %v1536
        %1580 = vmatprep.subr.bf16.mxu0 %v1535
        %1581 = vmatpush1.bf16.msra.mxu0 %v1534
        %1582 = vmatprep.subr.bf16.mxu0 0
        %1583 = vmatpush2.bf16.msra.mxu0 0
        %1584 = vmatprep.subr.bf16.mxu0 0
        %1585 = vmatpush2.bf16.msra.mxu0 0
        %1586 = vmatprep.subr.bf16.mxu0 0
        %1587 = vmatpush2.bf16.msra.mxu0 0
        %1588 = vmatprep.subr.bf16.mxu0 0
        %1589 = vmatpush2.bf16.msra.mxu0 0
        %1590 = vmatprep.subr.bf16.mxu0 0
        %1591 = vmatpush2.bf16.msra.mxu0 0
        %1592 = vmatprep.subr.bf16.mxu0 0
        %1593 = vmatpush2.bf16.msra.mxu0 0
        %1594 = vmatprep.subr.bf16.mxu0 0
        %1595 = vmatpush2.bf16.msra.mxu0 0
        %1596 = vmatprep.subr.bf16.mxu0 0
        %1597 = vmatpush2.bf16.msra.mxu0 0
        %1598 = vmatprep.mubr.bf16.mxu0 0
        %1599 = vmatmul.mubr.bf16.gmra.mxu0 %v1470
        %v1600 = vpop.f32.mrf.mxu0
        %v1601 = vadd.f32 %v1431, %v1600
        %v1602 = vpop.f32.mrf.mxu0
        %v1603 = vadd.f32 %v1435, %v1602
        %v1604 = vpop.f32.mrf.mxu0
        %v1605 = vadd.f32 %v1431, %v1604
        %v1606 = vpop.f32.mrf.mxu0
        %v1607 = vadd.f32 %v1435, %v1606
        %1608 = vmatprep.mubr.bf16.mxu0 0
        %1609 = vmatmul.mubr.bf16.gmra.mxu0 %v1471
        %v1610 = vpop.f32.mrf.mxu0
        %v1611 = vadd.f32 %v1431, %v1610
        %v1612 = vpop.f32.mrf.mxu0
        %v1613 = vadd.f32 %v1435, %v1612
        %v1614 = vpop.f32.mrf.mxu0
        %v1615 = vadd.f32 %v1431, %v1614
        %v1616 = vpop.f32.mrf.mxu0
        %v1617 = vadd.f32 %v1435, %v1616
        %1618 = vmatprep.mubr.bf16.mxu0 0
        %1619 = vmatmul.mubr.bf16.gmra.mxu0 %v1472
        %v1620 = vpop.f32.mrf.mxu0
        %v1621 = vadd.f32 %v1431, %v1620
        %v1622 = vpop.f32.mrf.mxu0
        %v1623 = vadd.f32 %v1435, %v1622
        %v1624 = vpop.f32.mrf.mxu0
        %v1625 = vadd.f32 %v1431, %v1624
        %v1626 = vpop.f32.mrf.mxu0
        %v1627 = vadd.f32 %v1435, %v1626
        %1628 = vmatprep.mubr.bf16.mxu0 0
        %1629 = vmatmul.mubr.bf16.gmra.mxu0 %v1473
        %v1630 = vpop.f32.mrf.mxu0
        %v1631 = vadd.f32 %v1431, %v1630
        %v1632 = vpop.f32.mrf.mxu0
        %v1633 = vadd.f32 %v1435, %v1632
        %v1634 = vpop.f32.mrf.mxu0
        %v1635 = vadd.f32 %v1431, %v1634
        %v1636 = vpop.f32.mrf.mxu0
        %v1637 = vadd.f32 %v1435, %v1636
        %1638 = vmatprep.mubr.bf16.mxu0 0
        %1639 = vmatmul.mubr.bf16.gmra.mxu0 %v1474
        %v1640 = vpop.f32.mrf.mxu0
        %v1641 = vadd.f32 %v1431, %v1640
        %v1642 = vpop.f32.mrf.mxu0
        %v1643 = vadd.f32 %v1435, %v1642
        %v1644 = vpop.f32.mrf.mxu0
        %v1645 = vadd.f32 %v1431, %v1644
        %v1646 = vpop.f32.mrf.mxu0
        %v1647 = vadd.f32 %v1435, %v1646
        %1648 = vmatprep.mubr.bf16.mxu0 0
        %1649 = vmatmul.mubr.bf16.gmra.mxu0 %v1475
        %v1650 = vpop.f32.mrf.mxu0
        %v1651 = vadd.f32 %v1431, %v1650
        %v1652 = vpop.f32.mrf.mxu0
        %v1653 = vadd.f32 %v1435, %v1652
        %v1654 = vpop.f32.mrf.mxu0
        %v1655 = vadd.f32 %v1431, %v1654
        %v1656 = vpop.f32.mrf.mxu0
        %v1657 = vadd.f32 %v1435, %v1656
        %1658 = vmatprep.mubr.bf16.mxu0 0
        %1659 = vmatmul.mubr.bf16.gmra.mxu0 %v1476
        %v1660 = vpop.f32.mrf.mxu0
        %v1661 = vadd.f32 %v1431, %v1660
        %v1662 = vpop.f32.mrf.mxu0
        %v1663 = vadd.f32 %v1435, %v1662
        %v1664 = vpop.f32.mrf.mxu0
        %v1665 = vadd.f32 %v1431, %v1664
        %v1666 = vpop.f32.mrf.mxu0
        %v1667 = vadd.f32 %v1435, %v1666
        %1668 = vmatprep.mubr.bf16.mxu0 0
        %1669 = vmatmul.mubr.bf16.gmra.mxu0 %v1477
        %v1670 = vpop.f32.mrf.mxu0
        %v1671 = vadd.f32 %v1431, %v1670
        %v1672 = vpop.f32.mrf.mxu0
        %v1673 = vadd.f32 %v1435, %v1672
        %v1674 = vpop.f32.mrf.mxu0
        %v1675 = vadd.f32 %v1431, %v1674
        %v1676 = vpop.f32.mrf.mxu0
        %v1677 = vadd.f32 %v1435, %v1676
        %1678 = vdwg.mxu0
        %v1679 = vpack.c.bf16 %v1605, %v1601
        %v1680 = vpack.c.bf16 %v1607, %v1603
        %v1681 = vpack.c.bf16 %v1615, %v1611
        %v1682 = vpack.c.bf16 %v1617, %v1613
        %v1683 = vpack.c.bf16 %v1625, %v1621
        %v1684 = vpack.c.bf16 %v1627, %v1623
        %v1685 = vpack.c.bf16 %v1635, %v1631
        %v1686 = vpack.c.bf16 %v1637, %v1633
        %v1687 = vpack.c.bf16 %v1645, %v1641
        %v1688 = vpack.c.bf16 %v1647, %v1643
        %v1689 = vpack.c.bf16 %v1655, %v1651
        %v1690 = vpack.c.bf16 %v1657, %v1653
        %v1691 = vpack.c.bf16 %v1665, %v1661
        %v1692 = vpack.c.bf16 %v1667, %v1663
        %v1693 = vpack.c.bf16 %v1675, %v1671
        %v1694 = vpack.c.bf16 %v1677, %v1673
        %v1695 = vld [vmem:[%s479] sm:$0xf]
        %v1696 = vld [vmem:[%s479 + $0x4] sm:$0xf]
        %v1697 = vld [vmem:[%s479 + $0x8] sm:$0xf]
        %v1698 = vld [vmem:[%s479 + $0xc] sm:$0xf]
        %v1699 = vld [vmem:[%s479 + $0x10] sm:$0xf]
        %v1700 = vld [vmem:[%s479 + $0x14] sm:$0xf]
        %v1701 = vld [vmem:[%s479 + $0x18] sm:$0xf]
        %v1702 = vld [vmem:[%s479 + $0x1c] sm:$0xf]
        %v1703 = vld [vmem:[%s479 + $0x20] sm:$0xf]
        %v1704 = vld [vmem:[%s479 + $0x24] sm:$0xf]
        %v1705 = vld [vmem:[%s479 + $0x28] sm:$0xf]
        %v1706 = vld [vmem:[%s479 + $0x2c] sm:$0xf]
        %v1707 = vld [vmem:[%s479 + $0x30] sm:$0xf]
        %v1708 = vld [vmem:[%s479 + $0x34] sm:$0xf]
        %v1709 = vld [vmem:[%s479 + $0x38] sm:$0xf]
        %v1710 = vld [vmem:[%s479 + $0x3c] sm:$0xf]
        %s1711 = scalar_lea.vmem [#allocation15], 256
        %v1712 = vld [vmem:[%s1711] sm:$0xff]
        %v1713 = vld [vmem:[%s1711 + $0x8] sm:$0xff]
        %v1714 = vld [vmem:[%s1711 + $0x10] sm:$0xff]
        %v1715 = vld [vmem:[%s1711 + $0x18] sm:$0xff]
        %v1716 = vld [vmem:[%s1711 + $0x20] sm:$0xff]
        %v1717 = vld [vmem:[%s1711 + $0x28] sm:$0xff]
        %v1718 = vld [vmem:[%s1711 + $0x30] sm:$0xff]
        %v1719 = vld [vmem:[%s1711 + $0x38] sm:$0xff]
        %v1720 = vld [vmem:[%s1711 + $0x40] sm:$0xff]
        %v1721 = vld [vmem:[%s1711 + $0x48] sm:$0xff]
        %v1722 = vld [vmem:[%s1711 + $0x50] sm:$0xff]
        %v1723 = vld [vmem:[%s1711 + $0x58] sm:$0xff]
        %v1724 = vld [vmem:[%s1711 + $0x60] sm:$0xff]
        %v1725 = vld [vmem:[%s1711 + $0x68] sm:$0xff]
        %v1726 = vld [vmem:[%s1711 + $0x70] sm:$0xff]
        %v1727 = vld [vmem:[%s1711 + $0x78] sm:$0xff]
        %s1728 = scalar_lea.vmem %s8, 2
        %v1729 = vld [vmem:[%s1728] ss:$4 sm:$0x3]
        %v1731 = vlaneseq
        %v1732 = vshrl.u32 %v1731, 7
        %v1733 = vsub.s32 0, %v1732
        %v1734 = vrot.slane %v1729, %v1733
        %v1735 = vlaneseq
        %v1736 = vshrl.u32 %v1735, 7
        %v1737 = vsub.s32 1, %v1736
        %v1738 = vrot.slane %v1729, %v1737
        %v1757 = vunpack.c.l.b16 %v1695
        %v1758 = vunpack.c.l.b16 %v1696
        %v1759 = vunpack.c.l.b16 %v1697
        %v1760 = vunpack.c.l.b16 %v1698
        %v1761 = vunpack.c.l.b16 %v1699
        %v1762 = vunpack.c.l.b16 %v1700
        %v1763 = vunpack.c.l.b16 %v1701
        %v1764 = vunpack.c.l.b16 %v1702
        %v1765 = vunpack.c.l.b16 %v1703
        %v1766 = vunpack.c.l.b16 %v1704
        %v1767 = vunpack.c.l.b16 %v1705
        %v1768 = vunpack.c.l.b16 %v1706
        %v1769 = vunpack.c.l.b16 %v1707
        %v1770 = vunpack.c.l.b16 %v1708
        %v1771 = vunpack.c.l.b16 %v1709
        %v1772 = vunpack.c.l.b16 %v1710
        %v1773 = vpack.c.b16 %v1758, %v1757
        %v1774 = vpack.c.b16 %v1760, %v1759
        %v1775 = vpack.c.b16 %v1762, %v1761
        %v1776 = vpack.c.b16 %v1764, %v1763
        %v1777 = vpack.c.b16 %v1766, %v1765
        %v1778 = vpack.c.b16 %v1768, %v1767
        %v1779 = vpack.c.b16 %v1770, %v1769
        %v1780 = vpack.c.b16 %v1772, %v1771
        %v1805 = vunpack.c.l.b16 %v1712
        %v1806 = vunpack.c.h.b16 %v1712
        %v1807 = vunpack.c.l.b16 %v1713
        %v1808 = vunpack.c.h.b16 %v1713
        %v1809 = vunpack.c.l.b16 %v1714
        %v1810 = vunpack.c.h.b16 %v1714
        %v1811 = vunpack.c.l.b16 %v1715
        %v1812 = vunpack.c.h.b16 %v1715
        %v1813 = vunpack.c.l.b16 %v1716
        %v1814 = vunpack.c.h.b16 %v1716
        %v1815 = vunpack.c.l.b16 %v1717
        %v1816 = vunpack.c.h.b16 %v1717
        %v1817 = vunpack.c.l.b16 %v1718
        %v1818 = vunpack.c.h.b16 %v1718
        %v1819 = vunpack.c.l.b16 %v1719
        %v1820 = vunpack.c.h.b16 %v1719
        %v1821 = vunpack.c.l.b16 %v1720
        %v1822 = vunpack.c.h.b16 %v1720
        %v1823 = vunpack.c.l.b16 %v1721
        %v1824 = vunpack.c.h.b16 %v1721
        %v1825 = vunpack.c.l.b16 %v1722
        %v1826 = vunpack.c.h.b16 %v1722
        %v1827 = vunpack.c.l.b16 %v1723
        %v1828 = vunpack.c.h.b16 %v1723
        %v1829 = vunpack.c.l.b16 %v1724
        %v1830 = vunpack.c.h.b16 %v1724
        %v1831 = vunpack.c.l.b16 %v1725
        %v1832 = vunpack.c.h.b16 %v1725
        %v1833 = vunpack.c.l.b16 %v1726
        %v1834 = vunpack.c.h.b16 %v1726
        %v1835 = vunpack.c.l.b16 %v1727
        %v1836 = vunpack.c.h.b16 %v1727
        %v1837 = vpack.c.b16 %v1807, %v1805
        %v1838 = vpack.c.b16 %v1808, %v1806
        %v1839 = vpack.c.b16 %v1811, %v1809
        %v1840 = vpack.c.b16 %v1812, %v1810
        %v1841 = vpack.c.b16 %v1815, %v1813
        %v1842 = vpack.c.b16 %v1816, %v1814
        %v1843 = vpack.c.b16 %v1819, %v1817
        %v1844 = vpack.c.b16 %v1820, %v1818
        %v1845 = vpack.c.b16 %v1823, %v1821
        %v1846 = vpack.c.b16 %v1824, %v1822
        %v1847 = vpack.c.b16 %v1827, %v1825
        %v1848 = vpack.c.b16 %v1828, %v1826
        %v1849 = vpack.c.b16 %v1831, %v1829
        %v1850 = vpack.c.b16 %v1832, %v1830
        %v1851 = vpack.c.b16 %v1835, %v1833
        %v1852 = vpack.c.b16 %v1836, %v1834
        %1869 = vmatprep.subr.bf16.mxu0 %v1852
        %1870 = vmatpush1.bf16.msra.mxu0 %v1851
        %1871 = vmatprep.subr.bf16.mxu0 %v1850
        %1872 = vmatpush1.bf16.msra.mxu0 %v1849
        %1873 = vmatprep.subr.bf16.mxu0 %v1848
        %1874 = vmatpush1.bf16.msra.mxu0 %v1847
        %1875 = vmatprep.subr.bf16.mxu0 %v1846
        %1876 = vmatpush1.bf16.msra.mxu0 %v1845
        %1877 = vmatprep.subr.bf16.mxu0 %v1844
        %1878 = vmatpush1.bf16.msra.mxu0 %v1843
        %1879 = vmatprep.subr.bf16.mxu0 %v1842
        %1880 = vmatpush1.bf16.msra.mxu0 %v1841
        %1881 = vmatprep.subr.bf16.mxu0 %v1840
        %1882 = vmatpush1.bf16.msra.mxu0 %v1839
        %1883 = vmatprep.subr.bf16.mxu0 %v1838
        %1884 = vmatpush1.bf16.msra.mxu0 %v1837
        %1885 = vmatprep.subr.bf16.mxu0 0
        %1886 = vmatpush2.bf16.msra.mxu0 0
        %1887 = vmatprep.subr.bf16.mxu0 0
        %1888 = vmatpush2.bf16.msra.mxu0 0
        %1889 = vmatprep.subr.bf16.mxu0 0
        %1890 = vmatpush2.bf16.msra.mxu0 0
        %1891 = vmatprep.subr.bf16.mxu0 0
        %1892 = vmatpush2.bf16.msra.mxu0 0
        %1893 = vmatprep.subr.bf16.mxu0 0
        %1894 = vmatpush2.bf16.msra.mxu0 0
        %1895 = vmatprep.subr.bf16.mxu0 0
        %1896 = vmatpush2.bf16.msra.mxu0 0
        %1897 = vmatprep.subr.bf16.mxu0 0
        %1898 = vmatpush2.bf16.msra.mxu0 0
        %1899 = vmatprep.subr.bf16.mxu0 0
        %1900 = vmatpush2.bf16.msra.mxu0 0
        %1901 = vmatprep.mubr.bf16.mxu0 0
        %1902 = vmatmul.mubr.bf16.gmra.mxu0 %v1773
        %v1903 = vpop.f32.mrf.mxu0
        %v1904 = vadd.f32 %v1734, %v1903
        %v1905 = vpop.f32.mrf.mxu0
        %v1906 = vadd.f32 %v1738, %v1905
        %v1907 = vpop.f32.mrf.mxu0
        %v1908 = vadd.f32 %v1734, %v1907
        %v1909 = vpop.f32.mrf.mxu0
        %v1910 = vadd.f32 %v1738, %v1909
        %1911 = vmatprep.mubr.bf16.mxu0 0
        %1912 = vmatmul.mubr.bf16.gmra.mxu0 %v1774
        %v1913 = vpop.f32.mrf.mxu0
        %v1914 = vadd.f32 %v1734, %v1913
        %v1915 = vpop.f32.mrf.mxu0
        %v1916 = vadd.f32 %v1738, %v1915
        %v1917 = vpop.f32.mrf.mxu0
        %v1918 = vadd.f32 %v1734, %v1917
        %v1919 = vpop.f32.mrf.mxu0
        %v1920 = vadd.f32 %v1738, %v1919
        %1921 = vmatprep.mubr.bf16.mxu0 0
        %1922 = vmatmul.mubr.bf16.gmra.mxu0 %v1775
        %v1923 = vpop.f32.mrf.mxu0
        %v1924 = vadd.f32 %v1734, %v1923
        %v1925 = vpop.f32.mrf.mxu0
        %v1926 = vadd.f32 %v1738, %v1925
        %v1927 = vpop.f32.mrf.mxu0
        %v1928 = vadd.f32 %v1734, %v1927
        %v1929 = vpop.f32.mrf.mxu0
        %v1930 = vadd.f32 %v1738, %v1929
        %1931 = vmatprep.mubr.bf16.mxu0 0
        %1932 = vmatmul.mubr.bf16.gmra.mxu0 %v1776
        %v1933 = vpop.f32.mrf.mxu0
        %v1934 = vadd.f32 %v1734, %v1933
        %v1935 = vpop.f32.mrf.mxu0
        %v1936 = vadd.f32 %v1738, %v1935
        %v1937 = vpop.f32.mrf.mxu0
        %v1938 = vadd.f32 %v1734, %v1937
        %v1939 = vpop.f32.mrf.mxu0
        %v1940 = vadd.f32 %v1738, %v1939
        %1941 = vmatprep.mubr.bf16.mxu0 0
        %1942 = vmatmul.mubr.bf16.gmra.mxu0 %v1777
        %v1943 = vpop.f32.mrf.mxu0
        %v1944 = vadd.f32 %v1734, %v1943
        %v1945 = vpop.f32.mrf.mxu0
        %v1946 = vadd.f32 %v1738, %v1945
        %v1947 = vpop.f32.mrf.mxu0
        %v1948 = vadd.f32 %v1734, %v1947
        %v1949 = vpop.f32.mrf.mxu0
        %v1950 = vadd.f32 %v1738, %v1949
        %1951 = vmatprep.mubr.bf16.mxu0 0
        %1952 = vmatmul.mubr.bf16.gmra.mxu0 %v1778
        %v1953 = vpop.f32.mrf.mxu0
        %v1954 = vadd.f32 %v1734, %v1953
        %v1955 = vpop.f32.mrf.mxu0
        %v1956 = vadd.f32 %v1738, %v1955
        %v1957 = vpop.f32.mrf.mxu0
        %v1958 = vadd.f32 %v1734, %v1957
        %v1959 = vpop.f32.mrf.mxu0
        %v1960 = vadd.f32 %v1738, %v1959
        %1961 = vmatprep.mubr.bf16.mxu0 0
        %1962 = vmatmul.mubr.bf16.gmra.mxu0 %v1779
        %v1963 = vpop.f32.mrf.mxu0
        %v1964 = vadd.f32 %v1734, %v1963
        %v1965 = vpop.f32.mrf.mxu0
        %v1966 = vadd.f32 %v1738, %v1965
        %v1967 = vpop.f32.mrf.mxu0
        %v1968 = vadd.f32 %v1734, %v1967
        %v1969 = vpop.f32.mrf.mxu0
        %v1970 = vadd.f32 %v1738, %v1969
        %1971 = vmatprep.mubr.bf16.mxu0 0
        %1972 = vmatmul.mubr.bf16.gmra.mxu0 %v1780
        %v1973 = vpop.f32.mrf.mxu0
        %v1974 = vadd.f32 %v1734, %v1973
        %v1975 = vpop.f32.mrf.mxu0
        %v1976 = vadd.f32 %v1738, %v1975
        %v1977 = vpop.f32.mrf.mxu0
        %v1978 = vadd.f32 %v1734, %v1977
        %v1979 = vpop.f32.mrf.mxu0
        %v1980 = vadd.f32 %v1738, %v1979
        %1981 = vdwg.mxu0
        %v1982 = vpack.c.bf16 %v1908, %v1904
        %v1983 = vpack.c.bf16 %v1910, %v1906
        %v1984 = vpack.c.bf16 %v1918, %v1914
        %v1985 = vpack.c.bf16 %v1920, %v1916
        %v1986 = vpack.c.bf16 %v1928, %v1924
        %v1987 = vpack.c.bf16 %v1930, %v1926
        %v1988 = vpack.c.bf16 %v1938, %v1934
        %v1989 = vpack.c.bf16 %v1940, %v1936
        %v1990 = vpack.c.bf16 %v1948, %v1944
        %v1991 = vpack.c.bf16 %v1950, %v1946
        %v1992 = vpack.c.bf16 %v1958, %v1954
        %v1993 = vpack.c.bf16 %v1960, %v1956
        %v1994 = vpack.c.bf16 %v1968, %v1964
        %v1995 = vpack.c.bf16 %v1970, %v1966
        %v1996 = vpack.c.bf16 %v1978, %v1974
        %v1997 = vpack.c.bf16 %v1980, %v1976
        %v1998 = vld [vmem:[#allocation2] sm:$0xff]
        %v1999 = vld [vmem:[#allocation2 + $0x8] sm:$0xff]
        %v2000 = vld [vmem:[#allocation2 + $0x10] sm:$0xff]
        %v2001 = vld [vmem:[#allocation2 + $0x18] sm:$0xff]
        %v2002 = vld [vmem:[#allocation2 + $0x20] sm:$0xff]
        %v2003 = vld [vmem:[#allocation2 + $0x28] sm:$0xff]
        %v2004 = vld [vmem:[#allocation2 + $0x30] sm:$0xff]
        %v2005 = vld [vmem:[#allocation2 + $0x38] sm:$0xff]
        %v2006 = vld [vmem:[#allocation2 + $0x40] sm:$0xff]
        %v2007 = vld [vmem:[#allocation2 + $0x48] sm:$0xff]
        %v2008 = vld [vmem:[#allocation2 + $0x50] sm:$0xff]
        %v2009 = vld [vmem:[#allocation2 + $0x58] sm:$0xff]
        %v2010 = vld [vmem:[#allocation2 + $0x60] sm:$0xff]
        %v2011 = vld [vmem:[#allocation2 + $0x68] sm:$0xff]
        %v2012 = vld [vmem:[#allocation2 + $0x70] sm:$0xff]
        %v2013 = vld [vmem:[#allocation2 + $0x78] sm:$0xff]
        %v2014 = vld [vmem:[#allocation3] sm:$0xff]
        %v2015 = vld [vmem:[#allocation3 + $0x8] sm:$0xff]
        %v2016 = vld [vmem:[#allocation3 + $0x10] sm:$0xff]
        %v2017 = vld [vmem:[#allocation3 + $0x18] sm:$0xff]
        %v2018 = vld [vmem:[#allocation3 + $0x20] sm:$0xff]
        %v2019 = vld [vmem:[#allocation3 + $0x28] sm:$0xff]
        %v2020 = vld [vmem:[#allocation3 + $0x30] sm:$0xff]
        %v2021 = vld [vmem:[#allocation3 + $0x38] sm:$0xff]
        %v2022 = vld [vmem:[#allocation3 + $0x40] sm:$0xff]
        %v2023 = vld [vmem:[#allocation3 + $0x48] sm:$0xff]
        %v2024 = vld [vmem:[#allocation3 + $0x50] sm:$0xff]
        %v2025 = vld [vmem:[#allocation3 + $0x58] sm:$0xff]
        %v2026 = vld [vmem:[#allocation3 + $0x60] sm:$0xff]
        %v2027 = vld [vmem:[#allocation3 + $0x68] sm:$0xff]
        %v2028 = vld [vmem:[#allocation3 + $0x70] sm:$0xff]
        %v2029 = vld [vmem:[#allocation3 + $0x78] sm:$0xff]
        %v2046 = vunpack.c.l.b16 %v2014
        %v2047 = vunpack.c.l.b16 %v2015
        %v2048 = vunpack.c.l.b16 %v2016
        %v2049 = vunpack.c.l.b16 %v2017
        %v2050 = vunpack.c.l.b16 %v2018
        %v2051 = vunpack.c.l.b16 %v2019
        %v2052 = vunpack.c.l.b16 %v2020
        %v2053 = vunpack.c.l.b16 %v2021
        %v2054 = vunpack.c.l.b16 %v2022
        %v2055 = vunpack.c.l.b16 %v2023
        %v2056 = vunpack.c.l.b16 %v2024
        %v2057 = vunpack.c.l.b16 %v2025
        %v2058 = vunpack.c.l.b16 %v2026
        %v2059 = vunpack.c.l.b16 %v2027
        %v2060 = vunpack.c.l.b16 %v2028
        %v2061 = vunpack.c.l.b16 %v2029
        %v2062 = vpack.c.b16 %v2047, %v2046
        %v2063 = vpack.c.b16 %v2049, %v2048
        %v2064 = vpack.c.b16 %v2051, %v2050
        %v2065 = vpack.c.b16 %v2053, %v2052
        %v2066 = vpack.c.b16 %v2055, %v2054
        %v2067 = vpack.c.b16 %v2057, %v2056
        %v2068 = vpack.c.b16 %v2059, %v2058
        %v2069 = vpack.c.b16 %v2061, %v2060
        %2078 = vmatprep.subr.bf16.mxu0 0
        %2079 = vmatpush1.bf16.xpose.msra.mxu0 %v2069
        %2080 = vmatprep.subr.bf16.mxu0 0
        %2081 = vmatpush1.bf16.xpose.msra.mxu0 %v2068
        %2082 = vmatprep.subr.bf16.mxu0 0
        %2083 = vmatpush1.bf16.xpose.msra.mxu0 %v2067
        %2084 = vmatprep.subr.bf16.mxu0 0
        %2085 = vmatpush1.bf16.xpose.msra.mxu0 %v2066
        %2086 = vmatprep.subr.bf16.mxu0 0
        %2087 = vmatpush1.bf16.xpose.msra.mxu0 %v2065
        %2088 = vmatprep.subr.bf16.mxu0 0
        %2089 = vmatpush1.bf16.xpose.msra.mxu0 %v2064
        %2090 = vmatprep.subr.bf16.mxu0 0
        %2091 = vmatpush1.bf16.xpose.msra.mxu0 %v2063
        %2092 = vmatprep.subr.bf16.mxu0 0
        %2093 = vmatpush1.bf16.xpose.msra.mxu0 %v2062
        %2094 = vmatprep.subr.bf16.mxu0 0
        %2095 = vmatpush2.bf16.xpose.msra.mxu0 0
        %2096 = vmatprep.subr.bf16.mxu0 0
        %2097 = vmatpush2.bf16.xpose.msra.mxu0 0
        %2098 = vmatprep.subr.bf16.mxu0 0
        %2099 = vmatpush2.bf16.xpose.msra.mxu0 0
        %2100 = vmatprep.subr.bf16.mxu0 0
        %2101 = vmatpush2.bf16.xpose.msra.mxu0 0
        %2102 = vmatprep.subr.bf16.mxu0 0
        %2103 = vmatpush2.bf16.xpose.msra.mxu0 0
        %2104 = vmatprep.subr.bf16.mxu0 0
        %2105 = vmatpush2.bf16.xpose.msra.mxu0 0
        %2106 = vmatprep.subr.bf16.mxu0 0
        %2107 = vmatpush2.bf16.xpose.msra.mxu0 0
        %2108 = vmatprep.subr.bf16.mxu0 0
        %2109 = vmatpush2.bf16.xpose.msra.mxu0 0
        %2110 = vmatprep.mubr.bf16.mxu0 0
        %2111 = vmatmul.mubr.bf16.gmra.mxu0 %v1982
        %v2112 = vpop.f32.mrf.mxu0
        %v2113 = vadd.f32 0.0, %v2112
        %v2114 = vpop.f32.mrf.mxu0
        %v2115 = vpop.f32.mrf.mxu0
        %v2116 = vadd.f32 0.0, %v2115
        %v2117 = vpop.f32.mrf.mxu0
        %2118 = vmatprep.mubr.bf16.mxu0 0
        %2119 = vmatmul.mubr.bf16.gmra.mxu0 %v1984
        %v2120 = vpop.f32.mrf.mxu0
        %v2121 = vadd.f32 0.0, %v2120
        %v2122 = vpop.f32.mrf.mxu0
        %v2123 = vpop.f32.mrf.mxu0
        %v2124 = vadd.f32 0.0, %v2123
        %v2125 = vpop.f32.mrf.mxu0
        %2126 = vmatprep.mubr.bf16.mxu0 0
        %2127 = vmatmul.mubr.bf16.gmra.mxu0 %v1986
        %v2128 = vpop.f32.mrf.mxu0
        %v2129 = vadd.f32 0.0, %v2128
        %v2130 = vpop.f32.mrf.mxu0
        %v2131 = vpop.f32.mrf.mxu0
        %v2132 = vadd.f32 0.0, %v2131
        %v2133 = vpop.f32.mrf.mxu0
        %2134 = vmatprep.mubr.bf16.mxu0 0
        %2135 = vmatmul.mubr.bf16.gmra.mxu0 %v1988
        %v2136 = vpop.f32.mrf.mxu0
        %v2137 = vadd.f32 0.0, %v2136
        %v2138 = vpop.f32.mrf.mxu0
        %v2139 = vpop.f32.mrf.mxu0
        %v2140 = vadd.f32 0.0, %v2139
        %v2141 = vpop.f32.mrf.mxu0
        %2142 = vmatprep.mubr.bf16.mxu0 0
        %2143 = vmatmul.mubr.bf16.gmra.mxu0 %v1990
        %v2144 = vpop.f32.mrf.mxu0
        %v2145 = vadd.f32 0.0, %v2144
        %v2146 = vpop.f32.mrf.mxu0
        %v2147 = vpop.f32.mrf.mxu0
        %v2148 = vadd.f32 0.0, %v2147
        %v2149 = vpop.f32.mrf.mxu0
        %2150 = vmatprep.mubr.bf16.mxu0 0
        %2151 = vmatmul.mubr.bf16.gmra.mxu0 %v1992
        %v2152 = vpop.f32.mrf.mxu0
        %v2153 = vadd.f32 0.0, %v2152
        %v2154 = vpop.f32.mrf.mxu0
        %v2155 = vpop.f32.mrf.mxu0
        %v2156 = vadd.f32 0.0, %v2155
        %v2157 = vpop.f32.mrf.mxu0
        %2158 = vmatprep.mubr.bf16.mxu0 0
        %2159 = vmatmul.mubr.bf16.gmra.mxu0 %v1994
        %v2160 = vpop.f32.mrf.mxu0
        %v2161 = vadd.f32 0.0, %v2160
        %v2162 = vpop.f32.mrf.mxu0
        %v2163 = vpop.f32.mrf.mxu0
        %v2164 = vadd.f32 0.0, %v2163
        %v2165 = vpop.f32.mrf.mxu0
        %2166 = vmatprep.mubr.bf16.mxu0 0
        %2167 = vmatmul.mubr.bf16.gmra.mxu0 %v1996
        %v2168 = vpop.f32.mrf.mxu0
        %v2169 = vadd.f32 0.0, %v2168
        %v2170 = vpop.f32.mrf.mxu0
        %v2171 = vpop.f32.mrf.mxu0
        %v2172 = vadd.f32 0.0, %v2171
        %v2173 = vpop.f32.mrf.mxu0
        %2174 = vdwg.mxu0
        %v2191 = vunpack.c.l.b16 %v1998
        %v2192 = vunpack.c.l.b16 %v1999
        %v2193 = vunpack.c.l.b16 %v2000
        %v2194 = vunpack.c.l.b16 %v2001
        %v2195 = vunpack.c.l.b16 %v2002
        %v2196 = vunpack.c.l.b16 %v2003
        %v2197 = vunpack.c.l.b16 %v2004
        %v2198 = vunpack.c.l.b16 %v2005
        %v2199 = vunpack.c.l.b16 %v2006
        %v2200 = vunpack.c.l.b16 %v2007
        %v2201 = vunpack.c.l.b16 %v2008
        %v2202 = vunpack.c.l.b16 %v2009
        %v2203 = vunpack.c.l.b16 %v2010
        %v2204 = vunpack.c.l.b16 %v2011
        %v2205 = vunpack.c.l.b16 %v2012
        %v2206 = vunpack.c.l.b16 %v2013
        %v2207 = vpack.c.b16 %v2192, %v2191
        %v2208 = vpack.c.b16 %v2194, %v2193
        %v2209 = vpack.c.b16 %v2196, %v2195
        %v2210 = vpack.c.b16 %v2198, %v2197
        %v2211 = vpack.c.b16 %v2200, %v2199
        %v2212 = vpack.c.b16 %v2202, %v2201
        %v2213 = vpack.c.b16 %v2204, %v2203
        %v2214 = vpack.c.b16 %v2206, %v2205
        %2223 = vmatprep.subr.bf16.mxu0 0
        %2224 = vmatpush1.bf16.xpose.msra.mxu0 %v2214
        %2225 = vmatprep.subr.bf16.mxu0 0
        %2226 = vmatpush1.bf16.xpose.msra.mxu0 %v2213
        %2227 = vmatprep.subr.bf16.mxu0 0
        %2228 = vmatpush1.bf16.xpose.msra.mxu0 %v2212
        %2229 = vmatprep.subr.bf16.mxu0 0
        %2230 = vmatpush1.bf16.xpose.msra.mxu0 %v2211
        %2231 = vmatprep.subr.bf16.mxu0 0
        %2232 = vmatpush1.bf16.xpose.msra.mxu0 %v2210
        %2233 = vmatprep.subr.bf16.mxu0 0
        %2234 = vmatpush1.bf16.xpose.msra.mxu0 %v2209
        %2235 = vmatprep.subr.bf16.mxu0 0
        %2236 = vmatpush1.bf16.xpose.msra.mxu0 %v2208
        %2237 = vmatprep.subr.bf16.mxu0 0
        %2238 = vmatpush1.bf16.xpose.msra.mxu0 %v2207
        %2239 = vmatprep.subr.bf16.mxu0 0
        %2240 = vmatpush2.bf16.xpose.msra.mxu0 0
        %2241 = vmatprep.subr.bf16.mxu0 0
        %2242 = vmatpush2.bf16.xpose.msra.mxu0 0
        %2243 = vmatprep.subr.bf16.mxu0 0
        %2244 = vmatpush2.bf16.xpose.msra.mxu0 0
        %2245 = vmatprep.subr.bf16.mxu0 0
        %2246 = vmatpush2.bf16.xpose.msra.mxu0 0
        %2247 = vmatprep.subr.bf16.mxu0 0
        %2248 = vmatpush2.bf16.xpose.msra.mxu0 0
        %2249 = vmatprep.subr.bf16.mxu0 0
        %2250 = vmatpush2.bf16.xpose.msra.mxu0 0
        %2251 = vmatprep.subr.bf16.mxu0 0
        %2252 = vmatpush2.bf16.xpose.msra.mxu0 0
        %2253 = vmatprep.subr.bf16.mxu0 0
        %2254 = vmatpush2.bf16.xpose.msra.mxu0 0
        %2255 = vmatprep.mubr.bf16.mxu0 0
        %2256 = vmatmul.mubr.bf16.gmra.mxu0 %v1679
        %v2257 = vpop.f32.mrf.mxu0
        %v2258 = vadd.f32 0.0, %v2257
        %v2259 = vpop.f32.mrf.mxu0
        %v2260 = vpop.f32.mrf.mxu0
        %v2261 = vadd.f32 0.0, %v2260
        %v2262 = vpop.f32.mrf.mxu0
        %2263 = vmatprep.mubr.bf16.mxu0 0
        %2264 = vmatmul.mubr.bf16.gmra.mxu0 %v1681
        %v2265 = vpop.f32.mrf.mxu0
        %v2266 = vadd.f32 0.0, %v2265
        %v2267 = vpop.f32.mrf.mxu0
        %v2268 = vpop.f32.mrf.mxu0
        %v2269 = vadd.f32 0.0, %v2268
        %v2270 = vpop.f32.mrf.mxu0
        %2271 = vmatprep.mubr.bf16.mxu0 0
        %2272 = vmatmul.mubr.bf16.gmra.mxu0 %v1683
        %v2273 = vpop.f32.mrf.mxu0
        %v2274 = vadd.f32 0.0, %v2273
        %v2275 = vpop.f32.mrf.mxu0
        %v2276 = vpop.f32.mrf.mxu0
        %v2277 = vadd.f32 0.0, %v2276
        %v2278 = vpop.f32.mrf.mxu0
        %2279 = vmatprep.mubr.bf16.mxu0 0
        %2280 = vmatmul.mubr.bf16.gmra.mxu0 %v1685
        %v2281 = vpop.f32.mrf.mxu0
        %v2282 = vadd.f32 0.0, %v2281
        %v2283 = vpop.f32.mrf.mxu0
        %v2284 = vpop.f32.mrf.mxu0
        %v2285 = vadd.f32 0.0, %v2284
        %v2286 = vpop.f32.mrf.mxu0
        %2287 = vmatprep.mubr.bf16.mxu0 0
        %2288 = vmatmul.mubr.bf16.gmra.mxu0 %v1687
        %v2289 = vpop.f32.mrf.mxu0
        %v2290 = vadd.f32 0.0, %v2289
        %v2291 = vpop.f32.mrf.mxu0
        %v2292 = vpop.f32.mrf.mxu0
        %v2293 = vadd.f32 0.0, %v2292
        %v2294 = vpop.f32.mrf.mxu0
        %2295 = vmatprep.mubr.bf16.mxu0 0
        %2296 = vmatmul.mubr.bf16.gmra.mxu0 %v1689
        %v2297 = vpop.f32.mrf.mxu0
        %v2298 = vadd.f32 0.0, %v2297
        %v2299 = vpop.f32.mrf.mxu0
        %v2300 = vpop.f32.mrf.mxu0
        %v2301 = vadd.f32 0.0, %v2300
        %v2302 = vpop.f32.mrf.mxu0
        %2303 = vmatprep.mubr.bf16.mxu0 0
        %2304 = vmatmul.mubr.bf16.gmra.mxu0 %v1691
        %v2305 = vpop.f32.mrf.mxu0
        %v2306 = vadd.f32 0.0, %v2305
        %v2307 = vpop.f32.mrf.mxu0
        %v2308 = vpop.f32.mrf.mxu0
        %v2309 = vadd.f32 0.0, %v2308
        %v2310 = vpop.f32.mrf.mxu0
        %2311 = vmatprep.mubr.bf16.mxu0 0
        %2312 = vmatmul.mubr.bf16.gmra.mxu0 %v1693
        %v2313 = vpop.f32.mrf.mxu0
        %v2314 = vadd.f32 0.0, %v2313
        %v2315 = vpop.f32.mrf.mxu0
        %v2316 = vpop.f32.mrf.mxu0
        %v2317 = vadd.f32 0.0, %v2316
        %v2318 = vpop.f32.mrf.mxu0
        %2319 = vdwg.mxu0
        %v2320 = vmul.f32 %v2113, %v2258
        %v2321 = vmul.f32 %v2116, %v2261
        %v2322 = vmul.f32 %v2121, %v2266
        %v2323 = vmul.f32 %v2124, %v2269
        %v2324 = vmul.f32 %v2129, %v2274
        %v2325 = vmul.f32 %v2132, %v2277
        %v2326 = vmul.f32 %v2137, %v2282
        %v2327 = vmul.f32 %v2140, %v2285
        %v2328 = vmul.f32 %v2145, %v2290
        %v2329 = vmul.f32 %v2148, %v2293
        %v2330 = vmul.f32 %v2153, %v2298
        %v2331 = vmul.f32 %v2156, %v2301
        %v2332 = vmul.f32 %v2161, %v2306
        %v2333 = vmul.f32 %v2164, %v2309
        %v2334 = vmul.f32 %v2169, %v2314
        %v2335 = vmul.f32 %v2172, %v2317
        %v2336 = vunpack.c.h.b16 %v2014
        %v2337 = vunpack.c.h.b16 %v2015
        %v2338 = vunpack.c.h.b16 %v2016
        %v2339 = vunpack.c.h.b16 %v2017
        %v2340 = vunpack.c.h.b16 %v2018
        %v2341 = vunpack.c.h.b16 %v2019
        %v2342 = vunpack.c.h.b16 %v2020
        %v2343 = vunpack.c.h.b16 %v2021
        %v2344 = vunpack.c.h.b16 %v2022
        %v2345 = vunpack.c.h.b16 %v2023
        %v2346 = vunpack.c.h.b16 %v2024
        %v2347 = vunpack.c.h.b16 %v2025
        %v2348 = vunpack.c.h.b16 %v2026
        %v2349 = vunpack.c.h.b16 %v2027
        %v2350 = vunpack.c.h.b16 %v2028
        %v2351 = vunpack.c.h.b16 %v2029
        %v2352 = vpack.c.b16 %v2337, %v2336
        %v2353 = vpack.c.b16 %v2339, %v2338
        %v2354 = vpack.c.b16 %v2341, %v2340
        %v2355 = vpack.c.b16 %v2343, %v2342
        %v2356 = vpack.c.b16 %v2345, %v2344
        %v2357 = vpack.c.b16 %v2347, %v2346
        %v2358 = vpack.c.b16 %v2349, %v2348
        %v2359 = vpack.c.b16 %v2351, %v2350
        %2368 = vmatprep.subr.bf16.mxu0 0
        %2369 = vmatpush1.bf16.xpose.msra.mxu0 %v2359
        %2370 = vmatprep.subr.bf16.mxu0 0
        %2371 = vmatpush1.bf16.xpose.msra.mxu0 %v2358
        %2372 = vmatprep.subr.bf16.mxu0 0
        %2373 = vmatpush1.bf16.xpose.msra.mxu0 %v2357
        %2374 = vmatprep.subr.bf16.mxu0 0
        %2375 = vmatpush1.bf16.xpose.msra.mxu0 %v2356
        %2376 = vmatprep.subr.bf16.mxu0 0
        %2377 = vmatpush1.bf16.xpose.msra.mxu0 %v2355
        %2378 = vmatprep.subr.bf16.mxu0 0
        %2379 = vmatpush1.bf16.xpose.msra.mxu0 %v2354
        %2380 = vmatprep.subr.bf16.mxu0 0
        %2381 = vmatpush1.bf16.xpose.msra.mxu0 %v2353
        %2382 = vmatprep.subr.bf16.mxu0 0
        %2383 = vmatpush1.bf16.xpose.msra.mxu0 %v2352
        %2384 = vmatprep.subr.bf16.mxu0 0
        %2385 = vmatpush2.bf16.xpose.msra.mxu0 0
        %2386 = vmatprep.subr.bf16.mxu0 0
        %2387 = vmatpush2.bf16.xpose.msra.mxu0 0
        %2388 = vmatprep.subr.bf16.mxu0 0
        %2389 = vmatpush2.bf16.xpose.msra.mxu0 0
        %2390 = vmatprep.subr.bf16.mxu0 0
        %2391 = vmatpush2.bf16.xpose.msra.mxu0 0
        %2392 = vmatprep.subr.bf16.mxu0 0
        %2393 = vmatpush2.bf16.xpose.msra.mxu0 0
        %2394 = vmatprep.subr.bf16.mxu0 0
        %2395 = vmatpush2.bf16.xpose.msra.mxu0 0
        %2396 = vmatprep.subr.bf16.mxu0 0
        %2397 = vmatpush2.bf16.xpose.msra.mxu0 0
        %2398 = vmatprep.subr.bf16.mxu0 0
        %2399 = vmatpush2.bf16.xpose.msra.mxu0 0
        %2400 = vmatprep.mubr.bf16.mxu0 0
        %2401 = vmatmul.mubr.bf16.gmra.mxu0 %v1983
        %v2402 = vpop.f32.mrf.mxu0
        %v2403 = vadd.f32 0.0, %v2402
        %v2404 = vpop.f32.mrf.mxu0
        %v2405 = vpop.f32.mrf.mxu0
        %v2406 = vadd.f32 0.0, %v2405
        %v2407 = vpop.f32.mrf.mxu0
        %2408 = vmatprep.mubr.bf16.mxu0 0
        %2409 = vmatmul.mubr.bf16.gmra.mxu0 %v1985
        %v2410 = vpop.f32.mrf.mxu0
        %v2411 = vadd.f32 0.0, %v2410
        %v2412 = vpop.f32.mrf.mxu0
        %v2413 = vpop.f32.mrf.mxu0
        %v2414 = vadd.f32 0.0, %v2413
        %v2415 = vpop.f32.mrf.mxu0
        %2416 = vmatprep.mubr.bf16.mxu0 0
        %2417 = vmatmul.mubr.bf16.gmra.mxu0 %v1987
        %v2418 = vpop.f32.mrf.mxu0
        %v2419 = vadd.f32 0.0, %v2418
        %v2420 = vpop.f32.mrf.mxu0
        %v2421 = vpop.f32.mrf.mxu0
        %v2422 = vadd.f32 0.0, %v2421
        %v2423 = vpop.f32.mrf.mxu0
        %2424 = vmatprep.mubr.bf16.mxu0 0
        %2425 = vmatmul.mubr.bf16.gmra.mxu0 %v1989
        %v2426 = vpop.f32.mrf.mxu0
        %v2427 = vadd.f32 0.0, %v2426
        %v2428 = vpop.f32.mrf.mxu0
        %v2429 = vpop.f32.mrf.mxu0
        %v2430 = vadd.f32 0.0, %v2429
        %v2431 = vpop.f32.mrf.mxu0
        %2432 = vmatprep.mubr.bf16.mxu0 0
        %2433 = vmatmul.mubr.bf16.gmra.mxu0 %v1991
        %v2434 = vpop.f32.mrf.mxu0
        %v2435 = vadd.f32 0.0, %v2434
        %v2436 = vpop.f32.mrf.mxu0
        %v2437 = vpop.f32.mrf.mxu0
        %v2438 = vadd.f32 0.0, %v2437
        %v2439 = vpop.f32.mrf.mxu0
        %2440 = vmatprep.mubr.bf16.mxu0 0
        %2441 = vmatmul.mubr.bf16.gmra.mxu0 %v1993
        %v2442 = vpop.f32.mrf.mxu0
        %v2443 = vadd.f32 0.0, %v2442
        %v2444 = vpop.f32.mrf.mxu0
        %v2445 = vpop.f32.mrf.mxu0
        %v2446 = vadd.f32 0.0, %v2445
        %v2447 = vpop.f32.mrf.mxu0
        %2448 = vmatprep.mubr.bf16.mxu0 0
        %2449 = vmatmul.mubr.bf16.gmra.mxu0 %v1995
        %v2450 = vpop.f32.mrf.mxu0
        %v2451 = vadd.f32 0.0, %v2450
        %v2452 = vpop.f32.mrf.mxu0
        %v2453 = vpop.f32.mrf.mxu0
        %v2454 = vadd.f32 0.0, %v2453
        %v2455 = vpop.f32.mrf.mxu0
        %2456 = vmatprep.mubr.bf16.mxu0 0
        %2457 = vmatmul.mubr.bf16.gmra.mxu0 %v1997
        %v2458 = vpop.f32.mrf.mxu0
        %v2459 = vadd.f32 0.0, %v2458
        %v2460 = vpop.f32.mrf.mxu0
        %v2461 = vpop.f32.mrf.mxu0
        %v2462 = vadd.f32 0.0, %v2461
        %v2463 = vpop.f32.mrf.mxu0
        %2464 = vdwg.mxu0
        %v2465 = vunpack.c.h.b16 %v1998
        %v2466 = vunpack.c.h.b16 %v1999
        %v2467 = vunpack.c.h.b16 %v2000
        %v2468 = vunpack.c.h.b16 %v2001
        %v2469 = vunpack.c.h.b16 %v2002
        %v2470 = vunpack.c.h.b16 %v2003
        %v2471 = vunpack.c.h.b16 %v2004
        %v2472 = vunpack.c.h.b16 %v2005
        %v2473 = vunpack.c.h.b16 %v2006
        %v2474 = vunpack.c.h.b16 %v2007
        %v2475 = vunpack.c.h.b16 %v2008
        %v2476 = vunpack.c.h.b16 %v2009
        %v2477 = vunpack.c.h.b16 %v2010
        %v2478 = vunpack.c.h.b16 %v2011
        %v2479 = vunpack.c.h.b16 %v2012
        %v2480 = vunpack.c.h.b16 %v2013
        %v2481 = vpack.c.b16 %v2466, %v2465
        %v2482 = vpack.c.b16 %v2468, %v2467
        %v2483 = vpack.c.b16 %v2470, %v2469
        %v2484 = vpack.c.b16 %v2472, %v2471
        %v2485 = vpack.c.b16 %v2474, %v2473
        %v2486 = vpack.c.b16 %v2476, %v2475
        %v2487 = vpack.c.b16 %v2478, %v2477
        %v2488 = vpack.c.b16 %v2480, %v2479
        %2497 = vmatprep.subr.bf16.mxu0 0
        %2498 = vmatpush1.bf16.xpose.msra.mxu0 %v2488
        %2499 = vmatprep.subr.bf16.mxu0 0
        %2500 = vmatpush1.bf16.xpose.msra.mxu0 %v2487
        %2501 = vmatprep.subr.bf16.mxu0 0
        %2502 = vmatpush1.bf16.xpose.msra.mxu0 %v2486
        %2503 = vmatprep.subr.bf16.mxu0 0
        %2504 = vmatpush1.bf16.xpose.msra.mxu0 %v2485
        %2505 = vmatprep.subr.bf16.mxu0 0
        %2506 = vmatpush1.bf16.xpose.msra.mxu0 %v2484
        %2507 = vmatprep.subr.bf16.mxu0 0
        %2508 = vmatpush1.bf16.xpose.msra.mxu0 %v2483
        %2509 = vmatprep.subr.bf16.mxu0 0
        %2510 = vmatpush1.bf16.xpose.msra.mxu0 %v2482
        %2511 = vmatprep.subr.bf16.mxu0 0
        %2512 = vmatpush1.bf16.xpose.msra.mxu0 %v2481
        %2513 = vmatprep.subr.bf16.mxu0 0
        %2514 = vmatpush2.bf16.xpose.msra.mxu0 0
        %2515 = vmatprep.subr.bf16.mxu0 0
        %2516 = vmatpush2.bf16.xpose.msra.mxu0 0
        %2517 = vmatprep.subr.bf16.mxu0 0
        %2518 = vmatpush2.bf16.xpose.msra.mxu0 0
        %2519 = vmatprep.subr.bf16.mxu0 0
        %2520 = vmatpush2.bf16.xpose.msra.mxu0 0
        %2521 = vmatprep.subr.bf16.mxu0 0
        %2522 = vmatpush2.bf16.xpose.msra.mxu0 0
        %2523 = vmatprep.subr.bf16.mxu0 0
        %2524 = vmatpush2.bf16.xpose.msra.mxu0 0
        %2525 = vmatprep.subr.bf16.mxu0 0
        %2526 = vmatpush2.bf16.xpose.msra.mxu0 0
        %2527 = vmatprep.subr.bf16.mxu0 0
        %2528 = vmatpush2.bf16.xpose.msra.mxu0 0
        %2529 = vmatprep.mubr.bf16.mxu0 0
        %2530 = vmatmul.mubr.bf16.gmra.mxu0 %v1680
        %v2531 = vpop.f32.mrf.mxu0
        %v2532 = vadd.f32 0.0, %v2531
        %v2533 = vpop.f32.mrf.mxu0
        %v2534 = vpop.f32.mrf.mxu0
        %v2535 = vadd.f32 0.0, %v2534
        %v2536 = vpop.f32.mrf.mxu0
        %2537 = vmatprep.mubr.bf16.mxu0 0
        %2538 = vmatmul.mubr.bf16.gmra.mxu0 %v1682
        %v2539 = vpop.f32.mrf.mxu0
        %v2540 = vadd.f32 0.0, %v2539
        %v2541 = vpop.f32.mrf.mxu0
        %v2542 = vpop.f32.mrf.mxu0
        %v2543 = vadd.f32 0.0, %v2542
        %v2544 = vpop.f32.mrf.mxu0
        %2545 = vmatprep.mubr.bf16.mxu0 0
        %2546 = vmatmul.mubr.bf16.gmra.mxu0 %v1684
        %v2547 = vpop.f32.mrf.mxu0
        %v2548 = vadd.f32 0.0, %v2547
        %v2549 = vpop.f32.mrf.mxu0
        %v2550 = vpop.f32.mrf.mxu0
        %v2551 = vadd.f32 0.0, %v2550
        %v2552 = vpop.f32.mrf.mxu0
        %2553 = vmatprep.mubr.bf16.mxu0 0
        %2554 = vmatmul.mubr.bf16.gmra.mxu0 %v1686
        %v2555 = vpop.f32.mrf.mxu0
        %v2556 = vadd.f32 0.0, %v2555
        %v2557 = vpop.f32.mrf.mxu0
        %v2558 = vpop.f32.mrf.mxu0
        %v2559 = vadd.f32 0.0, %v2558
        %v2560 = vpop.f32.mrf.mxu0
        %2561 = vmatprep.mubr.bf16.mxu0 0
        %2562 = vmatmul.mubr.bf16.gmra.mxu0 %v1688
        %v2563 = vpop.f32.mrf.mxu0
        %v2564 = vadd.f32 0.0, %v2563
        %v2565 = vpop.f32.mrf.mxu0
        %v2566 = vpop.f32.mrf.mxu0
        %v2567 = vadd.f32 0.0, %v2566
        %v2568 = vpop.f32.mrf.mxu0
        %2569 = vmatprep.mubr.bf16.mxu0 0
        %2570 = vmatmul.mubr.bf16.gmra.mxu0 %v1690
        %v2571 = vpop.f32.mrf.mxu0
        %v2572 = vadd.f32 0.0, %v2571
        %v2573 = vpop.f32.mrf.mxu0
        %v2574 = vpop.f32.mrf.mxu0
        %v2575 = vadd.f32 0.0, %v2574
        %v2576 = vpop.f32.mrf.mxu0
        %2577 = vmatprep.mubr.bf16.mxu0 0
        %2578 = vmatmul.mubr.bf16.gmra.mxu0 %v1692
        %v2579 = vpop.f32.mrf.mxu0
        %v2580 = vadd.f32 0.0, %v2579
        %v2581 = vpop.f32.mrf.mxu0
        %v2582 = vpop.f32.mrf.mxu0
        %v2583 = vadd.f32 0.0, %v2582
        %v2584 = vpop.f32.mrf.mxu0
        %2585 = vmatprep.mubr.bf16.mxu0 0
        %2586 = vmatmul.mubr.bf16.gmra.mxu0 %v1694
        %v2587 = vpop.f32.mrf.mxu0
        %v2588 = vadd.f32 0.0, %v2587
        %v2589 = vpop.f32.mrf.mxu0
        %v2590 = vpop.f32.mrf.mxu0
        %v2591 = vadd.f32 0.0, %v2590
        %v2592 = vpop.f32.mrf.mxu0
        %2593 = vdwg.mxu0
        %v2594 = vmul.f32 %v2403, %v2532
        %v2595 = vmul.f32 %v2406, %v2535
        %v2596 = vmul.f32 %v2411, %v2540
        %v2597 = vmul.f32 %v2414, %v2543
        %v2598 = vmul.f32 %v2419, %v2548
        %v2599 = vmul.f32 %v2422, %v2551
        %v2600 = vmul.f32 %v2427, %v2556
        %v2601 = vmul.f32 %v2430, %v2559
        %v2602 = vmul.f32 %v2435, %v2564
        %v2603 = vmul.f32 %v2438, %v2567
        %v2604 = vmul.f32 %v2443, %v2572
        %v2605 = vmul.f32 %v2446, %v2575
        %v2606 = vmul.f32 %v2451, %v2580
        %v2607 = vmul.f32 %v2454, %v2583
        %v2608 = vmul.f32 %v2459, %v2588
        %v2609 = vmul.f32 %v2462, %v2591
        %v2610 = vsub.f32 0.0, %v2594
        %v2611 = vsub.f32 0.0, %v2595
        %v2612 = vsub.f32 0.0, %v2596
        %v2613 = vsub.f32 0.0, %v2597
        %v2614 = vsub.f32 0.0, %v2598
        %v2615 = vsub.f32 0.0, %v2599
        %v2616 = vsub.f32 0.0, %v2600
        %v2617 = vsub.f32 0.0, %v2601
        %v2618 = vsub.f32 0.0, %v2602
        %v2619 = vsub.f32 0.0, %v2603
        %v2620 = vsub.f32 0.0, %v2604
        %v2621 = vsub.f32 0.0, %v2605
        %v2622 = vsub.f32 0.0, %v2606
        %v2623 = vsub.f32 0.0, %v2607
        %v2624 = vsub.f32 0.0, %v2608
        %v2625 = vsub.f32 0.0, %v2609
        %v2626 = vxor.u32 %v2610, 2147483648
        %v2627 = vxor.u32 %v2611, 2147483648
        %v2628 = vxor.u32 %v2612, 2147483648
        %v2629 = vxor.u32 %v2613, 2147483648
        %v2630 = vxor.u32 %v2614, 2147483648
        %v2631 = vxor.u32 %v2615, 2147483648
        %v2632 = vxor.u32 %v2616, 2147483648
        %v2633 = vxor.u32 %v2617, 2147483648
        %v2634 = vxor.u32 %v2618, 2147483648
        %v2635 = vxor.u32 %v2619, 2147483648
        %v2636 = vxor.u32 %v2620, 2147483648
        %v2637 = vxor.u32 %v2621, 2147483648
        %v2638 = vxor.u32 %v2622, 2147483648
        %v2639 = vxor.u32 %v2623, 2147483648
        %v2640 = vxor.u32 %v2624, 2147483648
        %v2641 = vxor.u32 %v2625, 2147483648
        %v2642 = vmul.f32 %v2626, 1.442695
        %v2643 = vpow.pop %v2642
        %v2644 = vmul.f32 %v2627, 1.442695
        %v2645 = vpow.pop %v2644
        %v2646 = vmul.f32 %v2628, 1.442695
        %v2647 = vpow.pop %v2646
        %v2648 = vmul.f32 %v2629, 1.442695
        %v2649 = vpow.pop %v2648
        %v2650 = vmul.f32 %v2630, 1.442695
        %v2651 = vpow.pop %v2650
        %v2652 = vmul.f32 %v2631, 1.442695
        %v2653 = vpow.pop %v2652
        %v2654 = vmul.f32 %v2632, 1.442695
        %v2655 = vpow.pop %v2654
        %v2656 = vmul.f32 %v2633, 1.442695
        %v2657 = vpow.pop %v2656
        %v2658 = vmul.f32 %v2634, 1.442695
        %v2659 = vpow.pop %v2658
        %v2660 = vmul.f32 %v2635, 1.442695
        %v2661 = vpow.pop %v2660
        %v2662 = vmul.f32 %v2636, 1.442695
        %v2663 = vpow.pop %v2662
        %v2664 = vmul.f32 %v2637, 1.442695
        %v2665 = vpow.pop %v2664
        %v2666 = vmul.f32 %v2638, 1.442695
        %v2667 = vpow.pop %v2666
        %v2668 = vmul.f32 %v2639, 1.442695
        %v2669 = vpow.pop %v2668
        %v2670 = vmul.f32 %v2640, 1.442695
        %v2671 = vpow.pop %v2670
        %v2672 = vmul.f32 %v2641, 1.442695
        %v2673 = vpow.pop %v2672
        %v2674 = vadd.f32 %v2643, 1.0
        %v2675 = vadd.f32 %v2645, 1.0
        %v2676 = vadd.f32 %v2647, 1.0
        %v2677 = vadd.f32 %v2649, 1.0
        %v2678 = vadd.f32 %v2651, 1.0
        %v2679 = vadd.f32 %v2653, 1.0
        %v2680 = vadd.f32 %v2655, 1.0
        %v2681 = vadd.f32 %v2657, 1.0
        %v2682 = vadd.f32 %v2659, 1.0
        %v2683 = vadd.f32 %v2661, 1.0
        %v2684 = vadd.f32 %v2663, 1.0
        %v2685 = vadd.f32 %v2665, 1.0
        %v2686 = vadd.f32 %v2667, 1.0
        %v2687 = vadd.f32 %v2669, 1.0
        %v2688 = vadd.f32 %v2671, 1.0
        %v2689 = vadd.f32 %v2673, 1.0
        %v2690 = vrcp.pop %v2674
        %v2691 = vmul.f32 1.0, %v2690
        %v2692 = vrcp.pop %v2675
        %v2693 = vmul.f32 1.0, %v2692
        %v2694 = vrcp.pop %v2676
        %v2695 = vmul.f32 1.0, %v2694
        %v2696 = vrcp.pop %v2677
        %v2697 = vmul.f32 1.0, %v2696
        %v2698 = vrcp.pop %v2678
        %v2699 = vmul.f32 1.0, %v2698
        %v2700 = vrcp.pop %v2679
        %v2701 = vmul.f32 1.0, %v2700
        %v2702 = vrcp.pop %v2680
        %v2703 = vmul.f32 1.0, %v2702
        %v2704 = vrcp.pop %v2681
        %v2705 = vmul.f32 1.0, %v2704
        %v2706 = vrcp.pop %v2682
        %v2707 = vmul.f32 1.0, %v2706
        %v2708 = vrcp.pop %v2683
        %v2709 = vmul.f32 1.0, %v2708
        %v2710 = vrcp.pop %v2684
        %v2711 = vmul.f32 1.0, %v2710
        %v2712 = vrcp.pop %v2685
        %v2713 = vmul.f32 1.0, %v2712
        %v2714 = vrcp.pop %v2686
        %v2715 = vmul.f32 1.0, %v2714
        %v2716 = vrcp.pop %v2687
        %v2717 = vmul.f32 1.0, %v2716
        %v2718 = vrcp.pop %v2688
        %v2719 = vmul.f32 1.0, %v2718
        %v2720 = vrcp.pop %v2689
        %v2721 = vmul.f32 1.0, %v2720
        %v2722 = vld [vmem:[#allocation12] sm:$0xff]
        %v2723 = vld [vmem:[#allocation12 + $0x8] sm:$0xff]
        %v2724 = vld [vmem:[#allocation12 + $0x10] sm:$0xff]
        %v2725 = vld [vmem:[#allocation12 + $0x18] sm:$0xff]
        %vm2726 = vnez %v2722
        %vm2727 = vnez %v2723
        %vm2728 = vnez %v2724
        %vm2729 = vnez %v2725
        %v2730 = vld [vmem:[%s586] sm:$0x1]
        %vm2731 = vnez %v2730
        %v2732 = vsel %vm2731, 16843009, 0
        %v2733 = vunpack.c.0.s8 %v2732
        %vm2734 = vcmp.ne.s32.totalorder %v2733, 0
        %v2735 = vsel %vm2734, 1, 0
        %v2736 = vlaneseq
        %v2737 = vshrl.u32 %v2736, 7
        %v2738 = vsub.s32 0, %v2737
        %v2739 = vrot.slane %v2735, %v2738
        %vm2740 = vcmp.eq.s32.totalorder %v2739, 1
        %vm2741 = vmpackc.low %vm2740, %vm2740
        %vm2742 = vmpackc.even %vm2741, %vm2741
        %v2743 = vsel %vm2742, 16843009, 0
        %v2744 = vlaneseq
        %v2745 = vshrl.u32 %v2744, 7
        %v2746 = vsub.s32 0, %v2745
        %v2747 = vrot.slane %v2743, %v2746
        %vm2748 = vnez %v2747
        %vm2749 = vmor %vm2726, %vm2748
        %vm2750 = vmor %vm2727, %vm2748
        %vm2751 = vmor %vm2728, %vm2748
        %vm2752 = vmor %vm2729, %vm2748
        %v2753 = vsel %vm2749, 16843009, 0
        %v2754 = vsel %vm2750, 16843009, 0
        %v2755 = vsel %vm2751, 16843009, 0
        %v2756 = vsel %vm2752, 16843009, 0
        %v2757 = vunpack.c.0.s8 %v2753
        %v2758 = vunpack.c.1.s8 %v2753
        %v2759 = vunpack.c.2.s8 %v2753
        %v2760 = vunpack.c.3.s8 %v2753
        %v2761 = vunpack.c.0.s8 %v2754
        %v2762 = vunpack.c.1.s8 %v2754
        %v2763 = vunpack.c.2.s8 %v2754
        %v2764 = vunpack.c.3.s8 %v2754
        %v2765 = vunpack.c.0.s8 %v2755
        %v2766 = vunpack.c.1.s8 %v2755
        %v2767 = vunpack.c.2.s8 %v2755
        %v2768 = vunpack.c.3.s8 %v2755
        %v2769 = vunpack.c.0.s8 %v2756
        %v2770 = vunpack.c.1.s8 %v2756
        %v2771 = vunpack.c.2.s8 %v2756
        %v2772 = vunpack.c.3.s8 %v2756
        %v2773 = vpack.c.b16 %v2757, %v2757
        %v2774 = vpack.c.b8 %v2773, %v2773
        %v2775 = vpack.c.b16 %v2758, %v2758
        %v2776 = vpack.c.b8 %v2775, %v2775
        %v2777 = vpack.c.b16 %v2759, %v2759
        %v2778 = vpack.c.b8 %v2777, %v2777
        %v2779 = vpack.c.b16 %v2760, %v2760
        %v2780 = vpack.c.b8 %v2779, %v2779
        %v2781 = vpack.c.b16 %v2761, %v2761
        %v2782 = vpack.c.b8 %v2781, %v2781
        %v2783 = vpack.c.b16 %v2762, %v2762
        %v2784 = vpack.c.b8 %v2783, %v2783
        %v2785 = vpack.c.b16 %v2763, %v2763
        %v2786 = vpack.c.b8 %v2785, %v2785
        %v2787 = vpack.c.b16 %v2764, %v2764
        %v2788 = vpack.c.b8 %v2787, %v2787
        %v2789 = vpack.c.b16 %v2765, %v2765
        %v2790 = vpack.c.b8 %v2789, %v2789
        %v2791 = vpack.c.b16 %v2766, %v2766
        %v2792 = vpack.c.b8 %v2791, %v2791
        %v2793 = vpack.c.b16 %v2767, %v2767
        %v2794 = vpack.c.b8 %v2793, %v2793
        %v2795 = vpack.c.b16 %v2768, %v2768
        %v2796 = vpack.c.b8 %v2795, %v2795
        %v2797 = vpack.c.b16 %v2769, %v2769
        %v2798 = vpack.c.b8 %v2797, %v2797
        %v2799 = vpack.c.b16 %v2770, %v2770
        %v2800 = vpack.c.b8 %v2799, %v2799
        %v2801 = vpack.c.b16 %v2771, %v2771
        %v2802 = vpack.c.b8 %v2801, %v2801
        %v2803 = vpack.c.b16 %v2772, %v2772
        %v2804 = vpack.c.b8 %v2803, %v2803
        %vm2805 = vnez %v2774
        %vm2806 = vnez %v2776
        %vm2807 = vnez %v2778
        %vm2808 = vnez %v2780
        %vm2809 = vnez %v2782
        %vm2810 = vnez %v2784
        %vm2811 = vnez %v2786
        %vm2812 = vnez %v2788
        %vm2813 = vnez %v2790
        %vm2814 = vnez %v2792
        %vm2815 = vnez %v2794
        %vm2816 = vnez %v2796
        %vm2817 = vnez %v2798
        %vm2818 = vnez %v2800
        %vm2819 = vnez %v2802
        %vm2820 = vnez %v2804
        %v2821 = vsel %vm2805, 16843009, 0
        %v2822 = vsel %vm2806, 16843009, 0
        %v2823 = vsel %vm2807, 16843009, 0
        %v2824 = vsel %vm2808, 16843009, 0
        %v2825 = vsel %vm2809, 16843009, 0
        %v2826 = vsel %vm2810, 16843009, 0
        %v2827 = vsel %vm2811, 16843009, 0
        %v2828 = vsel %vm2812, 16843009, 0
        %v2829 = vsel %vm2813, 16843009, 0
        %v2830 = vsel %vm2814, 16843009, 0
        %v2831 = vsel %vm2815, 16843009, 0
        %v2832 = vsel %vm2816, 16843009, 0
        %v2833 = vsel %vm2817, 16843009, 0
        %v2834 = vsel %vm2818, 16843009, 0
        %v2835 = vsel %vm2819, 16843009, 0
        %v2836 = vsel %vm2820, 16843009, 0
        %v2837 = vunpack.c.0.s8 %v2821
        %v2838 = vunpack.c.0.s8 %v2822
        %v2839 = vunpack.c.0.s8 %v2823
        %v2840 = vunpack.c.0.s8 %v2824
        %v2841 = vunpack.c.0.s8 %v2825
        %v2842 = vunpack.c.0.s8 %v2826
        %v2843 = vunpack.c.0.s8 %v2827
        %v2844 = vunpack.c.0.s8 %v2828
        %v2845 = vunpack.c.0.s8 %v2829
        %v2846 = vunpack.c.0.s8 %v2830
        %v2847 = vunpack.c.0.s8 %v2831
        %v2848 = vunpack.c.0.s8 %v2832
        %v2849 = vunpack.c.0.s8 %v2833
        %v2850 = vunpack.c.0.s8 %v2834
        %v2851 = vunpack.c.0.s8 %v2835
        %v2852 = vunpack.c.0.s8 %v2836
        %vm2853 = vcmp.ne.s32.totalorder %v2837, 0
        %vm2854 = vcmp.ne.s32.totalorder %v2838, 0
        %vm2855 = vcmp.ne.s32.totalorder %v2839, 0
        %vm2856 = vcmp.ne.s32.totalorder %v2840, 0
        %vm2857 = vcmp.ne.s32.totalorder %v2841, 0
        %vm2858 = vcmp.ne.s32.totalorder %v2842, 0
        %vm2859 = vcmp.ne.s32.totalorder %v2843, 0
        %vm2860 = vcmp.ne.s32.totalorder %v2844, 0
        %vm2861 = vcmp.ne.s32.totalorder %v2845, 0
        %vm2862 = vcmp.ne.s32.totalorder %v2846, 0
        %vm2863 = vcmp.ne.s32.totalorder %v2847, 0
        %vm2864 = vcmp.ne.s32.totalorder %v2848, 0
        %vm2865 = vcmp.ne.s32.totalorder %v2849, 0
        %vm2866 = vcmp.ne.s32.totalorder %v2850, 0
        %vm2867 = vcmp.ne.s32.totalorder %v2851, 0
        %vm2868 = vcmp.ne.s32.totalorder %v2852, 0
        %v2869 = vsel %vm2853, -inf, %v2320
        %v2870 = vsel %vm2854, -inf, %v2321
        %v2871 = vsel %vm2855, -inf, %v2322
        %v2872 = vsel %vm2856, -inf, %v2323
        %v2873 = vsel %vm2857, -inf, %v2324
        %v2874 = vsel %vm2858, -inf, %v2325
        %v2875 = vsel %vm2859, -inf, %v2326
        %v2876 = vsel %vm2860, -inf, %v2327
        %v2877 = vsel %vm2861, -inf, %v2328
        %v2878 = vsel %vm2862, -inf, %v2329
        %v2879 = vsel %vm2863, -inf, %v2330
        %v2880 = vsel %vm2864, -inf, %v2331
        %v2881 = vsel %vm2865, -inf, %v2332
        %v2882 = vsel %vm2866, -inf, %v2333
        %v2883 = vsel %vm2867, -inf, %v2334
        %v2884 = vsel %vm2868, -inf, %v2335
        %2885 = vmax.xlane.f32.xlu0 %v2869
        %v2886 = vpop.xlane.xlu0 %2885
        %2887 = vmax.xlane.f32.xlu0 %v2870
        %v2888 = vpop.xlane.xlu0 %2887
        %2889 = vmax.xlane.f32.xlu0 %v2871
        %v2890 = vpop.xlane.xlu0 %2889
        %2891 = vmax.xlane.f32.xlu0 %v2872
        %v2892 = vpop.xlane.xlu0 %2891
        %2893 = vmax.xlane.f32.xlu0 %v2873
        %v2894 = vpop.xlane.xlu0 %2893
        %2895 = vmax.xlane.f32.xlu0 %v2874
        %v2896 = vpop.xlane.xlu0 %2895
        %2897 = vmax.xlane.f32.xlu0 %v2875
        %v2898 = vpop.xlane.xlu0 %2897
        %2899 = vmax.xlane.f32.xlu0 %v2876
        %v2900 = vpop.xlane.xlu0 %2899
        %2901 = vmax.xlane.f32.xlu0 %v2877
        %v2902 = vpop.xlane.xlu0 %2901
        %2903 = vmax.xlane.f32.xlu0 %v2878
        %v2904 = vpop.xlane.xlu0 %2903
        %2905 = vmax.xlane.f32.xlu0 %v2879
        %v2906 = vpop.xlane.xlu0 %2905
        %2907 = vmax.xlane.f32.xlu0 %v2880
        %v2908 = vpop.xlane.xlu0 %2907
        %2909 = vmax.xlane.f32.xlu0 %v2881
        %v2910 = vpop.xlane.xlu0 %2909
        %2911 = vmax.xlane.f32.xlu0 %v2882
        %v2912 = vpop.xlane.xlu0 %2911
        %2913 = vmax.xlane.f32.xlu0 %v2883
        %v2914 = vpop.xlane.xlu0 %2913
        %2915 = vmax.xlane.f32.xlu0 %v2884
        %v2916 = vpop.xlane.xlu0 %2915
        %v2917 = vsub.f32 %v2869, %v2886
        %v2918 = vsub.f32 %v2870, %v2888
        %v2919 = vsub.f32 %v2871, %v2890
        %v2920 = vsub.f32 %v2872, %v2892
        %v2921 = vsub.f32 %v2873, %v2894
        %v2922 = vsub.f32 %v2874, %v2896
        %v2923 = vsub.f32 %v2875, %v2898
        %v2924 = vsub.f32 %v2876, %v2900
        %v2925 = vsub.f32 %v2877, %v2902
        %v2926 = vsub.f32 %v2878, %v2904
        %v2927 = vsub.f32 %v2879, %v2906
        %v2928 = vsub.f32 %v2880, %v2908
        %v2929 = vsub.f32 %v2881, %v2910
        %v2930 = vsub.f32 %v2882, %v2912
        %v2931 = vsub.f32 %v2883, %v2914
        %v2932 = vsub.f32 %v2884, %v2916
        %v2933 = vmul.f32 %v2917, 1.442695
        %v2934 = vpow.pop %v2933
        %v2935 = vmul.f32 %v2918, 1.442695
        %v2936 = vpow.pop %v2935
        %v2937 = vmul.f32 %v2919, 1.442695
        %v2938 = vpow.pop %v2937
        %v2939 = vmul.f32 %v2920, 1.442695
        %v2940 = vpow.pop %v2939
        %v2941 = vmul.f32 %v2921, 1.442695
        %v2942 = vpow.pop %v2941
        %v2943 = vmul.f32 %v2922, 1.442695
        %v2944 = vpow.pop %v2943
        %v2945 = vmul.f32 %v2923, 1.442695
        %v2946 = vpow.pop %v2945
        %v2947 = vmul.f32 %v2924, 1.442695
        %v2948 = vpow.pop %v2947
        %v2949 = vmul.f32 %v2925, 1.442695
        %v2950 = vpow.pop %v2949
        %v2951 = vmul.f32 %v2926, 1.442695
        %v2952 = vpow.pop %v2951
        %v2953 = vmul.f32 %v2927, 1.442695
        %v2954 = vpow.pop %v2953
        %v2955 = vmul.f32 %v2928, 1.442695
        %v2956 = vpow.pop %v2955
        %v2957 = vmul.f32 %v2929, 1.442695
        %v2958 = vpow.pop %v2957
        %v2959 = vmul.f32 %v2930, 1.442695
        %v2960 = vpow.pop %v2959
        %v2961 = vmul.f32 %v2931, 1.442695
        %v2962 = vpow.pop %v2961
        %v2963 = vmul.f32 %v2932, 1.442695
        %v2964 = vpow.pop %v2963
        %2965 = vadd.xlane.f32.xlu0 %v2934
        %v2966 = vpop.xlane.xlu0 %2965
        %2967 = vadd.xlane.f32.xlu0 %v2936
        %v2968 = vpop.xlane.xlu0 %2967
        %2969 = vadd.xlane.f32.xlu0 %v2938
        %v2970 = vpop.xlane.xlu0 %2969
        %2971 = vadd.xlane.f32.xlu0 %v2940
        %v2972 = vpop.xlane.xlu0 %2971
        %2973 = vadd.xlane.f32.xlu0 %v2942
        %v2974 = vpop.xlane.xlu0 %2973
        %2975 = vadd.xlane.f32.xlu0 %v2944
        %v2976 = vpop.xlane.xlu0 %2975
        %2977 = vadd.xlane.f32.xlu0 %v2946
        %v2978 = vpop.xlane.xlu0 %2977
        %2979 = vadd.xlane.f32.xlu0 %v2948
        %v2980 = vpop.xlane.xlu0 %2979
        %2981 = vadd.xlane.f32.xlu0 %v2950
        %v2982 = vpop.xlane.xlu0 %2981
        %2983 = vadd.xlane.f32.xlu0 %v2952
        %v2984 = vpop.xlane.xlu0 %2983
        %2985 = vadd.xlane.f32.xlu0 %v2954
        %v2986 = vpop.xlane.xlu0 %2985
        %2987 = vadd.xlane.f32.xlu0 %v2956
        %v2988 = vpop.xlane.xlu0 %2987
        %2989 = vadd.xlane.f32.xlu0 %v2958
        %v2990 = vpop.xlane.xlu0 %2989
        %2991 = vadd.xlane.f32.xlu0 %v2960
        %v2992 = vpop.xlane.xlu0 %2991
        %2993 = vadd.xlane.f32.xlu0 %v2962
        %v2994 = vpop.xlane.xlu0 %2993
        %2995 = vadd.xlane.f32.xlu0 %v2964
        %v2996 = vpop.xlane.xlu0 %2995
        %v2997 = vrcp.pop %v2966
        %v2998 = vmul.f32 %v2934, %v2997
        %v2999 = vrcp.pop %v2968
        %v3000 = vmul.f32 %v2936, %v2999
        %v3001 = vrcp.pop %v2970
        %v3002 = vmul.f32 %v2938, %v3001
        %v3003 = vrcp.pop %v2972
        %v3004 = vmul.f32 %v2940, %v3003
        %v3005 = vrcp.pop %v2974
        %v3006 = vmul.f32 %v2942, %v3005
        %v3007 = vrcp.pop %v2976
        %v3008 = vmul.f32 %v2944, %v3007
        %v3009 = vrcp.pop %v2978
        %v3010 = vmul.f32 %v2946, %v3009
        %v3011 = vrcp.pop %v2980
        %v3012 = vmul.f32 %v2948, %v3011
        %v3013 = vrcp.pop %v2982
        %v3014 = vmul.f32 %v2950, %v3013
        %v3015 = vrcp.pop %v2984
        %v3016 = vmul.f32 %v2952, %v3015
        %v3017 = vrcp.pop %v2986
        %v3018 = vmul.f32 %v2954, %v3017
        %v3019 = vrcp.pop %v2988
        %v3020 = vmul.f32 %v2956, %v3019
        %v3021 = vrcp.pop %v2990
        %v3022 = vmul.f32 %v2958, %v3021
        %v3023 = vrcp.pop %v2992
        %v3024 = vmul.f32 %v2960, %v3023
        %v3025 = vrcp.pop %v2994
        %v3026 = vmul.f32 %v2962, %v3025
        %v3027 = vrcp.pop %v2996
        %v3028 = vmul.f32 %v2964, %v3027
        %v3029 = vsel %vm2853, -inf, %v2691
        %v3030 = vsel %vm2854, -inf, %v2693
        %v3031 = vsel %vm2855, -inf, %v2695
        %v3032 = vsel %vm2856, -inf, %v2697
        %v3033 = vsel %vm2857, -inf, %v2699
        %v3034 = vsel %vm2858, -inf, %v2701
        %v3035 = vsel %vm2859, -inf, %v2703
        %v3036 = vsel %vm2860, -inf, %v2705
        %v3037 = vsel %vm2861, -inf, %v2707
        %v3038 = vsel %vm2862, -inf, %v2709
        %v3039 = vsel %vm2863, -inf, %v2711
        %v3040 = vsel %vm2864, -inf, %v2713
        %v3041 = vsel %vm2865, -inf, %v2715
        %v3042 = vsel %vm2866, -inf, %v2717
        %v3043 = vsel %vm2867, -inf, %v2719
        %v3044 = vsel %vm2868, -inf, %v2721
        %3045 = vmax.xlane.f32.xlu0 %v3029
        %v3046 = vpop.xlane.xlu0 %3045
        %3047 = vmax.xlane.f32.xlu0 %v3030
        %v3048 = vpop.xlane.xlu0 %3047
        %3049 = vmax.xlane.f32.xlu0 %v3031
        %v3050 = vpop.xlane.xlu0 %3049
        %3051 = vmax.xlane.f32.xlu0 %v3032
        %v3052 = vpop.xlane.xlu0 %3051
        %3053 = vmax.xlane.f32.xlu0 %v3033
        %v3054 = vpop.xlane.xlu0 %3053
        %3055 = vmax.xlane.f32.xlu0 %v3034
        %v3056 = vpop.xlane.xlu0 %3055
        %3057 = vmax.xlane.f32.xlu0 %v3035
        %v3058 = vpop.xlane.xlu0 %3057
        %3059 = vmax.xlane.f32.xlu0 %v3036
        %v3060 = vpop.xlane.xlu0 %3059
        %3061 = vmax.xlane.f32.xlu0 %v3037
        %v3062 = vpop.xlane.xlu0 %3061
        %3063 = vmax.xlane.f32.xlu0 %v3038
        %v3064 = vpop.xlane.xlu0 %3063
        %3065 = vmax.xlane.f32.xlu0 %v3039
        %v3066 = vpop.xlane.xlu0 %3065
        %3067 = vmax.xlane.f32.xlu0 %v3040
        %v3068 = vpop.xlane.xlu0 %3067
        %3069 = vmax.xlane.f32.xlu0 %v3041
        %v3070 = vpop.xlane.xlu0 %3069
        %3071 = vmax.xlane.f32.xlu0 %v3042
        %v3072 = vpop.xlane.xlu0 %3071
        %3073 = vmax.xlane.f32.xlu0 %v3043
        %v3074 = vpop.xlane.xlu0 %3073
        %3075 = vmax.xlane.f32.xlu0 %v3044
        %v3076 = vpop.xlane.xlu0 %3075
        %v3077 = vsub.f32 %v3029, %v3046
        %v3078 = vsub.f32 %v3030, %v3048
        %v3079 = vsub.f32 %v3031, %v3050
        %v3080 = vsub.f32 %v3032, %v3052
        %v3081 = vsub.f32 %v3033, %v3054
        %v3082 = vsub.f32 %v3034, %v3056
        %v3083 = vsub.f32 %v3035, %v3058
        %v3084 = vsub.f32 %v3036, %v3060
        %v3085 = vsub.f32 %v3037, %v3062
        %v3086 = vsub.f32 %v3038, %v3064
        %v3087 = vsub.f32 %v3039, %v3066
        %v3088 = vsub.f32 %v3040, %v3068
        %v3089 = vsub.f32 %v3041, %v3070
        %v3090 = vsub.f32 %v3042, %v3072
        %v3091 = vsub.f32 %v3043, %v3074
        %v3092 = vsub.f32 %v3044, %v3076
        %v3093 = vmul.f32 %v3077, 1.442695
        %v3094 = vpow.pop %v3093
        %v3095 = vmul.f32 %v3078, 1.442695
        %v3096 = vpow.pop %v3095
        %v3097 = vmul.f32 %v3079, 1.442695
        %v3098 = vpow.pop %v3097
        %v3099 = vmul.f32 %v3080, 1.442695
        %v3100 = vpow.pop %v3099
        %v3101 = vmul.f32 %v3081, 1.442695
        %v3102 = vpow.pop %v3101
        %v3103 = vmul.f32 %v3082, 1.442695
        %v3104 = vpow.pop %v3103
        %v3105 = vmul.f32 %v3083, 1.442695
        %v3106 = vpow.pop %v3105
        %v3107 = vmul.f32 %v3084, 1.442695
        %v3108 = vpow.pop %v3107
        %v3109 = vmul.f32 %v3085, 1.442695
        %v3110 = vpow.pop %v3109
        %v3111 = vmul.f32 %v3086, 1.442695
        %v3112 = vpow.pop %v3111
        %v3113 = vmul.f32 %v3087, 1.442695
        %v3114 = vpow.pop %v3113
        %v3115 = vmul.f32 %v3088, 1.442695
        %v3116 = vpow.pop %v3115
        %v3117 = vmul.f32 %v3089, 1.442695
        %v3118 = vpow.pop %v3117
        %v3119 = vmul.f32 %v3090, 1.442695
        %v3120 = vpow.pop %v3119
        %v3121 = vmul.f32 %v3091, 1.442695
        %v3122 = vpow.pop %v3121
        %v3123 = vmul.f32 %v3092, 1.442695
        %v3124 = vpow.pop %v3123
        %3125 = vadd.xlane.f32.xlu0 %v3094
        %v3126 = vpop.xlane.xlu0 %3125
        %3127 = vadd.xlane.f32.xlu0 %v3096
        %v3128 = vpop.xlane.xlu0 %3127
        %3129 = vadd.xlane.f32.xlu0 %v3098
        %v3130 = vpop.xlane.xlu0 %3129
        %3131 = vadd.xlane.f32.xlu0 %v3100
        %v3132 = vpop.xlane.xlu0 %3131
        %3133 = vadd.xlane.f32.xlu0 %v3102
        %v3134 = vpop.xlane.xlu0 %3133
        %3135 = vadd.xlane.f32.xlu0 %v3104
        %v3136 = vpop.xlane.xlu0 %3135
        %3137 = vadd.xlane.f32.xlu0 %v3106
        %v3138 = vpop.xlane.xlu0 %3137
        %3139 = vadd.xlane.f32.xlu0 %v3108
        %v3140 = vpop.xlane.xlu0 %3139
        %3141 = vadd.xlane.f32.xlu0 %v3110
        %v3142 = vpop.xlane.xlu0 %3141
        %3143 = vadd.xlane.f32.xlu0 %v3112
        %v3144 = vpop.xlane.xlu0 %3143
        %3145 = vadd.xlane.f32.xlu0 %v3114
        %v3146 = vpop.xlane.xlu0 %3145
        %3147 = vadd.xlane.f32.xlu0 %v3116
        %v3148 = vpop.xlane.xlu0 %3147
        %3149 = vadd.xlane.f32.xlu0 %v3118
        %v3150 = vpop.xlane.xlu0 %3149
        %3151 = vadd.xlane.f32.xlu0 %v3120
        %v3152 = vpop.xlane.xlu0 %3151
        %3153 = vadd.xlane.f32.xlu0 %v3122
        %v3154 = vpop.xlane.xlu0 %3153
        %3155 = vadd.xlane.f32.xlu0 %v3124
        %v3156 = vpop.xlane.xlu0 %3155
        %v3157 = vrcp.pop %v3126
        %v3158 = vmul.f32 %v3094, %v3157
        %v3159 = vrcp.pop %v3128
        %v3160 = vmul.f32 %v3096, %v3159
        %v3161 = vrcp.pop %v3130
        %v3162 = vmul.f32 %v3098, %v3161
        %v3163 = vrcp.pop %v3132
        %v3164 = vmul.f32 %v3100, %v3163
        %v3165 = vrcp.pop %v3134
        %v3166 = vmul.f32 %v3102, %v3165
        %v3167 = vrcp.pop %v3136
        %v3168 = vmul.f32 %v3104, %v3167
        %v3169 = vrcp.pop %v3138
        %v3170 = vmul.f32 %v3106, %v3169
        %v3171 = vrcp.pop %v3140
        %v3172 = vmul.f32 %v3108, %v3171
        %v3173 = vrcp.pop %v3142
        %v3174 = vmul.f32 %v3110, %v3173
        %v3175 = vrcp.pop %v3144
        %v3176 = vmul.f32 %v3112, %v3175
        %v3177 = vrcp.pop %v3146
        %v3178 = vmul.f32 %v3114, %v3177
        %v3179 = vrcp.pop %v3148
        %v3180 = vmul.f32 %v3116, %v3179
        %v3181 = vrcp.pop %v3150
        %v3182 = vmul.f32 %v3118, %v3181
        %v3183 = vrcp.pop %v3152
        %v3184 = vmul.f32 %v3120, %v3183
        %v3185 = vrcp.pop %v3154
        %v3186 = vmul.f32 %v3122, %v3185
        %v3187 = vrcp.pop %v3156
        %v3188 = vmul.f32 %v3124, %v3187
        %v3189 = vld [vmem:[%s519] sm:$0xf]
        %v3190 = vld [vmem:[%s519 + $0x4] sm:$0xf]
        %v3191 = vld [vmem:[%s519 + $0x8] sm:$0xf]
        %v3192 = vld [vmem:[%s519 + $0xc] sm:$0xf]
        %v3193 = vld [vmem:[%s519 + $0x10] sm:$0xf]
        %v3194 = vld [vmem:[%s519 + $0x14] sm:$0xf]
        %v3195 = vld [vmem:[%s519 + $0x18] sm:$0xf]
        %v3196 = vld [vmem:[%s519 + $0x1c] sm:$0xf]
        %v3197 = vld [vmem:[%s519 + $0x20] sm:$0xf]
        %v3198 = vld [vmem:[%s519 + $0x24] sm:$0xf]
        %v3199 = vld [vmem:[%s519 + $0x28] sm:$0xf]
        %v3200 = vld [vmem:[%s519 + $0x2c] sm:$0xf]
        %v3201 = vld [vmem:[%s519 + $0x30] sm:$0xf]
        %v3202 = vld [vmem:[%s519 + $0x34] sm:$0xf]
        %v3203 = vld [vmem:[%s519 + $0x38] sm:$0xf]
        %v3204 = vld [vmem:[%s519 + $0x3c] sm:$0xf]
        %v3205 = vunpack.c.l.bf16 %v3189
        %v3206 = vunpack.c.l.bf16 %v3190
        %v3207 = vunpack.c.l.bf16 %v3191
        %v3208 = vunpack.c.l.bf16 %v3192
        %v3209 = vunpack.c.l.bf16 %v3193
        %v3210 = vunpack.c.l.bf16 %v3194
        %v3211 = vunpack.c.l.bf16 %v3195
        %v3212 = vunpack.c.l.bf16 %v3196
        %v3213 = vunpack.c.l.bf16 %v3197
        %v3214 = vunpack.c.l.bf16 %v3198
        %v3215 = vunpack.c.l.bf16 %v3199
        %v3216 = vunpack.c.l.bf16 %v3200
        %v3217 = vunpack.c.l.bf16 %v3201
        %v3218 = vunpack.c.l.bf16 %v3202
        %v3219 = vunpack.c.l.bf16 %v3203
        %v3220 = vunpack.c.l.bf16 %v3204
        %v3221 = vsub.f32 %v2998, %v3158
        %v3222 = vsub.f32 %v3000, %v3160
        %v3223 = vsub.f32 %v3002, %v3162
        %v3224 = vsub.f32 %v3004, %v3164
        %v3225 = vsub.f32 %v3006, %v3166
        %v3226 = vsub.f32 %v3008, %v3168
        %v3227 = vsub.f32 %v3010, %v3170
        %v3228 = vsub.f32 %v3012, %v3172
        %v3229 = vsub.f32 %v3014, %v3174
        %v3230 = vsub.f32 %v3016, %v3176
        %v3231 = vsub.f32 %v3018, %v3178
        %v3232 = vsub.f32 %v3020, %v3180
        %v3233 = vsub.f32 %v3022, %v3182
        %v3234 = vsub.f32 %v3024, %v3184
        %v3235 = vsub.f32 %v3026, %v3186
        %v3236 = vsub.f32 %v3028, %v3188
        %vm3237 = vcmp.ge.f32.partialorder %v3221, %v3205
        %vm3238 = vcmp.ge.f32.partialorder %v3222, %v3206
        %vm3239 = vcmp.ge.f32.partialorder %v3223, %v3207
        %vm3240 = vcmp.ge.f32.partialorder %v3224, %v3208
        %vm3241 = vcmp.ge.f32.partialorder %v3225, %v3209
        %vm3242 = vcmp.ge.f32.partialorder %v3226, %v3210
        %vm3243 = vcmp.ge.f32.partialorder %v3227, %v3211
        %vm3244 = vcmp.ge.f32.partialorder %v3228, %v3212
        %vm3245 = vcmp.ge.f32.partialorder %v3229, %v3213
        %vm3246 = vcmp.ge.f32.partialorder %v3230, %v3214
        %vm3247 = vcmp.ge.f32.partialorder %v3231, %v3215
        %vm3248 = vcmp.ge.f32.partialorder %v3232, %v3216
        %vm3249 = vcmp.ge.f32.partialorder %v3233, %v3217
        %vm3250 = vcmp.ge.f32.partialorder %v3234, %v3218
        %vm3251 = vcmp.ge.f32.partialorder %v3235, %v3219
        %vm3252 = vcmp.ge.f32.partialorder %v3236, %v3220
        %vm3253 = vmpackc.low %vm3238, %vm3237
        %vm3254 = vmpackc.low %vm3240, %vm3239
        %vm3255 = vmpackc.even %vm3254, %vm3253
        %vm3256 = vmpackc.low %vm3242, %vm3241
        %vm3257 = vmpackc.low %vm3244, %vm3243
        %vm3258 = vmpackc.even %vm3257, %vm3256
        %vm3259 = vmpackc.low %vm3246, %vm3245
        %vm3260 = vmpackc.low %vm3248, %vm3247
        %vm3261 = vmpackc.even %vm3260, %vm3259
        %vm3262 = vmpackc.low %vm3250, %vm3249
        %vm3263 = vmpackc.low %vm3252, %vm3251
        %vm3264 = vmpackc.even %vm3263, %vm3262
        %v3265 = vsel %vm3255, 16843009, 0
        %v3266 = vsel %vm3258, 16843009, 0
        %v3267 = vsel %vm3261, 16843009, 0
        %v3268 = vsel %vm3264, 16843009, 0
        %v3269 = vsel %vm2726, 0, %v3265
        %v3270 = vsel %vm2727, 0, %v3266
        %v3271 = vsel %vm2728, 0, %v3267
        %v3272 = vsel %vm2729, 0, %v3268
        %3273 = vst [vmem:[%s580] sm:$0xff] %v3269
        %3274 = vst [vmem:[%s580 + $0x8] sm:$0xff] %v3270
        %3275 = vst [vmem:[%s580 + $0x10] sm:$0xff] %v3271
        %3276 = vst [vmem:[%s580 + $0x18] sm:$0xff] %v3272
        %s3277 = sand.u32 %s287, 1
        %s3278 = scalar_lea.sflag [#allocation6], %s3277
        %s3279 = sand.u32 %s287, 1
        %s3280 = smul.addr %s3279, 32
        %s3281 = scalar_lea.vmem [#allocation16], %s3280
        // Predicated region
        $region89: #{tpu_custom_call.1} parent=55 // pred_check
          %p3282 = pneg %p297
        $region90: #{tpu_custom_call.1} parent=55 // pred_check_branch
          %3284 = sbr.rel (%p3282) target = $region92
        $region91: #{tpu_custom_call.1} parent=55 // pred_region
          %s3285 = smul.u32 4, %s40
          %s3287 = ssub.s32 512, 512
          %3288 = vsyncadd %s3278, %s3287
          %s3289 = smul.addr %s39, 4
          %s3290 = sadd.s32 %s3285, %s3289
          %s3291 = smul.addr %s3290, 128
          %s3292 = scalar_lea.hbm %s9, %s3291
          %s3293 = sshll.u32 %s3281, 4
          %s3294 = int_to_ptr.vmem [resolvable:$true] %s3293
          %3299 = dma.vmem_to_hbm [thread:$0]  %s3294, 512, %s3292, %s3278, 128, 128, 8
        $region92: #{tpu_custom_call.1} parent=55 // pred_fallthru
          _
      $region56: #{tpu_custom_call.1} parent=5 // pred_fallthru
        _
      %p3300 = scmp.le.s32.totalorder 2, %s30
      // Predicated region
      $region93: #{tpu_custom_call.1} parent=5 // pred_check
        %p3301 = pneg %p3300
      $region94: #{tpu_custom_call.1} parent=5 // pred_check_branch
        %3303 = sbr.rel (%p3301) target = $region96
      $region95: #{tpu_custom_call.1} parent=5 // pred_region
        %s3304 = ssub.s32 %s30, 2
        // Predicated region
        $region97: #{tpu_custom_call.1} parent=95 // pred_check
          %p3305 = pneg %p303
        $region98: #{tpu_custom_call.1} parent=95 // pred_check_branch
          %3307 = sbr.rel (%p3305) target = $region100
        $region99: #{tpu_custom_call.1} parent=95 // pred_region
          %s3308 = sand.u32 %s288, 1
          %s3309 = scalar_lea.sflag [#allocation6], %s3308
          %s3310 = sand.u32 %s288, 1
          %s3311 = smul.addr %s3310, 32
          %s3312 = scalar_lea.vmem [#allocation16], %s3311
          %3313 = dma.done %s3309, 512
        $region100: #{tpu_custom_call.1} parent=95 // pred_fallthru
          _
      $region96: #{tpu_custom_call.1} parent=5 // pred_fallthru
        _
    $region6: #{tpu_custom_call.1} parent=1 // loop_footer
      %s34 = sadd.s32 1, %s30
    $region7: #{tpu_custom_call.1} parent=1 // loop_footer_branch
      %29 = sbr.rel target = $region3
    $region8: #{tpu_custom_call.1} parent=1 // loop_exit
      _
    %3314 = vsyncpa [#allocation5], 1
    %s3315 = scalar_lea.sflag [#allocation5], 1
    %3316 = vsyncpa %s3315, 1
    %3317 = vsyncpa [#allocation8], 1
    %s3318 = scalar_lea.sflag [#allocation8], 1
    %3319 = vsyncpa %s3318, 1
    %3320 = vsyncpa [#allocation11], 1
    %s3321 = scalar_lea.sflag [#allocation11], 1
    %3322 = vsyncpa %s3321, 1
    %3323 = vsyncpa [#allocation14], 1
    %s3324 = scalar_lea.sflag [#allocation14], 1
    %3325 = vsyncpa %s3324, 1
    %3326 = vsyncpa [#allocation6], 1
    %s3327 = scalar_lea.sflag [#allocation6], 1
    %3328 = vsyncpa %s3327, 1

</llo_original>
